<compile_context>
chip_gen: v7x
topology: tpu7x:2x2x1
jax: 0.10.0
libtpu: 0.0.40
codegen_flags: <defaults>
</compile_context>

<pallas_src>
import functools
import math

import jax
import jax.numpy as jnp
from jax import lax
from jax.experimental import pallas as pl
from jax.experimental.pallas import tpu as pltpu


# ----------------------------------------------------------------------------
# Helpers
# ----------------------------------------------------------------------------
def _round_up(x, m):
    return (x + m - 1) // m * m


def _padded_seq(seq):
    # Lane-dense score tiles: pad to a multiple of 128 once the sequence is
    # large enough to benefit (real CLIP: 77 -> 128); tiny test shapes only
    # get sublane (8) alignment.
    return _round_up(seq, 128) if seq > 64 else _round_up(seq, 8)


def _layer_norm(x, g, b, eps=1e-5):
    # PyTorch nn.LayerNorm: biased variance, eps inside the sqrt, eps=1e-5.
    mu = jnp.mean(x, axis=-1, keepdims=True)
    var = jnp.mean((x - mu) ** 2, axis=-1, keepdims=True)
    return (x - mu) * lax.rsqrt(var + eps) * g + b


# ----------------------------------------------------------------------------
# Fused transformer stack kernel.
# One grid step = (batch block, layer).  The batch block is carried in the
# VMEM-resident output block; layer weights stream once per layer step and are
# reused for every batch row in the block.
# ----------------------------------------------------------------------------
def _clip_stack_kernel(mask_ref, x_ref, ln1g, ln1b, wqkv, bqkv, wo, bo,
                       ln2g, ln2b, w1, b1, w2, b2, fng, fnb,
                       o_ref, heads_scr, attn_scr, *, n_heads):
    l = pl.program_id(1)
    n_layers = pl.num_programs(1)
    bb = o_ref.shape[0]                      # batch rows carried in this block
    H = n_heads
    bf16 = jnp.bfloat16

    # First layer for this batch block: seed the VMEM-resident carry.
    @pl.when(l == 0)
    def _():
        o_ref[...] = x_ref[...]

    neg = mask_ref[...]                      # (S, S) causal mask: 0 / -inf

    for b in range(bb):                      # static unroll over batch rows
        x = o_ref[b]                         # (S, D) f32 running state
        S, D = x.shape
        dh = D // H

        # ---------------- attention block (pre-LN, causal) ----------------
        res = x
        xn = _layer_norm(x, ln1g[0], ln1b[0])
        # 1/sqrt(dh) is pre-folded into the q columns of wqkv / bqkv.
        qkv = jnp.dot(xn.astype(bf16), wqkv[0],
                      preferred_element_type=jnp.float32) + bqkv[0]   # (S, 3D)

        # Scatter heads into a (3H, S, dh) bf16 scratch (q | k | v heads) so
        # scores / P@V run as batched, head-leading contractions.
        for i in range(3 * H):
            heads_scr[i] = qkv[:, i * dh:(i + 1) * dh].astype(bf16)
        q = heads_scr[pl.ds(0, H), :, :]                  # (H, S, dh) bf16
        k = heads_scr[pl.ds(H, H), :, :]
        v = heads_scr[pl.ds(2 * H, H), :, :]

        s = jnp.einsum('hqd,hkd->hqk', q, k,
                       preferred_element_type=jnp.float32)            # (H,S,S)
        s = s + neg
        s = s - jnp.max(s, axis=-1, keepdims=True)
        p = jnp.exp(s)
        p = p * pl.reciprocal(jnp.sum(p, axis=-1, keepdims=True), approx=True)
        o = jnp.einsum('hqk,hkd->hqd', p.astype(bf16), v,
                       preferred_element_type=jnp.float32)            # (H,S,dh)

        # Gather heads into a lane-dense (S, D) scratch -> one projection dot.
        o16 = o.astype(bf16)
        for h in range(H):
            attn_scr[:, h * dh:(h + 1) * dh] = o16[h]
        attn = jnp.dot(attn_scr[...], wo[0],
                       preferred_element_type=jnp.float32) + bo[0]
        x1 = attn + res

        # ---------------- MLP block (quick GELU) ----------------
        res = x1
        xn2 = _layer_norm(x1, ln2g[0], ln2b[0])
        h1 = jnp.dot(xn2.astype(bf16), w1[0],
                     preferred_element_type=jnp.float32) + b1[0]
        h1 = h1 * jax.nn.sigmoid(1.702 * h1)
        h2 = jnp.dot(h1.astype(bf16), w2[0],
                     preferred_element_type=jnp.float32) + b2[0]
        y = h2 + res

        o_ref[b] = y

        # Fused final LayerNorm on the last layer (saves a call + HBM trip).
        @pl.when(l == n_layers - 1)
        def _():
            o_ref[b] = _layer_norm(y, fng[...], fnb[...])


# ----------------------------------------------------------------------------
# Wrappers
# ----------------------------------------------------------------------------
def prepare_kernel_params(params, n_heads):
    """Stack per-layer weights along a leading L axis; matmul weights -> bf16.

    The attention scale 1/sqrt(dh) is folded into the q projection columns of
    w_qkv / b_qkv (zero kernel cost)."""
    def stack(name):
        return jnp.stack([lp[name] for lp in params["layers"]], axis=0)

    dim = params["tok_emb"].shape[1]
    dh = dim // n_heads
    scale = 1.0 / math.sqrt(dh)
    q_scale = jnp.concatenate([jnp.full((dim,), scale, jnp.float32),
                               jnp.ones((2 * dim,), jnp.float32)])
    w_qkv = stack("w_qkv") * q_scale
    b_qkv = stack("b_qkv") * q_scale

    return dict(
        ln1_g=stack("ln1_g"), ln1_b=stack("ln1_b"),
        w_qkv=w_qkv.astype(jnp.bfloat16), b_qkv=b_qkv,
        w_o=stack("w_o").astype(jnp.bfloat16), b_o=stack("b_o"),
        ln2_g=stack("ln2_g"), ln2_b=stack("ln2_b"),
        w_1=stack("w_1").astype(jnp.bfloat16), b_1=stack("b_1"),
        w_2=stack("w_2").astype(jnp.bfloat16), b_2=stack("b_2"),
        ln_g=params["ln_g"], ln_b=params["ln_b"],
    )


def _stacked_spec(w):
    tail = (0,) * (w.ndim - 1)
    return pl.BlockSpec((1,) + tuple(w.shape[1:]),
                        lambda g, l, _t=tail: (l,) + _t)


def clip_stack(x, kp, n_heads, num_batch_blocks=1):
    """All transformer layers + final LayerNorm in one pallas_call.

    num_batch_blocks=1 streams each layer's weights once total (best on the
    single-TensorCore v5e/v6e); set 2 on v7x so both TensorCores stay busy
    while each still reuses the weights across its half of the batch."""
    B, S, D = x.shape
    S_pad = _padded_seq(S)
    if S_pad != S:
        x = jnp.pad(x, ((0, 0), (0, S_pad - S), (0, 0)))
    assert B % num_batch_blocks == 0, (B, num_batch_blocks)
    bb = B // num_batch_blocks
    dh = D // n_heads
    L = kp["w_qkv"].shape[0]

    # Causal mask, hoisted out of the kernel (padded keys stay masked for all
    # real query rows because col >= S_real > row implies col > row).
    row = lax.broadcasted_iota(jnp.int32, (S_pad, S_pad), 0)
    col = lax.broadcasted_iota(jnp.int32, (S_pad, S_pad), 1)
    mask = jnp.where(col > row, -jnp.inf, 0.0).astype(jnp.float32)

    weights = (kp["ln1_g"], kp["ln1_b"], kp["w_qkv"], kp["b_qkv"],
               kp["w_o"], kp["b_o"], kp["ln2_g"], kp["ln2_b"],
               kp["w_1"], kp["b_1"], kp["w_2"], kp["b_2"])

    in_specs = (
        [pl.BlockSpec((S_pad, S_pad), lambda g, l: (0, 0)),          # mask
         pl.BlockSpec((bb, S_pad, D), lambda g, l: (g, 0, 0))]       # x seed
        + [_stacked_spec(w) for w in weights]
        + [pl.BlockSpec((1, D), lambda g, l: (0, 0)),                # final LN
           pl.BlockSpec((1, D), lambda g, l: (0, 0))]
    )

    kernel = functools.partial(_clip_stack_kernel, n_heads=n_heads)
    out = pl.pallas_call(
        kernel,
        out_shape=jax.ShapeDtypeStruct((B, S_pad, D), jnp.float32),
        grid=(num_batch_blocks, L),
        in_specs=in_specs,
        out_specs=pl.BlockSpec((bb, S_pad, D), lambda g, l: (g, 0, 0)),
        scratch_shapes=[
            pltpu.VMEM((3 * n_heads, S_pad, dh), jnp.bfloat16),  # q|k|v heads
            pltpu.VMEM((S_pad, D), jnp.bfloat16),                # head gather
        ],
        compiler_params=pltpu.CompilerParams(
            # Batch-block axis parallel (only useful on 2-TC v7x); layer axis
            # is a sequential carry whose weight DMA is hidden by the
            # BlockSpec double-buffering.
            dimension_semantics=("parallel", "arbitrary"),
            # Real CLIP layer: ~14 MB bf16 weights -> ~28 MB double-buffered,
            # plus activations; 44 MiB fits v7x's 64 MiB VMEM with headroom.
            vmem_limit_bytes=44 * 1024 * 1024,
        ),
    )(mask, x, *weights, kp["ln_g"], kp["ln_b"])
    return out[:, :S, :]


def clip_forward(tokens, params, n_heads, num_batch_blocks=1):
    # Token-embedding gather + position add: plain-JAX glue (no Pallas gather).
    state = jnp.take(params["tok_emb"], tokens.astype(jnp.int32), axis=0)
    state = state + params["pos_emb"]
    kp = prepare_kernel_params(params, n_heads)
    return clip_stack(state, kp, n_heads, num_batch_blocks)


# ----------------------------------------------------------------------------
# Parameters (deterministic init; shapes follow the PyTorch module __init__)
# ----------------------------------------------------------------------------
def init_params(key, vocab, dim, seq, n_layers):
    keys = jax.random.split(key, 2 + n_layers)
    params = {
        "tok_emb": jax.random.normal(keys[0], (vocab, dim), jnp.float32) * 0.02,
        "pos_emb": jax.random.normal(keys[1], (seq, dim), jnp.float32) * 0.02,
        "ln_g": jnp.ones((1, dim), jnp.float32),
        "ln_b": jnp.zeros((1, dim), jnp.float32),
        "layers": [],
    }
    for l in range(n_layers):
        ks = jax.random.split(keys[2 + l], 8)
        params["layers"].append({
            "ln1_g": jnp.ones((1, dim), jnp.float32),
            "ln1_b": jnp.zeros((1, dim), jnp.float32),
            "w_qkv": jax.random.normal(ks[0], (dim, 3 * dim), jnp.float32) * 0.02,
            "b_qkv": jax.random.normal(ks[1], (1, 3 * dim), jnp.float32) * 0.02,
            "w_o": jax.random.normal(ks[2], (dim, dim), jnp.float32) * 0.02,
            "b_o": jax.random.normal(ks[3], (1, dim), jnp.float32) * 0.02,
            "ln2_g": jnp.ones((1, dim), jnp.float32),
            "ln2_b": jnp.zeros((1, dim), jnp.float32),
            "w_1": jax.random.normal(ks[4], (dim, 4 * dim), jnp.float32) * 0.02,
            "b_1": jax.random.normal(ks[5], (1, 4 * dim), jnp.float32) * 0.02,
            "w_2": jax.random.normal(ks[6], (4 * dim, dim), jnp.float32) * 0.02,
            "b_2": jax.random.normal(ks[7], (1, dim), jnp.float32) * 0.02,
        })
    return params


# ----------------------------------------------------------------------------
# Pure-JAX reference (mirrors the PyTorch forward with the same bf16-input /
# f32-accumulation precision choices as the kernel)
# ----------------------------------------------------------------------------
def _ref_ln(x, g, b, eps=1e-5):
    mu = x.mean(-1, keepdims=True)
    var = ((x - mu) ** 2).mean(-1, keepdims=True)
    return (x - mu) / jnp.sqrt(var + eps) * g + b


def _ref_layer(x, lp, n_heads):
    bf16 = jnp.bfloat16
    B, S, D = x.shape
    dh = D // n_heads
    res = x
    xn = _ref_ln(x, lp["ln1_g"], lp["ln1_b"])
    qkv = jnp.dot(xn.astype(bf16), lp["w_qkv"].astype(bf16),
                  preferred_element_type=jnp.float32) + lp["b_qkv"]
    q, k, v = jnp.split(qkv, 3, axis=-1)
    to_heads = lambda t: t.reshape(B, S, n_heads, dh).transpose(0, 2, 1, 3)
    q, k, v = to_heads(q), to_heads(k), to_heads(v)
    w = jnp.einsum("bhqd,bhkd->bhqk", q.astype(bf16), k.astype(bf16),
                   preferred_element_type=jnp.float32)
    mask = jnp.triu(jnp.ones((S, S), bool), 1)
    w = jnp.where(mask, -jnp.inf, w) / math.sqrt(dh)
    w = jax.nn.softmax(w, axis=-1)
    o = jnp.einsum("bhqk,bhkd->bhqd", w.astype(bf16), v.astype(bf16),
                   preferred_element_type=jnp.float32)
    o = o.transpose(0, 2, 1, 3).reshape(B, S, D)
    x = jnp.dot(o.astype(bf16), lp["w_o"].astype(bf16),
                preferred_element_type=jnp.float32) + lp["b_o"] + res
    res = x
    xn = _ref_ln(x, lp["ln2_g"], lp["ln2_b"])
    h = jnp.dot(xn.astype(bf16), lp["w_1"].astype(bf16),
                preferred_element_type=jnp.float32) + lp["b_1"]
    h = h * jax.nn.sigmoid(1.702 * h)
    h = jnp.dot(h.astype(bf16), lp["w_2"].astype(bf16),
                preferred_element_type=jnp.float32) + lp["b_2"]
    return h + res


def ref_forward(tokens, params, n_heads):
    state = jnp.take(params["tok_emb"], tokens.astype(jnp.int32), axis=0)
    state = state + params["pos_emb"]
    for lp in params["layers"]:
        state = _ref_layer(state, lp, n_heads)
    return _ref_ln(state, params["ln_g"], params["ln_b"])


# ----------------------------------------------------------------------------
if __name__ == "__main__":
    # Small config consistent with the CLIP module structure
    # (real model: vocab=49408, dim=768, seq=77, heads=12, layers=12).
    VOCAB, DIM, SEQ, HEADS, LAYERS, BATCH = 1000, 64, 10, 4, 3, 2

    key = jax.random.PRNGKey(0)
    k_params, k_tokens = jax.random.split(key)
    params = init_params(k_params, VOCAB, DIM, SEQ, LAYERS)
    tokens = jax.random.randint(k_tokens, (BATCH, SEQ), 0, VOCAB, dtype=jnp.int32)

    out = jax.block_until_ready(clip_forward(tokens, params, HEADS))
    ref = jax.block_until_ready(ref_forward(tokens, params, HEADS))

    assert out.shape == (BATCH, SEQ, DIM), out.shape
    assert out.dtype == jnp.float32
    assert bool(jnp.all(jnp.isfinite(out)))
    err = float(jnp.max(jnp.abs(out - ref)))
    assert bool(jnp.allclose(out, ref, atol=2e-2, rtol=2e-2)), err

    print("KERNEL_OK")
</pallas_src>

<mosaic_0001>
module attributes {stable_mosaic.version = 11 : i64} {
  func.func @_clip_stack_kernel(%arg0: i32, %arg1: i32, %arg2: memref<16x16xf32, #tpu.memory_space<vmem>>, %arg3: memref<2x16x64xf32, #tpu.memory_space<vmem>>, %arg4: memref<1x1x64xf32, #tpu.memory_space<vmem>>, %arg5: memref<1x1x64xf32, #tpu.memory_space<vmem>>, %arg6: memref<1x64x192xbf16, #tpu.memory_space<vmem>>, %arg7: memref<1x1x192xf32, #tpu.memory_space<vmem>>, %arg8: memref<1x64x64xbf16, #tpu.memory_space<vmem>>, %arg9: memref<1x1x64xf32, #tpu.memory_space<vmem>>, %arg10: memref<1x1x64xf32, #tpu.memory_space<vmem>>, %arg11: memref<1x1x64xf32, #tpu.memory_space<vmem>>, %arg12: memref<1x64x256xbf16, #tpu.memory_space<vmem>>, %arg13: memref<1x1x256xf32, #tpu.memory_space<vmem>>, %arg14: memref<1x256x64xbf16, #tpu.memory_space<vmem>>, %arg15: memref<1x1x64xf32, #tpu.memory_space<vmem>>, %arg16: memref<1x64xf32, #tpu.memory_space<vmem>>, %arg17: memref<1x64xf32, #tpu.memory_space<vmem>>, %arg18: memref<2x16x64xf32, #tpu.memory_space<vmem>>, %arg19: memref<12x16x16xbf16, #tpu.memory_space<vmem>>, %arg20: memref<16x64xbf16, #tpu.memory_space<vmem>>) attributes {dimension_semantics = [#tpu.dimension_semantics<parallel>, #tpu.dimension_semantics<arbitrary>], iteration_bounds = array<i64: 1, 3>, scalar_prefetch = 0 : i64, scratch_operands = 2 : i64, tpu.core_type = #tpu.core_type<tc>, window_params = [{pipeline_mode = #tpu.pipeline_mode<synchronous>, transform_indices = @transform_0, window_bounds = array<i64: 16, 16>}, {transform_indices = @transform_1, window_bounds = array<i64: 2, 16, 64>}, {transform_indices = @transform_2, window_bounds = array<i64: 1, 1, 64>}, {transform_indices = @transform_3, window_bounds = array<i64: 1, 1, 64>}, {transform_indices = @transform_4, window_bounds = array<i64: 1, 64, 192>}, {transform_indices = @transform_5, window_bounds = array<i64: 1, 1, 192>}, {transform_indices = @transform_6, window_bounds = array<i64: 1, 64, 64>}, {transform_indices = @transform_7, window_bounds = array<i64: 1, 1, 64>}, {transform_indices = @transform_8, window_bounds = array<i64: 1, 1, 64>}, {transform_indices = @transform_9, window_bounds = array<i64: 1, 1, 64>}, {transform_indices = @transform_10, window_bounds = array<i64: 1, 64, 256>}, {transform_indices = @transform_11, window_bounds = array<i64: 1, 1, 256>}, {transform_indices = @transform_12, window_bounds = array<i64: 1, 256, 64>}, {transform_indices = @transform_13, window_bounds = array<i64: 1, 1, 64>}, {pipeline_mode = #tpu.pipeline_mode<synchronous>, transform_indices = @transform_14, window_bounds = array<i64: 1, 64>}, {pipeline_mode = #tpu.pipeline_mode<synchronous>, transform_indices = @transform_15, window_bounds = array<i64: 1, 64>}, {transform_indices = @transform_16, window_bounds = array<i64: 2, 16, 64>}]} {
    %c0_i32 = arith.constant 0 : i32
    %0 = arith.cmpi eq, %arg1, %c0_i32 : i32
    %1 = arith.extui %0 : i1 to i32
    %c0_i32_0 = arith.constant 0 : i32
    %2 = arith.cmpi ne, %1, %c0_i32_0 : i32
    scf.if %2 {
      %c0_224 = arith.constant 0 : index
      %c0_225 = arith.constant 0 : index
      %c0_226 = arith.constant 0 : index
      %392 = vector.load %arg3[%c0_224, %c0_225, %c0_226] : memref<2x16x64xf32, #tpu.memory_space<vmem>>, vector<2x16x64xf32>
      %c0_227 = arith.constant 0 : index
      %c0_228 = arith.constant 0 : index
      %c0_229 = arith.constant 0 : index
      %393 = vector.load %arg18[%c0_227, %c0_228, %c0_229] : memref<2x16x64xf32, #tpu.memory_space<vmem>>, vector<2x16x64xf32>
      tpu.vector_store %arg18[%c0_227, %c0_228, %c0_229], %392 {strides = array<i32>} : memref<2x16x64xf32, #tpu.memory_space<vmem>>, vector<2x16x64xf32>,
    } else {
    }
    %c0 = arith.constant 0 : index
    %c0_1 = arith.constant 0 : index
    %3 = vector.load %arg2[%c0, %c0_1] : memref<16x16xf32, #tpu.memory_space<vmem>>, vector<16x16xf32>
    %c0_2 = arith.constant 0 : index
    %c0_3 = arith.constant 0 : index
    %c0_4 = arith.constant 0 : index
    %4 = vector.load %arg18[%c0_2, %c0_3, %c0_4] : memref<2x16x64xf32, #tpu.memory_space<vmem>>, vector<1x16x64xf32>
    %5 = vector.shape_cast %4 : vector<1x16x64xf32> to vector<16x64xf32>
    %c0_5 = arith.constant 0 : index
    %c0_6 = arith.constant 0 : index
    %c0_7 = arith.constant 0 : index
    %6 = vector.load %arg4[%c0_5, %c0_6, %c0_7] : memref<1x1x64xf32, #tpu.memory_space<vmem>>, vector<1x1x64xf32>
    %7 = vector.shape_cast %6 : vector<1x1x64xf32> to vector<1x64xf32>
    %c0_8 = arith.constant 0 : index
    %c0_9 = arith.constant 0 : index
    %c0_10 = arith.constant 0 : index
    %8 = vector.load %arg5[%c0_8, %c0_9, %c0_10] : memref<1x1x64xf32, #tpu.memory_space<vmem>>, vector<1x1x64xf32>
    %9 = vector.shape_cast %8 : vector<1x1x64xf32> to vector<1x64xf32>
    %cst = arith.constant dense<0.000000e+00> : vector<16xf32>
    %10 = vector.multi_reduction <add>, %5, %cst [1] : vector<16x64xf32> to vector<16xf32>
    %11 = vector.shape_cast %10 : vector<16xf32> to vector<16x1xf32>
    %cst_11 = arith.constant 6.400000e+01 : f32
    %12 = vector.broadcast %cst_11 : f32 to vector<16x1xf32>
    %13 = arith.divf %11, %12 : vector<16x1xf32>
    %14 = vector.broadcast %13 : vector<16x1xf32> to vector<16x64xf32>
    %15 = arith.subf %5, %14 : vector<16x64xf32>
    %16 = arith.mulf %15, %15 : vector<16x64xf32>
    %cst_12 = arith.constant dense<0.000000e+00> : vector<16xf32>
    %17 = vector.multi_reduction <add>, %16, %cst_12 [1] : vector<16x64xf32> to vector<16xf32>
    %18 = vector.shape_cast %17 : vector<16xf32> to vector<16x1xf32>
    %cst_13 = arith.constant 6.400000e+01 : f32
    %19 = vector.broadcast %cst_13 : f32 to vector<16x1xf32>
    %20 = arith.divf %18, %19 : vector<16x1xf32>
    %21 = vector.broadcast %13 : vector<16x1xf32> to vector<16x64xf32>
    %22 = arith.subf %5, %21 : vector<16x64xf32>
    %cst_14 = arith.constant 9.99999974E-6 : f32
    %23 = vector.broadcast %cst_14 : f32 to vector<16x1xf32>
    %24 = arith.addf %20, %23 : vector<16x1xf32>
    %25 = math.rsqrt %24 : vector<16x1xf32>
    %26 = vector.broadcast %25 : vector<16x1xf32> to vector<16x64xf32>
    %27 = arith.mulf %22, %26 : vector<16x64xf32>
    %28 = vector.broadcast %7 : vector<1x64xf32> to vector<16x64xf32>
    %29 = arith.mulf %27, %28 : vector<16x64xf32>
    %30 = vector.broadcast %9 : vector<1x64xf32> to vector<16x64xf32>
    %31 = arith.addf %29, %30 : vector<16x64xf32>
    %32 = arith.truncf %31 : vector<16x64xf32> to vector<16x64xbf16>
    %c0_15 = arith.constant 0 : index
    %c0_16 = arith.constant 0 : index
    %c0_17 = arith.constant 0 : index
    %33 = vector.load %arg6[%c0_15, %c0_16, %c0_17] : memref<1x64x192xbf16, #tpu.memory_space<vmem>>, vector<1x64x192xbf16>
    %34 = vector.shape_cast %33 : vector<1x64x192xbf16> to vector<64x192xbf16>
    %cst_18 = arith.constant dense<0.000000e+00> : vector<16x192xf32>
    %35 = tpu.matmul %32, %34, %cst_18 {dimension_numbers = #tpu.dot_dimension_numbers<[1], [0], [0], [1], [0, 0, 1, 1], [], []>} : vector<16x64xbf16>, vector<64x192xbf16>, vector<16x192xf32> -> vector<16x192xf32>
    %c0_19 = arith.constant 0 : index
    %c0_20 = arith.constant 0 : index
    %c0_21 = arith.constant 0 : index
    %36 = vector.load %arg7[%c0_19, %c0_20, %c0_21] : memref<1x1x192xf32, #tpu.memory_space<vmem>>, vector<1x1x192xf32>
    %37 = vector.shape_cast %36 : vector<1x1x192xf32> to vector<1x192xf32>
    %38 = vector.broadcast %37 : vector<1x192xf32> to vector<16x192xf32>
    %39 = arith.addf %35, %38 : vector<16x192xf32>
    %40 = vector.extract_strided_slice %39 {offsets = [0, 0], sizes = [16, 16], strides = [1, 1]} : vector<16x192xf32> to vector<16x16xf32>
    %41 = arith.truncf %40 : vector<16x16xf32> to vector<16x16xbf16>
    %c0_22 = arith.constant 0 : index
    %c0_23 = arith.constant 0 : index
    %c0_24 = arith.constant 0 : index
    %42 = vector.load %arg19[%c0_22, %c0_23, %c0_24] : memref<12x16x16xbf16, #tpu.memory_space<vmem>>, vector<1x16x16xbf16>
    %43 = vector.shape_cast %42 : vector<1x16x16xbf16> to vector<16x16xbf16>
    %44 = vector.shape_cast %41 : vector<16x16xbf16> to vector<1x16x16xbf16>
    tpu.vector_store %arg19[%c0_22, %c0_23, %c0_24], %44 {strides = array<i32>} : memref<12x16x16xbf16, #tpu.memory_space<vmem>>, vector<1x16x16xbf16>,
    %45 = vector.extract_strided_slice %39 {offsets = [0, 16], sizes = [16, 16], strides = [1, 1]} : vector<16x192xf32> to vector<16x16xf32>
    %46 = arith.truncf %45 : vector<16x16xf32> to vector<16x16xbf16>
    %c1 = arith.constant 1 : index
    %c0_25 = arith.constant 0 : index
    %c0_26 = arith.constant 0 : index
    %47 = vector.load %arg19[%c1, %c0_25, %c0_26] : memref<12x16x16xbf16, #tpu.memory_space<vmem>>, vector<1x16x16xbf16>
    %48 = vector.shape_cast %47 : vector<1x16x16xbf16> to vector<16x16xbf16>
    %49 = vector.shape_cast %46 : vector<16x16xbf16> to vector<1x16x16xbf16>
    tpu.vector_store %arg19[%c1, %c0_25, %c0_26], %49 {strides = array<i32>} : memref<12x16x16xbf16, #tpu.memory_space<vmem>>, vector<1x16x16xbf16>,
    %50 = vector.extract_strided_slice %39 {offsets = [0, 32], sizes = [16, 16], strides = [1, 1]} : vector<16x192xf32> to vector<16x16xf32>
    %51 = arith.truncf %50 : vector<16x16xf32> to vector<16x16xbf16>
    %c2 = arith.constant 2 : index
    %c0_27 = arith.constant 0 : index
    %c0_28 = arith.constant 0 : index
    %52 = vector.load %arg19[%c2, %c0_27, %c0_28] : memref<12x16x16xbf16, #tpu.memory_space<vmem>>, vector<1x16x16xbf16>
    %53 = vector.shape_cast %52 : vector<1x16x16xbf16> to vector<16x16xbf16>
    %54 = vector.shape_cast %51 : vector<16x16xbf16> to vector<1x16x16xbf16>
    tpu.vector_store %arg19[%c2, %c0_27, %c0_28], %54 {strides = array<i32>} : memref<12x16x16xbf16, #tpu.memory_space<vmem>>, vector<1x16x16xbf16>,
    %55 = vector.extract_strided_slice %39 {offsets = [0, 48], sizes = [16, 16], strides = [1, 1]} : vector<16x192xf32> to vector<16x16xf32>
    %56 = arith.truncf %55 : vector<16x16xf32> to vector<16x16xbf16>
    %c3 = arith.constant 3 : index
    %c0_29 = arith.constant 0 : index
    %c0_30 = arith.constant 0 : index
    %57 = vector.load %arg19[%c3, %c0_29, %c0_30] : memref<12x16x16xbf16, #tpu.memory_space<vmem>>, vector<1x16x16xbf16>
    %58 = vector.shape_cast %57 : vector<1x16x16xbf16> to vector<16x16xbf16>
    %59 = vector.shape_cast %56 : vector<16x16xbf16> to vector<1x16x16xbf16>
    tpu.vector_store %arg19[%c3, %c0_29, %c0_30], %59 {strides = array<i32>} : memref<12x16x16xbf16, #tpu.memory_space<vmem>>, vector<1x16x16xbf16>,
    %60 = vector.extract_strided_slice %39 {offsets = [0, 64], sizes = [16, 16], strides = [1, 1]} : vector<16x192xf32> to vector<16x16xf32>
    %61 = arith.truncf %60 : vector<16x16xf32> to vector<16x16xbf16>
    %c4 = arith.constant 4 : index
    %c0_31 = arith.constant 0 : index
    %c0_32 = arith.constant 0 : index
    %62 = vector.load %arg19[%c4, %c0_31, %c0_32] : memref<12x16x16xbf16, #tpu.memory_space<vmem>>, vector<1x16x16xbf16>
    %63 = vector.shape_cast %62 : vector<1x16x16xbf16> to vector<16x16xbf16>
    %64 = vector.shape_cast %61 : vector<16x16xbf16> to vector<1x16x16xbf16>
    tpu.vector_store %arg19[%c4, %c0_31, %c0_32], %64 {strides = array<i32>} : memref<12x16x16xbf16, #tpu.memory_space<vmem>>, vector<1x16x16xbf16>,
    %65 = vector.extract_strided_slice %39 {offsets = [0, 80], sizes = [16, 16], strides = [1, 1]} : vector<16x192xf32> to vector<16x16xf32>
    %66 = arith.truncf %65 : vector<16x16xf32> to vector<16x16xbf16>
    %c5 = arith.constant 5 : index
    %c0_33 = arith.constant 0 : index
    %c0_34 = arith.constant 0 : index
    %67 = vector.load %arg19[%c5, %c0_33, %c0_34] : memref<12x16x16xbf16, #tpu.memory_space<vmem>>, vector<1x16x16xbf16>
    %68 = vector.shape_cast %67 : vector<1x16x16xbf16> to vector<16x16xbf16>
    %69 = vector.shape_cast %66 : vector<16x16xbf16> to vector<1x16x16xbf16>
    tpu.vector_store %arg19[%c5, %c0_33, %c0_34], %69 {strides = array<i32>} : memref<12x16x16xbf16, #tpu.memory_space<vmem>>, vector<1x16x16xbf16>,
    %70 = vector.extract_strided_slice %39 {offsets = [0, 96], sizes = [16, 16], strides = [1, 1]} : vector<16x192xf32> to vector<16x16xf32>
    %71 = arith.truncf %70 : vector<16x16xf32> to vector<16x16xbf16>
    %c6 = arith.constant 6 : index
    %c0_35 = arith.constant 0 : index
    %c0_36 = arith.constant 0 : index
    %72 = vector.load %arg19[%c6, %c0_35, %c0_36] : memref<12x16x16xbf16, #tpu.memory_space<vmem>>, vector<1x16x16xbf16>
    %73 = vector.shape_cast %72 : vector<1x16x16xbf16> to vector<16x16xbf16>
    %74 = vector.shape_cast %71 : vector<16x16xbf16> to vector<1x16x16xbf16>
    tpu.vector_store %arg19[%c6, %c0_35, %c0_36], %74 {strides = array<i32>} : memref<12x16x16xbf16, #tpu.memory_space<vmem>>, vector<1x16x16xbf16>,
    %75 = vector.extract_strided_slice %39 {offsets = [0, 112], sizes = [16, 16], strides = [1, 1]} : vector<16x192xf32> to vector<16x16xf32>
    %76 = arith.truncf %75 : vector<16x16xf32> to vector<16x16xbf16>
    %c7 = arith.constant 7 : index
    %c0_37 = arith.constant 0 : index
    %c0_38 = arith.constant 0 : index
    %77 = vector.load %arg19[%c7, %c0_37, %c0_38] : memref<12x16x16xbf16, #tpu.memory_space<vmem>>, vector<1x16x16xbf16>
    %78 = vector.shape_cast %77 : vector<1x16x16xbf16> to vector<16x16xbf16>
    %79 = vector.shape_cast %76 : vector<16x16xbf16> to vector<1x16x16xbf16>
    tpu.vector_store %arg19[%c7, %c0_37, %c0_38], %79 {strides = array<i32>} : memref<12x16x16xbf16, #tpu.memory_space<vmem>>, vector<1x16x16xbf16>,
    %80 = vector.extract_strided_slice %39 {offsets = [0, 128], sizes = [16, 16], strides = [1, 1]} : vector<16x192xf32> to vector<16x16xf32>
    %81 = arith.truncf %80 : vector<16x16xf32> to vector<16x16xbf16>
    %c8 = arith.constant 8 : index
    %c0_39 = arith.constant 0 : index
    %c0_40 = arith.constant 0 : index
    %82 = vector.load %arg19[%c8, %c0_39, %c0_40] : memref<12x16x16xbf16, #tpu.memory_space<vmem>>, vector<1x16x16xbf16>
    %83 = vector.shape_cast %82 : vector<1x16x16xbf16> to vector<16x16xbf16>
    %84 = vector.shape_cast %81 : vector<16x16xbf16> to vector<1x16x16xbf16>
    tpu.vector_store %arg19[%c8, %c0_39, %c0_40], %84 {strides = array<i32>} : memref<12x16x16xbf16, #tpu.memory_space<vmem>>, vector<1x16x16xbf16>,
    %85 = vector.extract_strided_slice %39 {offsets = [0, 144], sizes = [16, 16], strides = [1, 1]} : vector<16x192xf32> to vector<16x16xf32>
    %86 = arith.truncf %85 : vector<16x16xf32> to vector<16x16xbf16>
    %c9 = arith.constant 9 : index
    %c0_41 = arith.constant 0 : index
    %c0_42 = arith.constant 0 : index
    %87 = vector.load %arg19[%c9, %c0_41, %c0_42] : memref<12x16x16xbf16, #tpu.memory_space<vmem>>, vector<1x16x16xbf16>
    %88 = vector.shape_cast %87 : vector<1x16x16xbf16> to vector<16x16xbf16>
    %89 = vector.shape_cast %86 : vector<16x16xbf16> to vector<1x16x16xbf16>
    tpu.vector_store %arg19[%c9, %c0_41, %c0_42], %89 {strides = array<i32>} : memref<12x16x16xbf16, #tpu.memory_space<vmem>>, vector<1x16x16xbf16>,
    %90 = vector.extract_strided_slice %39 {offsets = [0, 160], sizes = [16, 16], strides = [1, 1]} : vector<16x192xf32> to vector<16x16xf32>
    %91 = arith.truncf %90 : vector<16x16xf32> to vector<16x16xbf16>
    %c10 = arith.constant 10 : index
    %c0_43 = arith.constant 0 : index
    %c0_44 = arith.constant 0 : index
    %92 = vector.load %arg19[%c10, %c0_43, %c0_44] : memref<12x16x16xbf16, #tpu.memory_space<vmem>>, vector<1x16x16xbf16>
    %93 = vector.shape_cast %92 : vector<1x16x16xbf16> to vector<16x16xbf16>
    %94 = vector.shape_cast %91 : vector<16x16xbf16> to vector<1x16x16xbf16>
    tpu.vector_store %arg19[%c10, %c0_43, %c0_44], %94 {strides = array<i32>} : memref<12x16x16xbf16, #tpu.memory_space<vmem>>, vector<1x16x16xbf16>,
    %95 = vector.extract_strided_slice %39 {offsets = [0, 176], sizes = [16, 16], strides = [1, 1]} : vector<16x192xf32> to vector<16x16xf32>
    %96 = arith.truncf %95 : vector<16x16xf32> to vector<16x16xbf16>
    %c11 = arith.constant 11 : index
    %c0_45 = arith.constant 0 : index
    %c0_46 = arith.constant 0 : index
    %97 = vector.load %arg19[%c11, %c0_45, %c0_46] : memref<12x16x16xbf16, #tpu.memory_space<vmem>>, vector<1x16x16xbf16>
    %98 = vector.shape_cast %97 : vector<1x16x16xbf16> to vector<16x16xbf16>
    %99 = vector.shape_cast %96 : vector<16x16xbf16> to vector<1x16x16xbf16>
    tpu.vector_store %arg19[%c11, %c0_45, %c0_46], %99 {strides = array<i32>} : memref<12x16x16xbf16, #tpu.memory_space<vmem>>, vector<1x16x16xbf16>,
    %c0_47 = arith.constant 0 : index
    %c0_48 = arith.constant 0 : index
    %c0_49 = arith.constant 0 : index
    %100 = vector.load %arg19[%c0_47, %c0_48, %c0_49] : memref<12x16x16xbf16, #tpu.memory_space<vmem>>, vector<4x16x16xbf16>
    %c4_50 = arith.constant 4 : index
    %c0_51 = arith.constant 0 : index
    %c0_52 = arith.constant 0 : index
    %101 = vector.load %arg19[%c4_50, %c0_51, %c0_52] : memref<12x16x16xbf16, #tpu.memory_space<vmem>>, vector<4x16x16xbf16>
    %c8_53 = arith.constant 8 : index
    %c0_54 = arith.constant 0 : index
    %c0_55 = arith.constant 0 : index
    %102 = vector.load %arg19[%c8_53, %c0_54, %c0_55] : memref<12x16x16xbf16, #tpu.memory_space<vmem>>, vector<4x16x16xbf16>
    "tpu.trace_start"() <{level = 10 : i32, message = "hqd,hkd->hqk"}> : () -> ()
    %cst_56 = arith.constant dense<0.000000e+00> : vector<4x16x16xf32>
    %103 = tpu.matmul %100, %101, %cst_56 {dimension_numbers = #tpu.dot_dimension_numbers<[2], [2], [1], [1], [0, 0, 0, 1, 1, 1], [0], [0]>} : vector<4x16x16xbf16>, vector<4x16x16xbf16>, vector<4x16x16xf32> -> vector<4x16x16xf32>
    "tpu.trace_stop"() : () -> ()
    %104 = vector.shape_cast %3 : vector<16x16xf32> to vector<1x16x16xf32>
    %105 = vector.broadcast %104 : vector<1x16x16xf32> to vector<4x16x16xf32>
    %106 = arith.addf %103, %105 : vector<4x16x16xf32>
    %cst_57 = arith.constant dense<0xFF800000> : vector<4x16xf32>
    %107 = vector.multi_reduction <maximumf>, %106, %cst_57 [2] : vector<4x16x16xf32> to vector<4x16xf32>
    %108 = vector.shape_cast %107 : vector<4x16xf32> to vector<4x16x1xf32>
    %109 = vector.broadcast %108 : vector<4x16x1xf32> to vector<4x16x16xf32>
    %110 = arith.subf %106, %109 : vector<4x16x16xf32>
    %111 = math.exp %110 : vector<4x16x16xf32>
    %cst_58 = arith.constant dense<0.000000e+00> : vector<4x16xf32>
    %112 = vector.multi_reduction <add>, %111, %cst_58 [2] : vector<4x16x16xf32> to vector<4x16xf32>
    %113 = vector.shape_cast %112 : vector<4x16xf32> to vector<4x16x1xf32>
    %114 = tpu.reciprocal %113 {approx = true} : vector<4x16x1xf32> -> vector<4x16x1xf32>
    %115 = vector.broadcast %114 : vector<4x16x1xf32> to vector<4x16x16xf32>
    %116 = arith.mulf %111, %115 : vector<4x16x16xf32>
    %117 = arith.truncf %116 : vector<4x16x16xf32> to vector<4x16x16xbf16>
    "tpu.trace_start"() <{level = 10 : i32, message = "hqk,hkd->hqd"}> : () -> ()
    %cst_59 = arith.constant dense<0.000000e+00> : vector<4x16x16xf32>
    %118 = tpu.matmul %117, %102, %cst_59 {dimension_numbers = #tpu.dot_dimension_numbers<[2], [1], [1], [2], [0, 0, 0, 1, 1, 2], [0], [0]>} : vector<4x16x16xbf16>, vector<4x16x16xbf16>, vector<4x16x16xf32> -> vector<4x16x16xf32>
    "tpu.trace_stop"() : () -> ()
    %119 = arith.truncf %118 : vector<4x16x16xf32> to vector<4x16x16xbf16>
    %120 = vector.extract_strided_slice %119 {offsets = [0, 0, 0], sizes = [1, 16, 16], strides = [1, 1, 1]} : vector<4x16x16xbf16> to vector<1x16x16xbf16>
    %121 = vector.shape_cast %120 : vector<1x16x16xbf16> to vector<16x16xbf16>
    %c0_60 = arith.constant 0 : index
    %c0_61 = arith.constant 0 : index
    %122 = vector.load %arg20[%c0_60, %c0_61] : memref<16x64xbf16, #tpu.memory_space<vmem>>, vector<16x16xbf16>
    tpu.vector_store %arg20[%c0_60, %c0_61], %121 {strides = array<i32>} : memref<16x64xbf16, #tpu.memory_space<vmem>>, vector<16x16xbf16>,
    %123 = vector.extract_strided_slice %119 {offsets = [1, 0, 0], sizes = [1, 16, 16], strides = [1, 1, 1]} : vector<4x16x16xbf16> to vector<1x16x16xbf16>
    %124 = vector.shape_cast %123 : vector<1x16x16xbf16> to vector<16x16xbf16>
    %c0_62 = arith.constant 0 : index
    %c16 = arith.constant 16 : index
    %125 = vector.load %arg20[%c0_62, %c16] : memref<16x64xbf16, #tpu.memory_space<vmem>>, vector<16x16xbf16>
    tpu.vector_store %arg20[%c0_62, %c16], %124 {strides = array<i32>} : memref<16x64xbf16, #tpu.memory_space<vmem>>, vector<16x16xbf16>,
    %126 = vector.extract_strided_slice %119 {offsets = [2, 0, 0], sizes = [1, 16, 16], strides = [1, 1, 1]} : vector<4x16x16xbf16> to vector<1x16x16xbf16>
    %127 = vector.shape_cast %126 : vector<1x16x16xbf16> to vector<16x16xbf16>
    %c0_63 = arith.constant 0 : index
    %c32 = arith.constant 32 : index
    %128 = vector.load %arg20[%c0_63, %c32] : memref<16x64xbf16, #tpu.memory_space<vmem>>, vector<16x16xbf16>
    tpu.vector_store %arg20[%c0_63, %c32], %127 {strides = array<i32>} : memref<16x64xbf16, #tpu.memory_space<vmem>>, vector<16x16xbf16>,
    %129 = vector.extract_strided_slice %119 {offsets = [3, 0, 0], sizes = [1, 16, 16], strides = [1, 1, 1]} : vector<4x16x16xbf16> to vector<1x16x16xbf16>
    %130 = vector.shape_cast %129 : vector<1x16x16xbf16> to vector<16x16xbf16>
    %c0_64 = arith.constant 0 : index
    %c48 = arith.constant 48 : index
    %131 = vector.load %arg20[%c0_64, %c48] : memref<16x64xbf16, #tpu.memory_space<vmem>>, vector<16x16xbf16>
    tpu.vector_store %arg20[%c0_64, %c48], %130 {strides = array<i32>} : memref<16x64xbf16, #tpu.memory_space<vmem>>, vector<16x16xbf16>,
    %c0_65 = arith.constant 0 : index
    %c0_66 = arith.constant 0 : index
    %132 = vector.load %arg20[%c0_65, %c0_66] : memref<16x64xbf16, #tpu.memory_space<vmem>>, vector<16x64xbf16>
    %c0_67 = arith.constant 0 : index
    %c0_68 = arith.constant 0 : index
    %c0_69 = arith.constant 0 : index
    %133 = vector.load %arg8[%c0_67, %c0_68, %c0_69] : memref<1x64x64xbf16, #tpu.memory_space<vmem>>, vector<1x64x64xbf16>
    %134 = vector.shape_cast %133 : vector<1x64x64xbf16> to vector<64x64xbf16>
    %cst_70 = arith.constant dense<0.000000e+00> : vector<16x64xf32>
    %135 = tpu.matmul %132, %134, %cst_70 {dimension_numbers = #tpu.dot_dimension_numbers<[1], [0], [0], [1], [0, 0, 1, 1], [], []>} : vector<16x64xbf16>, vector<64x64xbf16>, vector<16x64xf32> -> vector<16x64xf32>
    %c0_71 = arith.constant 0 : index
    %c0_72 = arith.constant 0 : index
    %c0_73 = arith.constant 0 : index
    %136 = vector.load %arg9[%c0_71, %c0_72, %c0_73] : memref<1x1x64xf32, #tpu.memory_space<vmem>>, vector<1x1x64xf32>
    %137 = vector.shape_cast %136 : vector<1x1x64xf32> to vector<1x64xf32>
    %138 = vector.broadcast %137 : vector<1x64xf32> to vector<16x64xf32>
    %139 = arith.addf %135, %138 : vector<16x64xf32>
    %140 = arith.addf %139, %5 : vector<16x64xf32>
    %c0_74 = arith.constant 0 : index
    %c0_75 = arith.constant 0 : index
    %c0_76 = arith.constant 0 : index
    %141 = vector.load %arg10[%c0_74, %c0_75, %c0_76] : memref<1x1x64xf32, #tpu.memory_space<vmem>>, vector<1x1x64xf32>
    %142 = vector.shape_cast %141 : vector<1x1x64xf32> to vector<1x64xf32>
    %c0_77 = arith.constant 0 : index
    %c0_78 = arith.constant 0 : index
    %c0_79 = arith.constant 0 : index
    %143 = vector.load %arg11[%c0_77, %c0_78, %c0_79] : memref<1x1x64xf32, #tpu.memory_space<vmem>>, vector<1x1x64xf32>
    %144 = vector.shape_cast %143 : vector<1x1x64xf32> to vector<1x64xf32>
    %cst_80 = arith.constant dense<0.000000e+00> : vector<16xf32>
    %145 = vector.multi_reduction <add>, %140, %cst_80 [1] : vector<16x64xf32> to vector<16xf32>
    %146 = vector.shape_cast %145 : vector<16xf32> to vector<16x1xf32>
    %cst_81 = arith.constant 6.400000e+01 : f32
    %147 = vector.broadcast %cst_81 : f32 to vector<16x1xf32>
    %148 = arith.divf %146, %147 : vector<16x1xf32>
    %149 = vector.broadcast %148 : vector<16x1xf32> to vector<16x64xf32>
    %150 = arith.subf %140, %149 : vector<16x64xf32>
    %151 = arith.mulf %150, %150 : vector<16x64xf32>
    %cst_82 = arith.constant dense<0.000000e+00> : vector<16xf32>
    %152 = vector.multi_reduction <add>, %151, %cst_82 [1] : vector<16x64xf32> to vector<16xf32>
    %153 = vector.shape_cast %152 : vector<16xf32> to vector<16x1xf32>
    %cst_83 = arith.constant 6.400000e+01 : f32
    %154 = vector.broadcast %cst_83 : f32 to vector<16x1xf32>
    %155 = arith.divf %153, %154 : vector<16x1xf32>
    %156 = vector.broadcast %148 : vector<16x1xf32> to vector<16x64xf32>
    %157 = arith.subf %140, %156 : vector<16x64xf32>
    %cst_84 = arith.constant 9.99999974E-6 : f32
    %158 = vector.broadcast %cst_84 : f32 to vector<16x1xf32>
    %159 = arith.addf %155, %158 : vector<16x1xf32>
    %160 = math.rsqrt %159 : vector<16x1xf32>
    %161 = vector.broadcast %160 : vector<16x1xf32> to vector<16x64xf32>
    %162 = arith.mulf %157, %161 : vector<16x64xf32>
    %163 = vector.broadcast %142 : vector<1x64xf32> to vector<16x64xf32>
    %164 = arith.mulf %162, %163 : vector<16x64xf32>
    %165 = vector.broadcast %144 : vector<1x64xf32> to vector<16x64xf32>
    %166 = arith.addf %164, %165 : vector<16x64xf32>
    %167 = arith.truncf %166 : vector<16x64xf32> to vector<16x64xbf16>
    %c0_85 = arith.constant 0 : index
    %c0_86 = arith.constant 0 : index
    %c0_87 = arith.constant 0 : index
    %168 = vector.load %arg12[%c0_85, %c0_86, %c0_87] : memref<1x64x256xbf16, #tpu.memory_space<vmem>>, vector<1x64x256xbf16>
    %169 = vector.shape_cast %168 : vector<1x64x256xbf16> to vector<64x256xbf16>
    %cst_88 = arith.constant dense<0.000000e+00> : vector<16x256xf32>
    %170 = tpu.matmul %167, %169, %cst_88 {dimension_numbers = #tpu.dot_dimension_numbers<[1], [0], [0], [1], [0, 0, 1, 1], [], []>} : vector<16x64xbf16>, vector<64x256xbf16>, vector<16x256xf32> -> vector<16x256xf32>
    %c0_89 = arith.constant 0 : index
    %c0_90 = arith.constant 0 : index
    %c0_91 = arith.constant 0 : index
    %171 = vector.load %arg13[%c0_89, %c0_90, %c0_91] : memref<1x1x256xf32, #tpu.memory_space<vmem>>, vector<1x1x256xf32>
    %172 = vector.shape_cast %171 : vector<1x1x256xf32> to vector<1x256xf32>
    %173 = vector.broadcast %172 : vector<1x256xf32> to vector<16x256xf32>
    %174 = arith.addf %170, %173 : vector<16x256xf32>
    %cst_92 = arith.constant 1.702000e+00 : f32
    %175 = vector.broadcast %cst_92 : f32 to vector<16x256xf32>
    %176 = arith.mulf %175, %174 : vector<16x256xf32>
    %177 = arith.negf %176 : vector<16x256xf32>
    %178 = math.exp %177 : vector<16x256xf32>
    %cst_93 = arith.constant 1.000000e+00 : f32
    %179 = vector.broadcast %cst_93 : f32 to vector<16x256xf32>
    %180 = arith.addf %179, %178 : vector<16x256xf32>
    %181 = arith.divf %179, %180 : vector<16x256xf32>
    %182 = arith.mulf %174, %181 : vector<16x256xf32>
    %183 = arith.truncf %182 : vector<16x256xf32> to vector<16x256xbf16>
    %c0_94 = arith.constant 0 : index
    %c0_95 = arith.constant 0 : index
    %c0_96 = arith.constant 0 : index
    %184 = vector.load %arg14[%c0_94, %c0_95, %c0_96] : memref<1x256x64xbf16, #tpu.memory_space<vmem>>, vector<1x256x64xbf16>
    %185 = vector.shape_cast %184 : vector<1x256x64xbf16> to vector<256x64xbf16>
    %cst_97 = arith.constant dense<0.000000e+00> : vector<16x64xf32>
    %186 = tpu.matmul %183, %185, %cst_97 {dimension_numbers = #tpu.dot_dimension_numbers<[1], [0], [0], [1], [0, 0, 1, 1], [], []>} : vector<16x256xbf16>, vector<256x64xbf16>, vector<16x64xf32> -> vector<16x64xf32>
    %c0_98 = arith.constant 0 : index
    %c0_99 = arith.constant 0 : index
    %c0_100 = arith.constant 0 : index
    %187 = vector.load %arg15[%c0_98, %c0_99, %c0_100] : memref<1x1x64xf32, #tpu.memory_space<vmem>>, vector<1x1x64xf32>
    %188 = vector.shape_cast %187 : vector<1x1x64xf32> to vector<1x64xf32>
    %189 = vector.broadcast %188 : vector<1x64xf32> to vector<16x64xf32>
    %190 = arith.addf %186, %189 : vector<16x64xf32>
    %191 = arith.addf %190, %140 : vector<16x64xf32>
    %c0_101 = arith.constant 0 : index
    %c0_102 = arith.constant 0 : index
    %c0_103 = arith.constant 0 : index
    %192 = vector.load %arg18[%c0_101, %c0_102, %c0_103] : memref<2x16x64xf32, #tpu.memory_space<vmem>>, vector<1x16x64xf32>
    %193 = vector.shape_cast %192 : vector<1x16x64xf32> to vector<16x64xf32>
    %194 = vector.shape_cast %191 : vector<16x64xf32> to vector<1x16x64xf32>
    tpu.vector_store %arg18[%c0_101, %c0_102, %c0_103], %194 {strides = array<i32>} : memref<2x16x64xf32, #tpu.memory_space<vmem>>, vector<1x16x64xf32>,
    %c2_i32 = arith.constant 2 : i32
    %195 = arith.cmpi eq, %arg1, %c2_i32 : i32
    %196 = arith.extui %195 : i1 to i32
    %c0_i32_104 = arith.constant 0 : i32
    %197 = arith.cmpi ne, %196, %c0_i32_104 : i32
    scf.if %197 {
      %c0_224 = arith.constant 0 : index
      %c0_225 = arith.constant 0 : index
      %392 = vector.load %arg16[%c0_224, %c0_225] : memref<1x64xf32, #tpu.memory_space<vmem>>, vector<1x64xf32>
      %c0_226 = arith.constant 0 : index
      %c0_227 = arith.constant 0 : index
      %393 = vector.load %arg17[%c0_226, %c0_227] : memref<1x64xf32, #tpu.memory_space<vmem>>, vector<1x64xf32>
      %cst_228 = arith.constant dense<0.000000e+00> : vector<16xf32>
      %394 = vector.multi_reduction <add>, %191, %cst_228 [1] : vector<16x64xf32> to vector<16xf32>
      %395 = vector.shape_cast %394 : vector<16xf32> to vector<16x1xf32>
      %cst_229 = arith.constant 6.400000e+01 : f32
      %396 = vector.broadcast %cst_229 : f32 to vector<16x1xf32>
      %397 = arith.divf %395, %396 : vector<16x1xf32>
      %398 = vector.broadcast %397 : vector<16x1xf32> to vector<16x64xf32>
      %399 = arith.subf %191, %398 : vector<16x64xf32>
      %400 = arith.mulf %399, %399 : vector<16x64xf32>
      %cst_230 = arith.constant dense<0.000000e+00> : vector<16xf32>
      %401 = vector.multi_reduction <add>, %400, %cst_230 [1] : vector<16x64xf32> to vector<16xf32>
      %402 = vector.shape_cast %401 : vector<16xf32> to vector<16x1xf32>
      %cst_231 = arith.constant 6.400000e+01 : f32
      %403 = vector.broadcast %cst_231 : f32 to vector<16x1xf32>
      %404 = arith.divf %402, %403 : vector<16x1xf32>
      %405 = vector.broadcast %397 : vector<16x1xf32> to vector<16x64xf32>
      %406 = arith.subf %191, %405 : vector<16x64xf32>
      %cst_232 = arith.constant 9.99999974E-6 : f32
      %407 = vector.broadcast %cst_232 : f32 to vector<16x1xf32>
      %408 = arith.addf %404, %407 : vector<16x1xf32>
      %409 = math.rsqrt %408 : vector<16x1xf32>
      %410 = vector.broadcast %409 : vector<16x1xf32> to vector<16x64xf32>
      %411 = arith.mulf %406, %410 : vector<16x64xf32>
      %412 = vector.broadcast %392 : vector<1x64xf32> to vector<16x64xf32>
      %413 = arith.mulf %411, %412 : vector<16x64xf32>
      %414 = vector.broadcast %393 : vector<1x64xf32> to vector<16x64xf32>
      %415 = arith.addf %413, %414 : vector<16x64xf32>
      %c0_233 = arith.constant 0 : index
      %c0_234 = arith.constant 0 : index
      %c0_235 = arith.constant 0 : index
      %416 = vector.load %arg18[%c0_233, %c0_234, %c0_235] : memref<2x16x64xf32, #tpu.memory_space<vmem>>, vector<1x16x64xf32>
      %417 = vector.shape_cast %416 : vector<1x16x64xf32> to vector<16x64xf32>
      %418 = vector.shape_cast %415 : vector<16x64xf32> to vector<1x16x64xf32>
      tpu.vector_store %arg18[%c0_233, %c0_234, %c0_235], %418 {strides = array<i32>} : memref<2x16x64xf32, #tpu.memory_space<vmem>>, vector<1x16x64xf32>,
    } else {
    }
    %c1_105 = arith.constant 1 : index
    %c0_106 = arith.constant 0 : index
    %c0_107 = arith.constant 0 : index
    %198 = vector.load %arg18[%c1_105, %c0_106, %c0_107] : memref<2x16x64xf32, #tpu.memory_space<vmem>>, vector<1x16x64xf32>
    %199 = vector.shape_cast %198 : vector<1x16x64xf32> to vector<16x64xf32>
    %c0_108 = arith.constant 0 : index
    %c0_109 = arith.constant 0 : index
    %c0_110 = arith.constant 0 : index
    %200 = vector.load %arg4[%c0_108, %c0_109, %c0_110] : memref<1x1x64xf32, #tpu.memory_space<vmem>>, vector<1x1x64xf32>
    %201 = vector.shape_cast %200 : vector<1x1x64xf32> to vector<1x64xf32>
    %c0_111 = arith.constant 0 : index
    %c0_112 = arith.constant 0 : index
    %c0_113 = arith.constant 0 : index
    %202 = vector.load %arg5[%c0_111, %c0_112, %c0_113] : memref<1x1x64xf32, #tpu.memory_space<vmem>>, vector<1x1x64xf32>
    %203 = vector.shape_cast %202 : vector<1x1x64xf32> to vector<1x64xf32>
    %cst_114 = arith.constant dense<0.000000e+00> : vector<16xf32>
    %204 = vector.multi_reduction <add>, %199, %cst_114 [1] : vector<16x64xf32> to vector<16xf32>
    %205 = vector.shape_cast %204 : vector<16xf32> to vector<16x1xf32>
    %cst_115 = arith.constant 6.400000e+01 : f32
    %206 = vector.broadcast %cst_115 : f32 to vector<16x1xf32>
    %207 = arith.divf %205, %206 : vector<16x1xf32>
    %208 = vector.broadcast %207 : vector<16x1xf32> to vector<16x64xf32>
    %209 = arith.subf %199, %208 : vector<16x64xf32>
    %210 = arith.mulf %209, %209 : vector<16x64xf32>
    %cst_116 = arith.constant dense<0.000000e+00> : vector<16xf32>
    %211 = vector.multi_reduction <add>, %210, %cst_116 [1] : vector<16x64xf32> to vector<16xf32>
    %212 = vector.shape_cast %211 : vector<16xf32> to vector<16x1xf32>
    %cst_117 = arith.constant 6.400000e+01 : f32
    %213 = vector.broadcast %cst_117 : f32 to vector<16x1xf32>
    %214 = arith.divf %212, %213 : vector<16x1xf32>
    %215 = vector.broadcast %207 : vector<16x1xf32> to vector<16x64xf32>
    %216 = arith.subf %199, %215 : vector<16x64xf32>
    %cst_118 = arith.constant 9.99999974E-6 : f32
    %217 = vector.broadcast %cst_118 : f32 to vector<16x1xf32>
    %218 = arith.addf %214, %217 : vector<16x1xf32>
    %219 = math.rsqrt %218 : vector<16x1xf32>
    %220 = vector.broadcast %219 : vector<16x1xf32> to vector<16x64xf32>
    %221 = arith.mulf %216, %220 : vector<16x64xf32>
    %222 = vector.broadcast %201 : vector<1x64xf32> to vector<16x64xf32>
    %223 = arith.mulf %221, %222 : vector<16x64xf32>
    %224 = vector.broadcast %203 : vector<1x64xf32> to vector<16x64xf32>
    %225 = arith.addf %223, %224 : vector<16x64xf32>
    %226 = arith.truncf %225 : vector<16x64xf32> to vector<16x64xbf16>
    %c0_119 = arith.constant 0 : index
    %c0_120 = arith.constant 0 : index
    %c0_121 = arith.constant 0 : index
    %227 = vector.load %arg6[%c0_119, %c0_120, %c0_121] : memref<1x64x192xbf16, #tpu.memory_space<vmem>>, vector<1x64x192xbf16>
    %228 = vector.shape_cast %227 : vector<1x64x192xbf16> to vector<64x192xbf16>
    %cst_122 = arith.constant dense<0.000000e+00> : vector<16x192xf32>
    %229 = tpu.matmul %226, %228, %cst_122 {dimension_numbers = #tpu.dot_dimension_numbers<[1], [0], [0], [1], [0, 0, 1, 1], [], []>} : vector<16x64xbf16>, vector<64x192xbf16>, vector<16x192xf32> -> vector<16x192xf32>
    %c0_123 = arith.constant 0 : index
    %c0_124 = arith.constant 0 : index
    %c0_125 = arith.constant 0 : index
    %230 = vector.load %arg7[%c0_123, %c0_124, %c0_125] : memref<1x1x192xf32, #tpu.memory_space<vmem>>, vector<1x1x192xf32>
    %231 = vector.shape_cast %230 : vector<1x1x192xf32> to vector<1x192xf32>
    %232 = vector.broadcast %231 : vector<1x192xf32> to vector<16x192xf32>
    %233 = arith.addf %229, %232 : vector<16x192xf32>
    %234 = vector.extract_strided_slice %233 {offsets = [0, 0], sizes = [16, 16], strides = [1, 1]} : vector<16x192xf32> to vector<16x16xf32>
    %235 = arith.truncf %234 : vector<16x16xf32> to vector<16x16xbf16>
    %c0_126 = arith.constant 0 : index
    %c0_127 = arith.constant 0 : index
    %c0_128 = arith.constant 0 : index
    %236 = vector.load %arg19[%c0_126, %c0_127, %c0_128] : memref<12x16x16xbf16, #tpu.memory_space<vmem>>, vector<1x16x16xbf16>
    %237 = vector.shape_cast %236 : vector<1x16x16xbf16> to vector<16x16xbf16>
    %238 = vector.shape_cast %235 : vector<16x16xbf16> to vector<1x16x16xbf16>
    tpu.vector_store %arg19[%c0_126, %c0_127, %c0_128], %238 {strides = array<i32>} : memref<12x16x16xbf16, #tpu.memory_space<vmem>>, vector<1x16x16xbf16>,
    %239 = vector.extract_strided_slice %233 {offsets = [0, 16], sizes = [16, 16], strides = [1, 1]} : vector<16x192xf32> to vector<16x16xf32>
    %240 = arith.truncf %239 : vector<16x16xf32> to vector<16x16xbf16>
    %c1_129 = arith.constant 1 : index
    %c0_130 = arith.constant 0 : index
    %c0_131 = arith.constant 0 : index
    %241 = vector.load %arg19[%c1_129, %c0_130, %c0_131] : memref<12x16x16xbf16, #tpu.memory_space<vmem>>, vector<1x16x16xbf16>
    %242 = vector.shape_cast %241 : vector<1x16x16xbf16> to vector<16x16xbf16>
    %243 = vector.shape_cast %240 : vector<16x16xbf16> to vector<1x16x16xbf16>
    tpu.vector_store %arg19[%c1_129, %c0_130, %c0_131], %243 {strides = array<i32>} : memref<12x16x16xbf16, #tpu.memory_space<vmem>>, vector<1x16x16xbf16>,
    %244 = vector.extract_strided_slice %233 {offsets = [0, 32], sizes = [16, 16], strides = [1, 1]} : vector<16x192xf32> to vector<16x16xf32>
    %245 = arith.truncf %244 : vector<16x16xf32> to vector<16x16xbf16>
    %c2_132 = arith.constant 2 : index
    %c0_133 = arith.constant 0 : index
    %c0_134 = arith.constant 0 : index
    %246 = vector.load %arg19[%c2_132, %c0_133, %c0_134] : memref<12x16x16xbf16, #tpu.memory_space<vmem>>, vector<1x16x16xbf16>
    %247 = vector.shape_cast %246 : vector<1x16x16xbf16> to vector<16x16xbf16>
    %248 = vector.shape_cast %245 : vector<16x16xbf16> to vector<1x16x16xbf16>
    tpu.vector_store %arg19[%c2_132, %c0_133, %c0_134], %248 {strides = array<i32>} : memref<12x16x16xbf16, #tpu.memory_space<vmem>>, vector<1x16x16xbf16>,
    %249 = vector.extract_strided_slice %233 {offsets = [0, 48], sizes = [16, 16], strides = [1, 1]} : vector<16x192xf32> to vector<16x16xf32>
    %250 = arith.truncf %249 : vector<16x16xf32> to vector<16x16xbf16>
    %c3_135 = arith.constant 3 : index
    %c0_136 = arith.constant 0 : index
    %c0_137 = arith.constant 0 : index
    %251 = vector.load %arg19[%c3_135, %c0_136, %c0_137] : memref<12x16x16xbf16, #tpu.memory_space<vmem>>, vector<1x16x16xbf16>
    %252 = vector.shape_cast %251 : vector<1x16x16xbf16> to vector<16x16xbf16>
    %253 = vector.shape_cast %250 : vector<16x16xbf16> to vector<1x16x16xbf16>
    tpu.vector_store %arg19[%c3_135, %c0_136, %c0_137], %253 {strides = array<i32>} : memref<12x16x16xbf16, #tpu.memory_space<vmem>>, vector<1x16x16xbf16>,
    %254 = vector.extract_strided_slice %233 {offsets = [0, 64], sizes = [16, 16], strides = [1, 1]} : vector<16x192xf32> to vector<16x16xf32>
    %255 = arith.truncf %254 : vector<16x16xf32> to vector<16x16xbf16>
    %c4_138 = arith.constant 4 : index
    %c0_139 = arith.constant 0 : index
    %c0_140 = arith.constant 0 : index
    %256 = vector.load %arg19[%c4_138, %c0_139, %c0_140] : memref<12x16x16xbf16, #tpu.memory_space<vmem>>, vector<1x16x16xbf16>
    %257 = vector.shape_cast %256 : vector<1x16x16xbf16> to vector<16x16xbf16>
    %258 = vector.shape_cast %255 : vector<16x16xbf16> to vector<1x16x16xbf16>
    tpu.vector_store %arg19[%c4_138, %c0_139, %c0_140], %258 {strides = array<i32>} : memref<12x16x16xbf16, #tpu.memory_space<vmem>>, vector<1x16x16xbf16>,
    %259 = vector.extract_strided_slice %233 {offsets = [0, 80], sizes = [16, 16], strides = [1, 1]} : vector<16x192xf32> to vector<16x16xf32>
    %260 = arith.truncf %259 : vector<16x16xf32> to vector<16x16xbf16>
    %c5_141 = arith.constant 5 : index
    %c0_142 = arith.constant 0 : index
    %c0_143 = arith.constant 0 : index
    %261 = vector.load %arg19[%c5_141, %c0_142, %c0_143] : memref<12x16x16xbf16, #tpu.memory_space<vmem>>, vector<1x16x16xbf16>
    %262 = vector.shape_cast %261 : vector<1x16x16xbf16> to vector<16x16xbf16>
    %263 = vector.shape_cast %260 : vector<16x16xbf16> to vector<1x16x16xbf16>
    tpu.vector_store %arg19[%c5_141, %c0_142, %c0_143], %263 {strides = array<i32>} : memref<12x16x16xbf16, #tpu.memory_space<vmem>>, vector<1x16x16xbf16>,
    %264 = vector.extract_strided_slice %233 {offsets = [0, 96], sizes = [16, 16], strides = [1, 1]} : vector<16x192xf32> to vector<16x16xf32>
    %265 = arith.truncf %264 : vector<16x16xf32> to vector<16x16xbf16>
    %c6_144 = arith.constant 6 : index
    %c0_145 = arith.constant 0 : index
    %c0_146 = arith.constant 0 : index
    %266 = vector.load %arg19[%c6_144, %c0_145, %c0_146] : memref<12x16x16xbf16, #tpu.memory_space<vmem>>, vector<1x16x16xbf16>
    %267 = vector.shape_cast %266 : vector<1x16x16xbf16> to vector<16x16xbf16>
    %268 = vector.shape_cast %265 : vector<16x16xbf16> to vector<1x16x16xbf16>
    tpu.vector_store %arg19[%c6_144, %c0_145, %c0_146], %268 {strides = array<i32>} : memref<12x16x16xbf16, #tpu.memory_space<vmem>>, vector<1x16x16xbf16>,
    %269 = vector.extract_strided_slice %233 {offsets = [0, 112], sizes = [16, 16], strides = [1, 1]} : vector<16x192xf32> to vector<16x16xf32>
    %270 = arith.truncf %269 : vector<16x16xf32> to vector<16x16xbf16>
    %c7_147 = arith.constant 7 : index
    %c0_148 = arith.constant 0 : index
    %c0_149 = arith.constant 0 : index
    %271 = vector.load %arg19[%c7_147, %c0_148, %c0_149] : memref<12x16x16xbf16, #tpu.memory_space<vmem>>, vector<1x16x16xbf16>
    %272 = vector.shape_cast %271 : vector<1x16x16xbf16> to vector<16x16xbf16>
    %273 = vector.shape_cast %270 : vector<16x16xbf16> to vector<1x16x16xbf16>
    tpu.vector_store %arg19[%c7_147, %c0_148, %c0_149], %273 {strides = array<i32>} : memref<12x16x16xbf16, #tpu.memory_space<vmem>>, vector<1x16x16xbf16>,
    %274 = vector.extract_strided_slice %233 {offsets = [0, 128], sizes = [16, 16], strides = [1, 1]} : vector<16x192xf32> to vector<16x16xf32>
    %275 = arith.truncf %274 : vector<16x16xf32> to vector<16x16xbf16>
    %c8_150 = arith.constant 8 : index
    %c0_151 = arith.constant 0 : index
    %c0_152 = arith.constant 0 : index
    %276 = vector.load %arg19[%c8_150, %c0_151, %c0_152] : memref<12x16x16xbf16, #tpu.memory_space<vmem>>, vector<1x16x16xbf16>
    %277 = vector.shape_cast %276 : vector<1x16x16xbf16> to vector<16x16xbf16>
    %278 = vector.shape_cast %275 : vector<16x16xbf16> to vector<1x16x16xbf16>
    tpu.vector_store %arg19[%c8_150, %c0_151, %c0_152], %278 {strides = array<i32>} : memref<12x16x16xbf16, #tpu.memory_space<vmem>>, vector<1x16x16xbf16>,
    %279 = vector.extract_strided_slice %233 {offsets = [0, 144], sizes = [16, 16], strides = [1, 1]} : vector<16x192xf32> to vector<16x16xf32>
    %280 = arith.truncf %279 : vector<16x16xf32> to vector<16x16xbf16>
    %c9_153 = arith.constant 9 : index
    %c0_154 = arith.constant 0 : index
    %c0_155 = arith.constant 0 : index
    %281 = vector.load %arg19[%c9_153, %c0_154, %c0_155] : memref<12x16x16xbf16, #tpu.memory_space<vmem>>, vector<1x16x16xbf16>
    %282 = vector.shape_cast %281 : vector<1x16x16xbf16> to vector<16x16xbf16>
    %283 = vector.shape_cast %280 : vector<16x16xbf16> to vector<1x16x16xbf16>
    tpu.vector_store %arg19[%c9_153, %c0_154, %c0_155], %283 {strides = array<i32>} : memref<12x16x16xbf16, #tpu.memory_space<vmem>>, vector<1x16x16xbf16>,
    %284 = vector.extract_strided_slice %233 {offsets = [0, 160], sizes = [16, 16], strides = [1, 1]} : vector<16x192xf32> to vector<16x16xf32>
    %285 = arith.truncf %284 : vector<16x16xf32> to vector<16x16xbf16>
    %c10_156 = arith.constant 10 : index
    %c0_157 = arith.constant 0 : index
    %c0_158 = arith.constant 0 : index
    %286 = vector.load %arg19[%c10_156, %c0_157, %c0_158] : memref<12x16x16xbf16, #tpu.memory_space<vmem>>, vector<1x16x16xbf16>
    %287 = vector.shape_cast %286 : vector<1x16x16xbf16> to vector<16x16xbf16>
    %288 = vector.shape_cast %285 : vector<16x16xbf16> to vector<1x16x16xbf16>
    tpu.vector_store %arg19[%c10_156, %c0_157, %c0_158], %288 {strides = array<i32>} : memref<12x16x16xbf16, #tpu.memory_space<vmem>>, vector<1x16x16xbf16>,
    %289 = vector.extract_strided_slice %233 {offsets = [0, 176], sizes = [16, 16], strides = [1, 1]} : vector<16x192xf32> to vector<16x16xf32>
    %290 = arith.truncf %289 : vector<16x16xf32> to vector<16x16xbf16>
    %c11_159 = arith.constant 11 : index
    %c0_160 = arith.constant 0 : index
    %c0_161 = arith.constant 0 : index
    %291 = vector.load %arg19[%c11_159, %c0_160, %c0_161] : memref<12x16x16xbf16, #tpu.memory_space<vmem>>, vector<1x16x16xbf16>
    %292 = vector.shape_cast %291 : vector<1x16x16xbf16> to vector<16x16xbf16>
    %293 = vector.shape_cast %290 : vector<16x16xbf16> to vector<1x16x16xbf16>
    tpu.vector_store %arg19[%c11_159, %c0_160, %c0_161], %293 {strides = array<i32>} : memref<12x16x16xbf16, #tpu.memory_space<vmem>>, vector<1x16x16xbf16>,
    %c0_162 = arith.constant 0 : index
    %c0_163 = arith.constant 0 : index
    %c0_164 = arith.constant 0 : index
    %294 = vector.load %arg19[%c0_162, %c0_163, %c0_164] : memref<12x16x16xbf16, #tpu.memory_space<vmem>>, vector<4x16x16xbf16>
    %c4_165 = arith.constant 4 : index
    %c0_166 = arith.constant 0 : index
    %c0_167 = arith.constant 0 : index
    %295 = vector.load %arg19[%c4_165, %c0_166, %c0_167] : memref<12x16x16xbf16, #tpu.memory_space<vmem>>, vector<4x16x16xbf16>
    %c8_168 = arith.constant 8 : index
    %c0_169 = arith.constant 0 : index
    %c0_170 = arith.constant 0 : index
    %296 = vector.load %arg19[%c8_168, %c0_169, %c0_170] : memref<12x16x16xbf16, #tpu.memory_space<vmem>>, vector<4x16x16xbf16>
    "tpu.trace_start"() <{level = 10 : i32, message = "hqd,hkd->hqk"}> : () -> ()
    %cst_171 = arith.constant dense<0.000000e+00> : vector<4x16x16xf32>
    %297 = tpu.matmul %294, %295, %cst_171 {dimension_numbers = #tpu.dot_dimension_numbers<[2], [2], [1], [1], [0, 0, 0, 1, 1, 1], [0], [0]>} : vector<4x16x16xbf16>, vector<4x16x16xbf16>, vector<4x16x16xf32> -> vector<4x16x16xf32>
    "tpu.trace_stop"() : () -> ()
    %298 = vector.shape_cast %3 : vector<16x16xf32> to vector<1x16x16xf32>
    %299 = vector.broadcast %298 : vector<1x16x16xf32> to vector<4x16x16xf32>
    %300 = arith.addf %297, %299 : vector<4x16x16xf32>
    %cst_172 = arith.constant dense<0xFF800000> : vector<4x16xf32>
    %301 = vector.multi_reduction <maximumf>, %300, %cst_172 [2] : vector<4x16x16xf32> to vector<4x16xf32>
    %302 = vector.shape_cast %301 : vector<4x16xf32> to vector<4x16x1xf32>
    %303 = vector.broadcast %302 : vector<4x16x1xf32> to vector<4x16x16xf32>
    %304 = arith.subf %300, %303 : vector<4x16x16xf32>
    %305 = math.exp %304 : vector<4x16x16xf32>
    %cst_173 = arith.constant dense<0.000000e+00> : vector<4x16xf32>
    %306 = vector.multi_reduction <add>, %305, %cst_173 [2] : vector<4x16x16xf32> to vector<4x16xf32>
    %307 = vector.shape_cast %306 : vector<4x16xf32> to vector<4x16x1xf32>
    %308 = tpu.reciprocal %307 {approx = true} : vector<4x16x1xf32> -> vector<4x16x1xf32>
    %309 = vector.broadcast %308 : vector<4x16x1xf32> to vector<4x16x16xf32>
    %310 = arith.mulf %305, %309 : vector<4x16x16xf32>
    %311 = arith.truncf %310 : vector<4x16x16xf32> to vector<4x16x16xbf16>
    "tpu.trace_start"() <{level = 10 : i32, message = "hqk,hkd->hqd"}> : () -> ()
    %cst_174 = arith.constant dense<0.000000e+00> : vector<4x16x16xf32>
    %312 = tpu.matmul %311, %296, %cst_174 {dimension_numbers = #tpu.dot_dimension_numbers<[2], [1], [1], [2], [0, 0, 0, 1, 1, 2], [0], [0]>} : vector<4x16x16xbf16>, vector<4x16x16xbf16>, vector<4x16x16xf32> -> vector<4x16x16xf32>
    "tpu.trace_stop"() : () -> ()
    %313 = arith.truncf %312 : vector<4x16x16xf32> to vector<4x16x16xbf16>
    %314 = vector.extract_strided_slice %313 {offsets = [0, 0, 0], sizes = [1, 16, 16], strides = [1, 1, 1]} : vector<4x16x16xbf16> to vector<1x16x16xbf16>
    %315 = vector.shape_cast %314 : vector<1x16x16xbf16> to vector<16x16xbf16>
    %c0_175 = arith.constant 0 : index
    %c0_176 = arith.constant 0 : index
    %316 = vector.load %arg20[%c0_175, %c0_176] : memref<16x64xbf16, #tpu.memory_space<vmem>>, vector<16x16xbf16>
    tpu.vector_store %arg20[%c0_175, %c0_176], %315 {strides = array<i32>} : memref<16x64xbf16, #tpu.memory_space<vmem>>, vector<16x16xbf16>,
    %317 = vector.extract_strided_slice %313 {offsets = [1, 0, 0], sizes = [1, 16, 16], strides = [1, 1, 1]} : vector<4x16x16xbf16> to vector<1x16x16xbf16>
    %318 = vector.shape_cast %317 : vector<1x16x16xbf16> to vector<16x16xbf16>
    %c0_177 = arith.constant 0 : index
    %c16_178 = arith.constant 16 : index
    %319 = vector.load %arg20[%c0_177, %c16_178] : memref<16x64xbf16, #tpu.memory_space<vmem>>, vector<16x16xbf16>
    tpu.vector_store %arg20[%c0_177, %c16_178], %318 {strides = array<i32>} : memref<16x64xbf16, #tpu.memory_space<vmem>>, vector<16x16xbf16>,
    %320 = vector.extract_strided_slice %313 {offsets = [2, 0, 0], sizes = [1, 16, 16], strides = [1, 1, 1]} : vector<4x16x16xbf16> to vector<1x16x16xbf16>
    %321 = vector.shape_cast %320 : vector<1x16x16xbf16> to vector<16x16xbf16>
    %c0_179 = arith.constant 0 : index
    %c32_180 = arith.constant 32 : index
    %322 = vector.load %arg20[%c0_179, %c32_180] : memref<16x64xbf16, #tpu.memory_space<vmem>>, vector<16x16xbf16>
    tpu.vector_store %arg20[%c0_179, %c32_180], %321 {strides = array<i32>} : memref<16x64xbf16, #tpu.memory_space<vmem>>, vector<16x16xbf16>,
    %323 = vector.extract_strided_slice %313 {offsets = [3, 0, 0], sizes = [1, 16, 16], strides = [1, 1, 1]} : vector<4x16x16xbf16> to vector<1x16x16xbf16>
    %324 = vector.shape_cast %323 : vector<1x16x16xbf16> to vector<16x16xbf16>
    %c0_181 = arith.constant 0 : index
    %c48_182 = arith.constant 48 : index
    %325 = vector.load %arg20[%c0_181, %c48_182] : memref<16x64xbf16, #tpu.memory_space<vmem>>, vector<16x16xbf16>
    tpu.vector_store %arg20[%c0_181, %c48_182], %324 {strides = array<i32>} : memref<16x64xbf16, #tpu.memory_space<vmem>>, vector<16x16xbf16>,
    %c0_183 = arith.constant 0 : index
    %c0_184 = arith.constant 0 : index
    %326 = vector.load %arg20[%c0_183, %c0_184] : memref<16x64xbf16, #tpu.memory_space<vmem>>, vector<16x64xbf16>
    %c0_185 = arith.constant 0 : index
    %c0_186 = arith.constant 0 : index
    %c0_187 = arith.constant 0 : index
    %327 = vector.load %arg8[%c0_185, %c0_186, %c0_187] : memref<1x64x64xbf16, #tpu.memory_space<vmem>>, vector<1x64x64xbf16>
    %328 = vector.shape_cast %327 : vector<1x64x64xbf16> to vector<64x64xbf16>
    %cst_188 = arith.constant dense<0.000000e+00> : vector<16x64xf32>
    %329 = tpu.matmul %326, %328, %cst_188 {dimension_numbers = #tpu.dot_dimension_numbers<[1], [0], [0], [1], [0, 0, 1, 1], [], []>} : vector<16x64xbf16>, vector<64x64xbf16>, vector<16x64xf32> -> vector<16x64xf32>
    %c0_189 = arith.constant 0 : index
    %c0_190 = arith.constant 0 : index
    %c0_191 = arith.constant 0 : index
    %330 = vector.load %arg9[%c0_189, %c0_190, %c0_191] : memref<1x1x64xf32, #tpu.memory_space<vmem>>, vector<1x1x64xf32>
    %331 = vector.shape_cast %330 : vector<1x1x64xf32> to vector<1x64xf32>
    %332 = vector.broadcast %331 : vector<1x64xf32> to vector<16x64xf32>
    %333 = arith.addf %329, %332 : vector<16x64xf32>
    %334 = arith.addf %333, %199 : vector<16x64xf32>
    %c0_192 = arith.constant 0 : index
    %c0_193 = arith.constant 0 : index
    %c0_194 = arith.constant 0 : index
    %335 = vector.load %arg10[%c0_192, %c0_193, %c0_194] : memref<1x1x64xf32, #tpu.memory_space<vmem>>, vector<1x1x64xf32>
    %336 = vector.shape_cast %335 : vector<1x1x64xf32> to vector<1x64xf32>
    %c0_195 = arith.constant 0 : index
    %c0_196 = arith.constant 0 : index
    %c0_197 = arith.constant 0 : index
    %337 = vector.load %arg11[%c0_195, %c0_196, %c0_197] : memref<1x1x64xf32, #tpu.memory_space<vmem>>, vector<1x1x64xf32>
    %338 = vector.shape_cast %337 : vector<1x1x64xf32> to vector<1x64xf32>
    %cst_198 = arith.constant dense<0.000000e+00> : vector<16xf32>
    %339 = vector.multi_reduction <add>, %334, %cst_198 [1] : vector<16x64xf32> to vector<16xf32>
    %340 = vector.shape_cast %339 : vector<16xf32> to vector<16x1xf32>
    %cst_199 = arith.constant 6.400000e+01 : f32
    %341 = vector.broadcast %cst_199 : f32 to vector<16x1xf32>
    %342 = arith.divf %340, %341 : vector<16x1xf32>
    %343 = vector.broadcast %342 : vector<16x1xf32> to vector<16x64xf32>
    %344 = arith.subf %334, %343 : vector<16x64xf32>
    %345 = arith.mulf %344, %344 : vector<16x64xf32>
    %cst_200 = arith.constant dense<0.000000e+00> : vector<16xf32>
    %346 = vector.multi_reduction <add>, %345, %cst_200 [1] : vector<16x64xf32> to vector<16xf32>
    %347 = vector.shape_cast %346 : vector<16xf32> to vector<16x1xf32>
    %cst_201 = arith.constant 6.400000e+01 : f32
    %348 = vector.broadcast %cst_201 : f32 to vector<16x1xf32>
    %349 = arith.divf %347, %348 : vector<16x1xf32>
    %350 = vector.broadcast %342 : vector<16x1xf32> to vector<16x64xf32>
    %351 = arith.subf %334, %350 : vector<16x64xf32>
    %cst_202 = arith.constant 9.99999974E-6 : f32
    %352 = vector.broadcast %cst_202 : f32 to vector<16x1xf32>
    %353 = arith.addf %349, %352 : vector<16x1xf32>
    %354 = math.rsqrt %353 : vector<16x1xf32>
    %355 = vector.broadcast %354 : vector<16x1xf32> to vector<16x64xf32>
    %356 = arith.mulf %351, %355 : vector<16x64xf32>
    %357 = vector.broadcast %336 : vector<1x64xf32> to vector<16x64xf32>
    %358 = arith.mulf %356, %357 : vector<16x64xf32>
    %359 = vector.broadcast %338 : vector<1x64xf32> to vector<16x64xf32>
    %360 = arith.addf %358, %359 : vector<16x64xf32>
    %361 = arith.truncf %360 : vector<16x64xf32> to vector<16x64xbf16>
    %c0_203 = arith.constant 0 : index
    %c0_204 = arith.constant 0 : index
    %c0_205 = arith.constant 0 : index
    %362 = vector.load %arg12[%c0_203, %c0_204, %c0_205] : memref<1x64x256xbf16, #tpu.memory_space<vmem>>, vector<1x64x256xbf16>
    %363 = vector.shape_cast %362 : vector<1x64x256xbf16> to vector<64x256xbf16>
    %cst_206 = arith.constant dense<0.000000e+00> : vector<16x256xf32>
    %364 = tpu.matmul %361, %363, %cst_206 {dimension_numbers = #tpu.dot_dimension_numbers<[1], [0], [0], [1], [0, 0, 1, 1], [], []>} : vector<16x64xbf16>, vector<64x256xbf16>, vector<16x256xf32> -> vector<16x256xf32>
    %c0_207 = arith.constant 0 : index
    %c0_208 = arith.constant 0 : index
    %c0_209 = arith.constant 0 : index
    %365 = vector.load %arg13[%c0_207, %c0_208, %c0_209] : memref<1x1x256xf32, #tpu.memory_space<vmem>>, vector<1x1x256xf32>
    %366 = vector.shape_cast %365 : vector<1x1x256xf32> to vector<1x256xf32>
    %367 = vector.broadcast %366 : vector<1x256xf32> to vector<16x256xf32>
    %368 = arith.addf %364, %367 : vector<16x256xf32>
    %cst_210 = arith.constant 1.702000e+00 : f32
    %369 = vector.broadcast %cst_210 : f32 to vector<16x256xf32>
    %370 = arith.mulf %369, %368 : vector<16x256xf32>
    %371 = arith.negf %370 : vector<16x256xf32>
    %372 = math.exp %371 : vector<16x256xf32>
    %cst_211 = arith.constant 1.000000e+00 : f32
    %373 = vector.broadcast %cst_211 : f32 to vector<16x256xf32>
    %374 = arith.addf %373, %372 : vector<16x256xf32>
    %375 = arith.divf %373, %374 : vector<16x256xf32>
    %376 = arith.mulf %368, %375 : vector<16x256xf32>
    %377 = arith.truncf %376 : vector<16x256xf32> to vector<16x256xbf16>
    %c0_212 = arith.constant 0 : index
    %c0_213 = arith.constant 0 : index
    %c0_214 = arith.constant 0 : index
    %378 = vector.load %arg14[%c0_212, %c0_213, %c0_214] : memref<1x256x64xbf16, #tpu.memory_space<vmem>>, vector<1x256x64xbf16>
    %379 = vector.shape_cast %378 : vector<1x256x64xbf16> to vector<256x64xbf16>
    %cst_215 = arith.constant dense<0.000000e+00> : vector<16x64xf32>
    %380 = tpu.matmul %377, %379, %cst_215 {dimension_numbers = #tpu.dot_dimension_numbers<[1], [0], [0], [1], [0, 0, 1, 1], [], []>} : vector<16x256xbf16>, vector<256x64xbf16>, vector<16x64xf32> -> vector<16x64xf32>
    %c0_216 = arith.constant 0 : index
    %c0_217 = arith.constant 0 : index
    %c0_218 = arith.constant 0 : index
    %381 = vector.load %arg15[%c0_216, %c0_217, %c0_218] : memref<1x1x64xf32, #tpu.memory_space<vmem>>, vector<1x1x64xf32>
    %382 = vector.shape_cast %381 : vector<1x1x64xf32> to vector<1x64xf32>
    %383 = vector.broadcast %382 : vector<1x64xf32> to vector<16x64xf32>
    %384 = arith.addf %380, %383 : vector<16x64xf32>
    %385 = arith.addf %384, %334 : vector<16x64xf32>
    %c1_219 = arith.constant 1 : index
    %c0_220 = arith.constant 0 : index
    %c0_221 = arith.constant 0 : index
    %386 = vector.load %arg18[%c1_219, %c0_220, %c0_221] : memref<2x16x64xf32, #tpu.memory_space<vmem>>, vector<1x16x64xf32>
    %387 = vector.shape_cast %386 : vector<1x16x64xf32> to vector<16x64xf32>
    %388 = vector.shape_cast %385 : vector<16x64xf32> to vector<1x16x64xf32>
    tpu.vector_store %arg18[%c1_219, %c0_220, %c0_221], %388 {strides = array<i32>} : memref<2x16x64xf32, #tpu.memory_space<vmem>>, vector<1x16x64xf32>,
    %c2_i32_222 = arith.constant 2 : i32
    %389 = arith.cmpi eq, %arg1, %c2_i32_222 : i32
    %390 = arith.extui %389 : i1 to i32
    %c0_i32_223 = arith.constant 0 : i32
    %391 = arith.cmpi ne, %390, %c0_i32_223 : i32
    scf.if %391 {
      %c0_224 = arith.constant 0 : index
      %c0_225 = arith.constant 0 : index
      %392 = vector.load %arg16[%c0_224, %c0_225] : memref<1x64xf32, #tpu.memory_space<vmem>>, vector<1x64xf32>
      %c0_226 = arith.constant 0 : index
      %c0_227 = arith.constant 0 : index
      %393 = vector.load %arg17[%c0_226, %c0_227] : memref<1x64xf32, #tpu.memory_space<vmem>>, vector<1x64xf32>
      %cst_228 = arith.constant dense<0.000000e+00> : vector<16xf32>
      %394 = vector.multi_reduction <add>, %385, %cst_228 [1] : vector<16x64xf32> to vector<16xf32>
      %395 = vector.shape_cast %394 : vector<16xf32> to vector<16x1xf32>
      %cst_229 = arith.constant 6.400000e+01 : f32
      %396 = vector.broadcast %cst_229 : f32 to vector<16x1xf32>
      %397 = arith.divf %395, %396 : vector<16x1xf32>
      %398 = vector.broadcast %397 : vector<16x1xf32> to vector<16x64xf32>
      %399 = arith.subf %385, %398 : vector<16x64xf32>
      %400 = arith.mulf %399, %399 : vector<16x64xf32>
      %cst_230 = arith.constant dense<0.000000e+00> : vector<16xf32>
      %401 = vector.multi_reduction <add>, %400, %cst_230 [1] : vector<16x64xf32> to vector<16xf32>
      %402 = vector.shape_cast %401 : vector<16xf32> to vector<16x1xf32>
      %cst_231 = arith.constant 6.400000e+01 : f32
      %403 = vector.broadcast %cst_231 : f32 to vector<16x1xf32>
      %404 = arith.divf %402, %403 : vector<16x1xf32>
      %405 = vector.broadcast %397 : vector<16x1xf32> to vector<16x64xf32>
      %406 = arith.subf %385, %405 : vector<16x64xf32>
      %cst_232 = arith.constant 9.99999974E-6 : f32
      %407 = vector.broadcast %cst_232 : f32 to vector<16x1xf32>
      %408 = arith.addf %404, %407 : vector<16x1xf32>
      %409 = math.rsqrt %408 : vector<16x1xf32>
      %410 = vector.broadcast %409 : vector<16x1xf32> to vector<16x64xf32>
      %411 = arith.mulf %406, %410 : vector<16x64xf32>
      %412 = vector.broadcast %392 : vector<1x64xf32> to vector<16x64xf32>
      %413 = arith.mulf %411, %412 : vector<16x64xf32>
      %414 = vector.broadcast %393 : vector<1x64xf32> to vector<16x64xf32>
      %415 = arith.addf %413, %414 : vector<16x64xf32>
      %c1_233 = arith.constant 1 : index
      %c0_234 = arith.constant 0 : index
      %c0_235 = arith.constant 0 : index
      %416 = vector.load %arg18[%c1_233, %c0_234, %c0_235] : memref<2x16x64xf32, #tpu.memory_space<vmem>>, vector<1x16x64xf32>
      %417 = vector.shape_cast %416 : vector<1x16x64xf32> to vector<16x64xf32>
      %418 = vector.shape_cast %415 : vector<16x64xf32> to vector<1x16x64xf32>
      tpu.vector_store %arg18[%c1_233, %c0_234, %c0_235], %418 {strides = array<i32>} : memref<2x16x64xf32, #tpu.memory_space<vmem>>, vector<1x16x64xf32>,
    } else {
    }
    return
  }
  func.func @transform_0(%arg0: i32, %arg1: i32) -> (i32, i32) {
    %c0_i32 = arith.constant 0 : i32
    %c0_i32_0 = arith.constant 0 : i32
    %c0_i32_1 = arith.constant 0 : i32
    return %c0_i32, %c0_i32_0 : i32, i32
  }
  func.func @transform_1(%arg0: i32, %arg1: i32) -> (i32, i32, i32) {
    %c0_i32 = arith.constant 0 : i32
    %c0_i32_0 = arith.constant 0 : i32
    %c0_i32_1 = arith.constant 0 : i32
    return %arg0, %c0_i32, %c0_i32_0 : i32, i32, i32
  }
  func.func @transform_2(%arg0: i32, %arg1: i32) -> (i32, i32, i32) {
    %c0_i32 = arith.constant 0 : i32
    %c0_i32_0 = arith.constant 0 : i32
    %c0_i32_1 = arith.constant 0 : i32
    return %arg1, %c0_i32, %c0_i32_0 : i32, i32, i32
  }
  func.func @transform_3(%arg0: i32, %arg1: i32) -> (i32, i32, i32) {
    %c0_i32 = arith.constant 0 : i32
    %c0_i32_0 = arith.constant 0 : i32
    %c0_i32_1 = arith.constant 0 : i32
    return %arg1, %c0_i32, %c0_i32_0 : i32, i32, i32
  }
  func.func @transform_4(%arg0: i32, %arg1: i32) -> (i32, i32, i32) {
    %c0_i32 = arith.constant 0 : i32
    %c0_i32_0 = arith.constant 0 : i32
    %c0_i32_1 = arith.constant 0 : i32
    return %arg1, %c0_i32, %c0_i32_0 : i32, i32, i32
  }
  func.func @transform_5(%arg0: i32, %arg1: i32) -> (i32, i32, i32) {
    %c0_i32 = arith.constant 0 : i32
    %c0_i32_0 = arith.constant 0 : i32
    %c0_i32_1 = arith.constant 0 : i32
    return %arg1, %c0_i32, %c0_i32_0 : i32, i32, i32
  }
  func.func @transform_6(%arg0: i32, %arg1: i32) -> (i32, i32, i32) {
    %c0_i32 = arith.constant 0 : i32
    %c0_i32_0 = arith.constant 0 : i32
    %c0_i32_1 = arith.constant 0 : i32
    return %arg1, %c0_i32, %c0_i32_0 : i32, i32, i32
  }
  func.func @transform_7(%arg0: i32, %arg1: i32) -> (i32, i32, i32) {
    %c0_i32 = arith.constant 0 : i32
    %c0_i32_0 = arith.constant 0 : i32
    %c0_i32_1 = arith.constant 0 : i32
    return %arg1, %c0_i32, %c0_i32_0 : i32, i32, i32
  }
  func.func @transform_8(%arg0: i32, %arg1: i32) -> (i32, i32, i32) {
    %c0_i32 = arith.constant 0 : i32
    %c0_i32_0 = arith.constant 0 : i32
    %c0_i32_1 = arith.constant 0 : i32
    return %arg1, %c0_i32, %c0_i32_0 : i32, i32, i32
  }
  func.func @transform_9(%arg0: i32, %arg1: i32) -> (i32, i32, i32) {
    %c0_i32 = arith.constant 0 : i32
    %c0_i32_0 = arith.constant 0 : i32
    %c0_i32_1 = arith.constant 0 : i32
    return %arg1, %c0_i32, %c0_i32_0 : i32, i32, i32
  }
  func.func @transform_10(%arg0: i32, %arg1: i32) -> (i32, i32, i32) {
    %c0_i32 = arith.constant 0 : i32
    %c0_i32_0 = arith.constant 0 : i32
    %c0_i32_1 = arith.constant 0 : i32
    return %arg1, %c0_i32, %c0_i32_0 : i32, i32, i32
  }
  func.func @transform_11(%arg0: i32, %arg1: i32) -> (i32, i32, i32) {
    %c0_i32 = arith.constant 0 : i32
    %c0_i32_0 = arith.constant 0 : i32
    %c0_i32_1 = arith.constant 0 : i32
    return %arg1, %c0_i32, %c0_i32_0 : i32, i32, i32
  }
  func.func @transform_12(%arg0: i32, %arg1: i32) -> (i32, i32, i32) {
    %c0_i32 = arith.constant 0 : i32
    %c0_i32_0 = arith.constant 0 : i32
    %c0_i32_1 = arith.constant 0 : i32
    return %arg1, %c0_i32, %c0_i32_0 : i32, i32, i32
  }
  func.func @transform_13(%arg0: i32, %arg1: i32) -> (i32, i32, i32) {
    %c0_i32 = arith.constant 0 : i32
    %c0_i32_0 = arith.constant 0 : i32
    %c0_i32_1 = arith.constant 0 : i32
    return %arg1, %c0_i32, %c0_i32_0 : i32, i32, i32
  }
  func.func @transform_14(%arg0: i32, %arg1: i32) -> (i32, i32) {
    %c0_i32 = arith.constant 0 : i32
    %c0_i32_0 = arith.constant 0 : i32
    %c0_i32_1 = arith.constant 0 : i32
    return %c0_i32, %c0_i32_0 : i32, i32
  }
  func.func @transform_15(%arg0: i32, %arg1: i32) -> (i32, i32) {
    %c0_i32 = arith.constant 0 : i32
    %c0_i32_0 = arith.constant 0 : i32
    %c0_i32_1 = arith.constant 0 : i32
    return %c0_i32, %c0_i32_0 : i32, i32
  }
  func.func @transform_16(%arg0: i32, %arg1: i32) -> (i32, i32, i32) {
    %c0_i32 = arith.constant 0 : i32
    %c0_i32_0 = arith.constant 0 : i32
    %c0_i32_1 = arith.constant 0 : i32
    return %arg0, %c0_i32, %c0_i32_0 : i32, i32, i32
  }
}

</mosaic_0001>

<llo_original>
// kernel: tpu_custom_call.1
$region0: #{tpu_custom_call.1}
  #allocation0 [shape = 'u32[]', space=smem, size = 0x4, offset = 0x4, fixed_abs, tag = 'smem constant byte address 0x4 - core index']
  #allocation1 [shape = 'u32[144,128]{1,0:T(1,128)}', space=vmem, size = 0x12000, scoped, tag = 'internal scratch']
  #allocation2 [shape = 'bf16[12,16,16]{2,1,0:T(16,128)(2,1)}', space=vmem, size = 0xc000, scoped, tag = 'scratch operand']
  #allocation3 [shape = 'bf16[16,64]{1,0:T(16,128)(2,1)}', space=vmem, size = 0x1000, scoped, tag = 'scratch operand']
  %s0 = inlined_call_operand.vmem [shape: f32[16,16], index: 0, kind: input, shape index: {}]
  %s1 = inlined_call_operand.vmem [shape: f32[2,16,64], index: 1, kind: input, shape index: {}]
  %s2 = inlined_call_operand.vmem [shape: f32[3,1,64], index: 2, kind: input, shape index: {}]
  %s3 = inlined_call_operand.vmem [shape: f32[3,1,64], index: 3, kind: input, shape index: {}]
  %s4 = inlined_call_operand.vmem [shape: bf16[3,64,192], index: 4, kind: input, shape index: {}]
  %s5 = inlined_call_operand.vmem [shape: f32[3,1,192], index: 5, kind: input, shape index: {}]
  %s6 = inlined_call_operand.vmem [shape: bf16[3,64,64], index: 6, kind: input, shape index: {}]
  %s7 = inlined_call_operand.vmem [shape: f32[3,1,64], index: 7, kind: input, shape index: {}]
  %s8 = inlined_call_operand.vmem [shape: f32[3,1,64], index: 8, kind: input, shape index: {}]
  %s9 = inlined_call_operand.vmem [shape: f32[3,1,64], index: 9, kind: input, shape index: {}]
  %s10 = inlined_call_operand.vmem [shape: bf16[3,64,256], index: 10, kind: input, shape index: {}]
  %s11 = inlined_call_operand.vmem [shape: f32[3,1,256], index: 11, kind: input, shape index: {}]
  %s12 = inlined_call_operand.vmem [shape: bf16[3,256,64], index: 12, kind: input, shape index: {}]
  %s13 = inlined_call_operand.vmem [shape: f32[3,1,64], index: 13, kind: input, shape index: {}]
  %s14 = inlined_call_operand.vmem [shape: f32[1,64], index: 14, kind: input, shape index: {}]
  %s15 = inlined_call_operand.vmem [shape: f32[1,64], index: 15, kind: input, shape index: {}]
  %s16 = inlined_call_operand.hbm [shape: f32[2,16,64], index: 16, kind: output, shape index: {}]
  %s17 = sld [smem:[#allocation0]]
  $region109: #{tpu_custom_call.1} parent=0
    _
  %s19 = ssub.s32 1, %s17
  %s20 = scalar_select 0, %s19, %s17
  $region1: #{tpu_custom_call.1} parent=0
    #allocation4 [shape = 'u8[16384]{0}', space=vmem, size = 0x4000, scoped, tag = 'output window, operand 0, single buffered']
    #allocation5 [shape = 's32[2]{0}', space=sflag, size = 0x8, scoped, tag = 'scoped memory for tpu_custom_call.1']
    %21 = vsyncpa [#allocation5], 0
    loop: start=0, step=1, limit=5
    $region2: #{tpu_custom_call.1} parent=1 // loop_pre_header
      _
    $region3: #{tpu_custom_call.1} parent=1 // loop_header
      %s23 = sphi 0, %s27
      %p24 = scmp.ge.s32.totalorder %s23, 5
      %s30 = sphi 0, %s42
      %s31 = sphi 0, %s38
      %s32 = sphi 0, %s30
      %s33 = sphi 0, %s31
      %s34 = sphi 0, %s32
      %s35 = sphi 0, %s33
      %s43 = sphi 0, %s43
      %s45 = sphi 0, %s43
      %s46 = sphi 0, %s45
      %s60 = sphi 0, %s46
      %s66 = sphi 0, %s68
      %s69 = sphi 0, %s66
      %s70 = sphi 0, %s69
      %s86 = sphi 0, %s70
      %s92 = sphi 0, %s94
      %s95 = sphi 0, %s92
      %s96 = sphi 0, %s95
      %s112 = sphi 0, %s96
      %s118 = sphi 0, %s120
      %s121 = sphi 0, %s118
      %s122 = sphi 0, %s121
      %s138 = sphi 0, %s122
      %s144 = sphi 0, %s146
      %s147 = sphi 0, %s144
      %s148 = sphi 0, %s147
      %s164 = sphi 0, %s148
      %s170 = sphi 0, %s172
      %s173 = sphi 0, %s170
      %s174 = sphi 0, %s173
      %s190 = sphi 0, %s174
      %s196 = sphi 0, %s198
      %s199 = sphi 0, %s196
      %s200 = sphi 0, %s199
      %s216 = sphi 0, %s200
      %s222 = sphi 0, %s224
      %s225 = sphi 0, %s222
      %s226 = sphi 0, %s225
      %s242 = sphi 0, %s226
      %s248 = sphi 0, %s250
      %s251 = sphi 0, %s248
      %s252 = sphi 0, %s251
      %s268 = sphi 0, %s252
      %s274 = sphi 0, %s276
      %s277 = sphi 0, %s274
      %s278 = sphi 0, %s277
      %s294 = sphi 0, %s278
      %s300 = sphi 0, %s302
      %s303 = sphi 0, %s300
      %s304 = sphi 0, %s303
      %s320 = sphi 0, %s304
      %s326 = sphi 0, %s328
      %s329 = sphi 0, %s326
      %s330 = sphi 0, %s329
      %s346 = sphi 0, %s330
      %s352 = sphi 0, %s354
      %s355 = sphi 0, %s352
      %s356 = sphi 0, %s355
      %s372 = sphi 0, %s356
      %s378 = sphi 0, %s380
      %s381 = sphi 0, %s378
      %s382 = sphi 0, %s381
      %s398 = sphi 0, %s382
      %s402 = sphi 0, %s402
      %s404 = sphi 0, %s402
      %s405 = sphi 0, %s404
      %s419 = sphi 0, %s405
      %s423 = sphi 0, %s423
      %s425 = sphi 0, %s423
      %s426 = sphi 0, %s425
      %s440 = sphi 0, %s426
      %s446 = sphi 0, %s448
      %s449 = sphi 0, %s446
      %s450 = sphi 0, %s449
      %s466 = sphi 0, %s450
    $region4: #{tpu_custom_call.1} parent=1 // loop_header_branch
      %26 = sbr.rel (%p24) target = $region8
    $region5: #{tpu_custom_call.1} parent=1 // loop_body
      %s28 = ssub.s32 %s23, 1
      %s29 = ssub.s32 %s23, 2
      %s36 = sadd.s32 1, %s31
      %p37 = scmp.ge.s32.totalorder %s36, 3
      %s38 = scalar_select %p37, 0, %s36
      %s39 = sadd.s32 1, %s30
      %s40 = scalar_select %p37, %s39, %s30
      %p41 = scmp.ge.s32.totalorder %s40, 1
      %s42 = scalar_select %p41, 0, %s40
      %s44 = sadd.s32 %s43, 1
      %p47 = scmp.eq.s32.totalorder %s23, 2
      %p48 = scmp.ne.s32.totalorder %s43, %s45
      %p49 = scmp.eq.s32.totalorder %s23, 0
      %p50 = por %p48, %p49
      %p51 = scmp.ne.s32.totalorder %s43, %s45
      %p52 = scmp.eq.s32.totalorder %s28, 2
      %p53 = por %p51, %p52
      %p54 = scmp.ne.s32.totalorder %s45, %s46
      %p55 = scmp.eq.s32.totalorder %s28, 0
      %p56 = por %p54, %p55
      %p57 = scmp.ne.s32.totalorder %s45, %s46
      %p58 = scmp.eq.s32.totalorder %s29, 2
      %p59 = por %p57, %p58
      %p61 = scmp.ne.s32.totalorder %s46, %s60
      %p62 = scmp.eq.s32.totalorder %s29, 0
      %p63 = por %p61, %p62
      %s64 = ssub.s32 %s30, %s42
      %p65 = scmp.eq.s32.totalorder %s64, 0
      %s67 = sadd.s32 %s66, 1
      %s68 = scalar_select %p65, %s66, %s67
      %p71 = pneg %p65
      %p72 = scmp.eq.s32.totalorder %s23, 2
      %p73 = por %p71, %p72
      %p74 = scmp.ne.s32.totalorder %s66, %s69
      %p75 = scmp.eq.s32.totalorder %s23, 0
      %p76 = por %p74, %p75
      %p77 = scmp.ne.s32.totalorder %s66, %s69
      %p78 = scmp.eq.s32.totalorder %s28, 2
      %p79 = por %p77, %p78
      %p80 = scmp.ne.s32.totalorder %s69, %s70
      %p81 = scmp.eq.s32.totalorder %s28, 0
      %p82 = por %p80, %p81
      %p83 = scmp.ne.s32.totalorder %s69, %s70
      %p84 = scmp.eq.s32.totalorder %s29, 2
      %p85 = por %p83, %p84
      %p87 = scmp.ne.s32.totalorder %s70, %s86
      %p88 = scmp.eq.s32.totalorder %s29, 0
      %p89 = por %p87, %p88
      %s90 = ssub.s32 %s31, %s38
      %p91 = scmp.eq.s32.totalorder %s90, 0
      %s93 = sadd.s32 %s92, 1
      %s94 = scalar_select %p91, %s92, %s93
      %p97 = pneg %p91
      %p98 = scmp.eq.s32.totalorder %s23, 2
      %p99 = por %p97, %p98
      %p100 = scmp.ne.s32.totalorder %s92, %s95
      %p101 = scmp.eq.s32.totalorder %s23, 0
      %p102 = por %p100, %p101
      %p103 = scmp.ne.s32.totalorder %s92, %s95
      %p104 = scmp.eq.s32.totalorder %s28, 2
      %p105 = por %p103, %p104
      %p106 = scmp.ne.s32.totalorder %s95, %s96
      %p107 = scmp.eq.s32.totalorder %s28, 0
      %p108 = por %p106, %p107
      %p109 = scmp.ne.s32.totalorder %s95, %s96
      %p110 = scmp.eq.s32.totalorder %s29, 2
      %p111 = por %p109, %p110
      %p113 = scmp.ne.s32.totalorder %s96, %s112
      %p114 = scmp.eq.s32.totalorder %s29, 0
      %p115 = por %p113, %p114
      %s116 = ssub.s32 %s31, %s38
      %p117 = scmp.eq.s32.totalorder %s116, 0
      %s119 = sadd.s32 %s118, 1
      %s120 = scalar_select %p117, %s118, %s119
      %p123 = pneg %p117
      %p124 = scmp.eq.s32.totalorder %s23, 2
      %p125 = por %p123, %p124
      %p126 = scmp.ne.s32.totalorder %s118, %s121
      %p127 = scmp.eq.s32.totalorder %s23, 0
      %p128 = por %p126, %p127
      %p129 = scmp.ne.s32.totalorder %s118, %s121
      %p130 = scmp.eq.s32.totalorder %s28, 2
      %p131 = por %p129, %p130
      %p132 = scmp.ne.s32.totalorder %s121, %s122
      %p133 = scmp.eq.s32.totalorder %s28, 0
      %p134 = por %p132, %p133
      %p135 = scmp.ne.s32.totalorder %s121, %s122
      %p136 = scmp.eq.s32.totalorder %s29, 2
      %p137 = por %p135, %p136
      %p139 = scmp.ne.s32.totalorder %s122, %s138
      %p140 = scmp.eq.s32.totalorder %s29, 0
      %p141 = por %p139, %p140
      %s142 = ssub.s32 %s31, %s38
      %p143 = scmp.eq.s32.totalorder %s142, 0
      %s145 = sadd.s32 %s144, 1
      %s146 = scalar_select %p143, %s144, %s145
      %p149 = pneg %p143
      %p150 = scmp.eq.s32.totalorder %s23, 2
      %p151 = por %p149, %p150
      %p152 = scmp.ne.s32.totalorder %s144, %s147
      %p153 = scmp.eq.s32.totalorder %s23, 0
      %p154 = por %p152, %p153
      %p155 = scmp.ne.s32.totalorder %s144, %s147
      %p156 = scmp.eq.s32.totalorder %s28, 2
      %p157 = por %p155, %p156
      %p158 = scmp.ne.s32.totalorder %s147, %s148
      %p159 = scmp.eq.s32.totalorder %s28, 0
      %p160 = por %p158, %p159
      %p161 = scmp.ne.s32.totalorder %s147, %s148
      %p162 = scmp.eq.s32.totalorder %s29, 2
      %p163 = por %p161, %p162
      %p165 = scmp.ne.s32.totalorder %s148, %s164
      %p166 = scmp.eq.s32.totalorder %s29, 0
      %p167 = por %p165, %p166
      %s168 = ssub.s32 %s31, %s38
      %p169 = scmp.eq.s32.totalorder %s168, 0
      %s171 = sadd.s32 %s170, 1
      %s172 = scalar_select %p169, %s170, %s171
      %p175 = pneg %p169
      %p176 = scmp.eq.s32.totalorder %s23, 2
      %p177 = por %p175, %p176
      %p178 = scmp.ne.s32.totalorder %s170, %s173
      %p179 = scmp.eq.s32.totalorder %s23, 0
      %p180 = por %p178, %p179
      %p181 = scmp.ne.s32.totalorder %s170, %s173
      %p182 = scmp.eq.s32.totalorder %s28, 2
      %p183 = por %p181, %p182
      %p184 = scmp.ne.s32.totalorder %s173, %s174
      %p185 = scmp.eq.s32.totalorder %s28, 0
      %p186 = por %p184, %p185
      %p187 = scmp.ne.s32.totalorder %s173, %s174
      %p188 = scmp.eq.s32.totalorder %s29, 2
      %p189 = por %p187, %p188
      %p191 = scmp.ne.s32.totalorder %s174, %s190
      %p192 = scmp.eq.s32.totalorder %s29, 0
      %p193 = por %p191, %p192
      %s194 = ssub.s32 %s31, %s38
      %p195 = scmp.eq.s32.totalorder %s194, 0
      %s197 = sadd.s32 %s196, 1
      %s198 = scalar_select %p195, %s196, %s197
      %p201 = pneg %p195
      %p202 = scmp.eq.s32.totalorder %s23, 2
      %p203 = por %p201, %p202
      %p204 = scmp.ne.s32.totalorder %s196, %s199
      %p205 = scmp.eq.s32.totalorder %s23, 0
      %p206 = por %p204, %p205
      %p207 = scmp.ne.s32.totalorder %s196, %s199
      %p208 = scmp.eq.s32.totalorder %s28, 2
      %p209 = por %p207, %p208
      %p210 = scmp.ne.s32.totalorder %s199, %s200
      %p211 = scmp.eq.s32.totalorder %s28, 0
      %p212 = por %p210, %p211
      %p213 = scmp.ne.s32.totalorder %s199, %s200
      %p214 = scmp.eq.s32.totalorder %s29, 2
      %p215 = por %p213, %p214
      %p217 = scmp.ne.s32.totalorder %s200, %s216
      %p218 = scmp.eq.s32.totalorder %s29, 0
      %p219 = por %p217, %p218
      %s220 = ssub.s32 %s31, %s38
      %p221 = scmp.eq.s32.totalorder %s220, 0
      %s223 = sadd.s32 %s222, 1
      %s224 = scalar_select %p221, %s222, %s223
      %p227 = pneg %p221
      %p228 = scmp.eq.s32.totalorder %s23, 2
      %p229 = por %p227, %p228
      %p230 = scmp.ne.s32.totalorder %s222, %s225
      %p231 = scmp.eq.s32.totalorder %s23, 0
      %p232 = por %p230, %p231
      %p233 = scmp.ne.s32.totalorder %s222, %s225
      %p234 = scmp.eq.s32.totalorder %s28, 2
      %p235 = por %p233, %p234
      %p236 = scmp.ne.s32.totalorder %s225, %s226
      %p237 = scmp.eq.s32.totalorder %s28, 0
      %p238 = por %p236, %p237
      %p239 = scmp.ne.s32.totalorder %s225, %s226
      %p240 = scmp.eq.s32.totalorder %s29, 2
      %p241 = por %p239, %p240
      %p243 = scmp.ne.s32.totalorder %s226, %s242
      %p244 = scmp.eq.s32.totalorder %s29, 0
      %p245 = por %p243, %p244
      %s246 = ssub.s32 %s31, %s38
      %p247 = scmp.eq.s32.totalorder %s246, 0
      %s249 = sadd.s32 %s248, 1
      %s250 = scalar_select %p247, %s248, %s249
      %p253 = pneg %p247
      %p254 = scmp.eq.s32.totalorder %s23, 2
      %p255 = por %p253, %p254
      %p256 = scmp.ne.s32.totalorder %s248, %s251
      %p257 = scmp.eq.s32.totalorder %s23, 0
      %p258 = por %p256, %p257
      %p259 = scmp.ne.s32.totalorder %s248, %s251
      %p260 = scmp.eq.s32.totalorder %s28, 2
      %p261 = por %p259, %p260
      %p262 = scmp.ne.s32.totalorder %s251, %s252
      %p263 = scmp.eq.s32.totalorder %s28, 0
      %p264 = por %p262, %p263
      %p265 = scmp.ne.s32.totalorder %s251, %s252
      %p266 = scmp.eq.s32.totalorder %s29, 2
      %p267 = por %p265, %p266
      %p269 = scmp.ne.s32.totalorder %s252, %s268
      %p270 = scmp.eq.s32.totalorder %s29, 0
      %p271 = por %p269, %p270
      %s272 = ssub.s32 %s31, %s38
      %p273 = scmp.eq.s32.totalorder %s272, 0
      %s275 = sadd.s32 %s274, 1
      %s276 = scalar_select %p273, %s274, %s275
      %p279 = pneg %p273
      %p280 = scmp.eq.s32.totalorder %s23, 2
      %p281 = por %p279, %p280
      %p282 = scmp.ne.s32.totalorder %s274, %s277
      %p283 = scmp.eq.s32.totalorder %s23, 0
      %p284 = por %p282, %p283
      %p285 = scmp.ne.s32.totalorder %s274, %s277
      %p286 = scmp.eq.s32.totalorder %s28, 2
      %p287 = por %p285, %p286
      %p288 = scmp.ne.s32.totalorder %s277, %s278
      %p289 = scmp.eq.s32.totalorder %s28, 0
      %p290 = por %p288, %p289
      %p291 = scmp.ne.s32.totalorder %s277, %s278
      %p292 = scmp.eq.s32.totalorder %s29, 2
      %p293 = por %p291, %p292
      %p295 = scmp.ne.s32.totalorder %s278, %s294
      %p296 = scmp.eq.s32.totalorder %s29, 0
      %p297 = por %p295, %p296
      %s298 = ssub.s32 %s31, %s38
      %p299 = scmp.eq.s32.totalorder %s298, 0
      %s301 = sadd.s32 %s300, 1
      %s302 = scalar_select %p299, %s300, %s301
      %p305 = pneg %p299
      %p306 = scmp.eq.s32.totalorder %s23, 2
      %p307 = por %p305, %p306
      %p308 = scmp.ne.s32.totalorder %s300, %s303
      %p309 = scmp.eq.s32.totalorder %s23, 0
      %p310 = por %p308, %p309
      %p311 = scmp.ne.s32.totalorder %s300, %s303
      %p312 = scmp.eq.s32.totalorder %s28, 2
      %p313 = por %p311, %p312
      %p314 = scmp.ne.s32.totalorder %s303, %s304
      %p315 = scmp.eq.s32.totalorder %s28, 0
      %p316 = por %p314, %p315
      %p317 = scmp.ne.s32.totalorder %s303, %s304
      %p318 = scmp.eq.s32.totalorder %s29, 2
      %p319 = por %p317, %p318
      %p321 = scmp.ne.s32.totalorder %s304, %s320
      %p322 = scmp.eq.s32.totalorder %s29, 0
      %p323 = por %p321, %p322
      %s324 = ssub.s32 %s31, %s38
      %p325 = scmp.eq.s32.totalorder %s324, 0
      %s327 = sadd.s32 %s326, 1
      %s328 = scalar_select %p325, %s326, %s327
      %p331 = pneg %p325
      %p332 = scmp.eq.s32.totalorder %s23, 2
      %p333 = por %p331, %p332
      %p334 = scmp.ne.s32.totalorder %s326, %s329
      %p335 = scmp.eq.s32.totalorder %s23, 0
      %p336 = por %p334, %p335
      %p337 = scmp.ne.s32.totalorder %s326, %s329
      %p338 = scmp.eq.s32.totalorder %s28, 2
      %p339 = por %p337, %p338
      %p340 = scmp.ne.s32.totalorder %s329, %s330
      %p341 = scmp.eq.s32.totalorder %s28, 0
      %p342 = por %p340, %p341
      %p343 = scmp.ne.s32.totalorder %s329, %s330
      %p344 = scmp.eq.s32.totalorder %s29, 2
      %p345 = por %p343, %p344
      %p347 = scmp.ne.s32.totalorder %s330, %s346
      %p348 = scmp.eq.s32.totalorder %s29, 0
      %p349 = por %p347, %p348
      %s350 = ssub.s32 %s31, %s38
      %p351 = scmp.eq.s32.totalorder %s350, 0
      %s353 = sadd.s32 %s352, 1
      %s354 = scalar_select %p351, %s352, %s353
      %p357 = pneg %p351
      %p358 = scmp.eq.s32.totalorder %s23, 2
      %p359 = por %p357, %p358
      %p360 = scmp.ne.s32.totalorder %s352, %s355
      %p361 = scmp.eq.s32.totalorder %s23, 0
      %p362 = por %p360, %p361
      %p363 = scmp.ne.s32.totalorder %s352, %s355
      %p364 = scmp.eq.s32.totalorder %s28, 2
      %p365 = por %p363, %p364
      %p366 = scmp.ne.s32.totalorder %s355, %s356
      %p367 = scmp.eq.s32.totalorder %s28, 0
      %p368 = por %p366, %p367
      %p369 = scmp.ne.s32.totalorder %s355, %s356
      %p370 = scmp.eq.s32.totalorder %s29, 2
      %p371 = por %p369, %p370
      %p373 = scmp.ne.s32.totalorder %s356, %s372
      %p374 = scmp.eq.s32.totalorder %s29, 0
      %p375 = por %p373, %p374
      %s376 = ssub.s32 %s31, %s38
      %p377 = scmp.eq.s32.totalorder %s376, 0
      %s379 = sadd.s32 %s378, 1
      %s380 = scalar_select %p377, %s378, %s379
      %p383 = pneg %p377
      %p384 = scmp.eq.s32.totalorder %s23, 2
      %p385 = por %p383, %p384
      %p386 = scmp.ne.s32.totalorder %s378, %s381
      %p387 = scmp.eq.s32.totalorder %s23, 0
      %p388 = por %p386, %p387
      %p389 = scmp.ne.s32.totalorder %s378, %s381
      %p390 = scmp.eq.s32.totalorder %s28, 2
      %p391 = por %p389, %p390
      %p392 = scmp.ne.s32.totalorder %s381, %s382
      %p393 = scmp.eq.s32.totalorder %s28, 0
      %p394 = por %p392, %p393
      %p395 = scmp.ne.s32.totalorder %s381, %s382
      %p396 = scmp.eq.s32.totalorder %s29, 2
      %p397 = por %p395, %p396
      %p399 = scmp.ne.s32.totalorder %s382, %s398
      %p400 = scmp.eq.s32.totalorder %s29, 0
      %p401 = por %p399, %p400
      %s403 = sadd.s32 %s402, 1
      %p406 = scmp.eq.s32.totalorder %s23, 2
      %p407 = scmp.ne.s32.totalorder %s402, %s404
      %p408 = scmp.eq.s32.totalorder %s23, 0
      %p409 = por %p407, %p408
      %p410 = scmp.ne.s32.totalorder %s402, %s404
      %p411 = scmp.eq.s32.totalorder %s28, 2
      %p412 = por %p410, %p411
      %p413 = scmp.ne.s32.totalorder %s404, %s405
      %p414 = scmp.eq.s32.totalorder %s28, 0
      %p415 = por %p413, %p414
      %p416 = scmp.ne.s32.totalorder %s404, %s405
      %p417 = scmp.eq.s32.totalorder %s29, 2
      %p418 = por %p416, %p417
      %p420 = scmp.ne.s32.totalorder %s405, %s419
      %p421 = scmp.eq.s32.totalorder %s29, 0
      %p422 = por %p420, %p421
      %s424 = sadd.s32 %s423, 1
      %p427 = scmp.eq.s32.totalorder %s23, 2
      %p428 = scmp.ne.s32.totalorder %s423, %s425
      %p429 = scmp.eq.s32.totalorder %s23, 0
      %p430 = por %p428, %p429
      %p431 = scmp.ne.s32.totalorder %s423, %s425
      %p432 = scmp.eq.s32.totalorder %s28, 2
      %p433 = por %p431, %p432
      %p434 = scmp.ne.s32.totalorder %s425, %s426
      %p435 = scmp.eq.s32.totalorder %s28, 0
      %p436 = por %p434, %p435
      %p437 = scmp.ne.s32.totalorder %s425, %s426
      %p438 = scmp.eq.s32.totalorder %s29, 2
      %p439 = por %p437, %p438
      %p441 = scmp.ne.s32.totalorder %s426, %s440
      %p442 = scmp.eq.s32.totalorder %s29, 0
      %p443 = por %p441, %p442
      %s444 = ssub.s32 %s30, %s42
      %p445 = scmp.eq.s32.totalorder %s444, 0
      %s447 = sadd.s32 %s446, 1
      %s448 = scalar_select %p445, %s446, %s447
      %p451 = pneg %p445
      %p452 = scmp.eq.s32.totalorder %s23, 2
      %p453 = por %p451, %p452
      %p454 = scmp.ne.s32.totalorder %s446, %s449
      %p455 = scmp.eq.s32.totalorder %s23, 0
      %p456 = por %p454, %p455
      %p457 = scmp.ne.s32.totalorder %s446, %s449
      %p458 = scmp.eq.s32.totalorder %s28, 2
      %p459 = por %p457, %p458
      %p460 = scmp.ne.s32.totalorder %s449, %s450
      %p461 = scmp.eq.s32.totalorder %s28, 0
      %p462 = por %p460, %p461
      %p463 = scmp.ne.s32.totalorder %s449, %s450
      %p464 = scmp.eq.s32.totalorder %s29, 2
      %p465 = por %p463, %p464
      %p467 = scmp.ne.s32.totalorder %s450, %s466
      %p468 = scmp.eq.s32.totalorder %s29, 0
      %p469 = por %p467, %p468
      %p470 = scmp.le.s32.totalorder 1, %s23
      %p471 = scmp.lt.s32.totalorder %s23, 4
      %p472 = pnand %p470, %p471
      %p473 = pneg %p472
      // Predicated region
      $region9: #{tpu_custom_call.1} parent=5 // pred_check
        _
      $region10: #{tpu_custom_call.1} parent=5 // pred_check_branch
        %475 = sbr.rel (%p472) target = $region12
      $region11: #{tpu_custom_call.1} parent=5 // pred_region
        %s476 = ssub.s32 %s23, 1
        // Predicated region
        $region13: #{tpu_custom_call.1} parent=11 // pred_check
          %p477 = pneg %p56
        $region14: #{tpu_custom_call.1} parent=11 // pred_check_branch
          %479 = sbr.rel (%p477) target = $region16
        $region15: #{tpu_custom_call.1} parent=11 // pred_region
          _
        $region16: #{tpu_custom_call.1} parent=11 // pred_fallthru
          _
        // Predicated region
        $region17: #{tpu_custom_call.1} parent=11 // pred_check
          %p480 = pneg %p82
        $region18: #{tpu_custom_call.1} parent=11 // pred_check_branch
          %482 = sbr.rel (%p480) target = $region20
        $region19: #{tpu_custom_call.1} parent=11 // pred_region
          %s483 = smul.u32 2, %s32
          %p484 = scmp.lt.s32.totalorder %s483, 1
          %s485 = scalar_select %p484, %s483, 1
          %s486 = smul.addr %s485, 2
          %s487 = smul.addr %s486, 8
          %s488 = scalar_lea.vmem %s1, %s487
          %s489 = smul.u32 2, %s32
        $region20: #{tpu_custom_call.1} parent=11 // pred_fallthru
          _
        // Predicated region
        $region21: #{tpu_custom_call.1} parent=11 // pred_check
          %p490 = pneg %p415
        $region22: #{tpu_custom_call.1} parent=11 // pred_check_branch
          %492 = sbr.rel (%p490) target = $region24
        $region23: #{tpu_custom_call.1} parent=11 // pred_region
          _
        $region24: #{tpu_custom_call.1} parent=11 // pred_fallthru
          _
        // Predicated region
        $region25: #{tpu_custom_call.1} parent=11 // pred_check
          %p493 = pneg %p436
        $region26: #{tpu_custom_call.1} parent=11 // pred_check_branch
          %495 = sbr.rel (%p493) target = $region28
        $region27: #{tpu_custom_call.1} parent=11 // pred_region
          _
        $region28: #{tpu_custom_call.1} parent=11 // pred_fallthru
          _
      $region12: #{tpu_custom_call.1} parent=5 // pred_fallthru
        _
      %p496 = scmp.lt.s32.totalorder %s23, 3
      // Predicated region
      $region29: #{tpu_custom_call.1} parent=5 // pred_check
        %p497 = pneg %p496
      $region30: #{tpu_custom_call.1} parent=5 // pred_check_branch
        %499 = sbr.rel (%p497) target = $region32
      $region31: #{tpu_custom_call.1} parent=5 // pred_region
        // Predicated region
        $region33: #{tpu_custom_call.1} parent=31 // pred_check
          %p500 = pneg %p102
        $region34: #{tpu_custom_call.1} parent=31 // pred_check_branch
          %502 = sbr.rel (%p500) target = $region36
        $region35: #{tpu_custom_call.1} parent=31 // pred_region
          %p503 = scmp.lt.s32.totalorder %s31, 2
          %s504 = scalar_select %p503, %s31, 2
          %s505 = scalar_lea.vmem %s2, %s504
        $region36: #{tpu_custom_call.1} parent=31 // pred_fallthru
          _
        // Predicated region
        $region37: #{tpu_custom_call.1} parent=31 // pred_check
          %p506 = pneg %p128
        $region38: #{tpu_custom_call.1} parent=31 // pred_check_branch
          %508 = sbr.rel (%p506) target = $region40
        $region39: #{tpu_custom_call.1} parent=31 // pred_region
          %p509 = scmp.lt.s32.totalorder %s31, 2
          %s510 = scalar_select %p509, %s31, 2
          %s511 = scalar_lea.vmem %s3, %s510
        $region40: #{tpu_custom_call.1} parent=31 // pred_fallthru
          _
        // Predicated region
        $region41: #{tpu_custom_call.1} parent=31 // pred_check
          %p512 = pneg %p154
        $region42: #{tpu_custom_call.1} parent=31 // pred_check_branch
          %514 = sbr.rel (%p512) target = $region44
        $region43: #{tpu_custom_call.1} parent=31 // pred_region
          %p515 = scmp.lt.s32.totalorder %s31, 2
          %s516 = scalar_select %p515, %s31, 2
          %s517 = smul.addr %s516, 16
          %s518 = smul.addr %s517, 4
          %s519 = scalar_lea.vmem %s4, %s518
        $region44: #{tpu_custom_call.1} parent=31 // pred_fallthru
          _
        // Predicated region
        $region45: #{tpu_custom_call.1} parent=31 // pred_check
          %p520 = pneg %p180
        $region46: #{tpu_custom_call.1} parent=31 // pred_check_branch
          %522 = sbr.rel (%p520) target = $region48
        $region47: #{tpu_custom_call.1} parent=31 // pred_region
          %p523 = scmp.lt.s32.totalorder %s31, 2
          %s524 = scalar_select %p523, %s31, 2
          %s525 = smul.addr %s524, 2
          %s526 = scalar_lea.vmem %s5, %s525
        $region48: #{tpu_custom_call.1} parent=31 // pred_fallthru
          _
        // Predicated region
        $region49: #{tpu_custom_call.1} parent=31 // pred_check
          %p527 = pneg %p206
        $region50: #{tpu_custom_call.1} parent=31 // pred_check_branch
          %529 = sbr.rel (%p527) target = $region52
        $region51: #{tpu_custom_call.1} parent=31 // pred_region
          %p530 = scmp.lt.s32.totalorder %s31, 2
          %s531 = scalar_select %p530, %s31, 2
          %s532 = smul.addr %s531, 8
          %s533 = smul.addr %s532, 4
          %s534 = scalar_lea.vmem %s6, %s533
        $region52: #{tpu_custom_call.1} parent=31 // pred_fallthru
          _
        // Predicated region
        $region53: #{tpu_custom_call.1} parent=31 // pred_check
          %p535 = pneg %p232
        $region54: #{tpu_custom_call.1} parent=31 // pred_check_branch
          %537 = sbr.rel (%p535) target = $region56
        $region55: #{tpu_custom_call.1} parent=31 // pred_region
          %p538 = scmp.lt.s32.totalorder %s31, 2
          %s539 = scalar_select %p538, %s31, 2
          %s540 = scalar_lea.vmem %s7, %s539
        $region56: #{tpu_custom_call.1} parent=31 // pred_fallthru
          _
        // Predicated region
        $region57: #{tpu_custom_call.1} parent=31 // pred_check
          %p541 = pneg %p258
        $region58: #{tpu_custom_call.1} parent=31 // pred_check_branch
          %543 = sbr.rel (%p541) target = $region60
        $region59: #{tpu_custom_call.1} parent=31 // pred_region
          %p544 = scmp.lt.s32.totalorder %s31, 2
          %s545 = scalar_select %p544, %s31, 2
          %s546 = scalar_lea.vmem %s8, %s545
        $region60: #{tpu_custom_call.1} parent=31 // pred_fallthru
          _
        // Predicated region
        $region61: #{tpu_custom_call.1} parent=31 // pred_check
          %p547 = pneg %p284
        $region62: #{tpu_custom_call.1} parent=31 // pred_check_branch
          %549 = sbr.rel (%p547) target = $region64
        $region63: #{tpu_custom_call.1} parent=31 // pred_region
          %p550 = scmp.lt.s32.totalorder %s31, 2
          %s551 = scalar_select %p550, %s31, 2
          %s552 = scalar_lea.vmem %s9, %s551
        $region64: #{tpu_custom_call.1} parent=31 // pred_fallthru
          _
        // Predicated region
        $region65: #{tpu_custom_call.1} parent=31 // pred_check
          %p553 = pneg %p310
        $region66: #{tpu_custom_call.1} parent=31 // pred_check_branch
          %555 = sbr.rel (%p553) target = $region68
        $region67: #{tpu_custom_call.1} parent=31 // pred_region
          %p556 = scmp.lt.s32.totalorder %s31, 2
          %s557 = scalar_select %p556, %s31, 2
          %s558 = smul.addr %s557, 16
          %s559 = smul.addr %s558, 4
          %s560 = scalar_lea.vmem %s10, %s559
        $region68: #{tpu_custom_call.1} parent=31 // pred_fallthru
          _
        // Predicated region
        $region69: #{tpu_custom_call.1} parent=31 // pred_check
          %p561 = pneg %p336
        $region70: #{tpu_custom_call.1} parent=31 // pred_check_branch
          %563 = sbr.rel (%p561) target = $region72
        $region71: #{tpu_custom_call.1} parent=31 // pred_region
          %p564 = scmp.lt.s32.totalorder %s31, 2
          %s565 = scalar_select %p564, %s31, 2
          %s566 = smul.addr %s565, 2
          %s567 = scalar_lea.vmem %s11, %s566
        $region72: #{tpu_custom_call.1} parent=31 // pred_fallthru
          _
        // Predicated region
        $region73: #{tpu_custom_call.1} parent=31 // pred_check
          %p568 = pneg %p362
        $region74: #{tpu_custom_call.1} parent=31 // pred_check_branch
          %570 = sbr.rel (%p568) target = $region76
        $region75: #{tpu_custom_call.1} parent=31 // pred_region
          %p571 = scmp.lt.s32.totalorder %s31, 2
          %s572 = scalar_select %p571, %s31, 2
          %s573 = smul.addr %s572, 32
          %s574 = smul.addr %s573, 4
          %s575 = scalar_lea.vmem %s12, %s574
        $region76: #{tpu_custom_call.1} parent=31 // pred_fallthru
          _
        // Predicated region
        $region77: #{tpu_custom_call.1} parent=31 // pred_check
          %p576 = pneg %p388
        $region78: #{tpu_custom_call.1} parent=31 // pred_check_branch
          %578 = sbr.rel (%p576) target = $region80
        $region79: #{tpu_custom_call.1} parent=31 // pred_region
          %p579 = scmp.lt.s32.totalorder %s31, 2
          %s580 = scalar_select %p579, %s31, 2
          %s581 = scalar_lea.vmem %s13, %s580
        $region80: #{tpu_custom_call.1} parent=31 // pred_fallthru
          _
      $region32: #{tpu_custom_call.1} parent=5 // pred_fallthru
        _
      %p582 = scmp.le.s32.totalorder 1, %s23
      %p583 = scmp.lt.s32.totalorder %s23, 4
      %p584 = pnand %p582, %p583
      %p585 = pneg %p584
      // Predicated region
      $region81: #{tpu_custom_call.1} parent=5 // pred_check
        _
      $region82: #{tpu_custom_call.1} parent=5 // pred_check_branch
        %587 = sbr.rel (%p584) target = $region84
      $region83: #{tpu_custom_call.1} parent=5 // pred_region
        %s588 = ssub.s32 %s23, 1
        %p589 = pneg %p56
        %p590 = pneg %p53
        %s591 = smul.u32 2, %s32
        %p592 = scmp.lt.s32.totalorder %s591, 1
        %s593 = scalar_select %p592, %s591, 1
        %s594 = smul.addr %s593, 2
        %s595 = smul.addr %s594, 8
        %s596 = scalar_lea.vmem %s1, %s595
        %p597 = pneg %p82
        %p598 = pneg %p79
        %p599 = scmp.lt.s32.totalorder %s33, 2
        %s600 = scalar_select %p599, %s33, 2
        %s601 = scalar_lea.vmem %s2, %s600
        %p602 = pneg %p108
        %p603 = pneg %p105
        %p604 = scmp.lt.s32.totalorder %s33, 2
        %s605 = scalar_select %p604, %s33, 2
        %s606 = scalar_lea.vmem %s3, %s605
        %p607 = pneg %p134
        %p608 = pneg %p131
        %p609 = scmp.lt.s32.totalorder %s33, 2
        %s610 = scalar_select %p609, %s33, 2
        %s611 = smul.addr %s610, 16
        %s612 = smul.addr %s611, 4
        %s613 = scalar_lea.vmem %s4, %s612
        %p614 = pneg %p160
        %p615 = pneg %p157
        %p616 = scmp.lt.s32.totalorder %s33, 2
        %s617 = scalar_select %p616, %s33, 2
        %s618 = smul.addr %s617, 2
        %s619 = scalar_lea.vmem %s5, %s618
        %p620 = pneg %p186
        %p621 = pneg %p183
        %p622 = scmp.lt.s32.totalorder %s33, 2
        %s623 = scalar_select %p622, %s33, 2
        %s624 = smul.addr %s623, 8
        %s625 = smul.addr %s624, 4
        %s626 = scalar_lea.vmem %s6, %s625
        %p627 = pneg %p212
        %p628 = pneg %p209
        %p629 = scmp.lt.s32.totalorder %s33, 2
        %s630 = scalar_select %p629, %s33, 2
        %s631 = scalar_lea.vmem %s7, %s630
        %p632 = pneg %p238
        %p633 = pneg %p235
        %p634 = scmp.lt.s32.totalorder %s33, 2
        %s635 = scalar_select %p634, %s33, 2
        %s636 = scalar_lea.vmem %s8, %s635
        %p637 = pneg %p264
        %p638 = pneg %p261
        %p639 = scmp.lt.s32.totalorder %s33, 2
        %s640 = scalar_select %p639, %s33, 2
        %s641 = scalar_lea.vmem %s9, %s640
        %p642 = pneg %p290
        %p643 = pneg %p287
        %p644 = scmp.lt.s32.totalorder %s33, 2
        %s645 = scalar_select %p644, %s33, 2
        %s646 = smul.addr %s645, 16
        %s647 = smul.addr %s646, 4
        %s648 = scalar_lea.vmem %s10, %s647
        %p649 = pneg %p316
        %p650 = pneg %p313
        %p651 = scmp.lt.s32.totalorder %s33, 2
        %s652 = scalar_select %p651, %s33, 2
        %s653 = smul.addr %s652, 2
        %s654 = scalar_lea.vmem %s11, %s653
        %p655 = pneg %p342
        %p656 = pneg %p339
        %p657 = scmp.lt.s32.totalorder %s33, 2
        %s658 = scalar_select %p657, %s33, 2
        %s659 = smul.addr %s658, 32
        %s660 = smul.addr %s659, 4
        %s661 = scalar_lea.vmem %s12, %s660
        %p662 = pneg %p368
        %p663 = pneg %p365
        %p664 = scmp.lt.s32.totalorder %s33, 2
        %s665 = scalar_select %p664, %s33, 2
        %s666 = scalar_lea.vmem %s13, %s665
        %p667 = pneg %p394
        %p668 = pneg %p391
        %p669 = pneg %p415
        %p670 = pneg %p412
        %p671 = pneg %p436
        %p672 = pneg %p433
        %p673 = pneg %p462
        %p674 = pneg %p459
        %s675 = smul.u32 2, %s32
        %p676 = scmp.lt.s32.totalorder %s675, 1
        %s677 = scalar_select %p676, %s675, 1
        %s678 = smul.addr %s677, 2
        %s679 = smul.addr %s678, 8
        %s680 = scalar_lea.vmem %s1, %s679
        %s681 = smul.u32 2, %s32
        %p682 = scmp.lt.s32.totalorder %s33, 2
        %s683 = scalar_select %p682, %s33, 2
        %s684 = scalar_lea.vmem %s2, %s683
        %p685 = scmp.lt.s32.totalorder %s33, 2
        %s686 = scalar_select %p685, %s33, 2
        %s687 = scalar_lea.vmem %s3, %s686
        %p688 = scmp.lt.s32.totalorder %s33, 2
        %s689 = scalar_select %p688, %s33, 2
        %s690 = smul.addr %s689, 16
        %s691 = smul.addr %s690, 4
        %s692 = scalar_lea.vmem %s4, %s691
        %p693 = scmp.lt.s32.totalorder %s33, 2
        %s694 = scalar_select %p693, %s33, 2
        %s695 = smul.addr %s694, 2
        %s696 = scalar_lea.vmem %s5, %s695
        %p697 = scmp.lt.s32.totalorder %s33, 2
        %s698 = scalar_select %p697, %s33, 2
        %s699 = smul.addr %s698, 8
        %s700 = smul.addr %s699, 4
        %s701 = scalar_lea.vmem %s6, %s700
        %p702 = scmp.lt.s32.totalorder %s33, 2
        %s703 = scalar_select %p702, %s33, 2
        %s704 = scalar_lea.vmem %s7, %s703
        %p705 = scmp.lt.s32.totalorder %s33, 2
        %s706 = scalar_select %p705, %s33, 2
        %s707 = scalar_lea.vmem %s8, %s706
        %p708 = scmp.lt.s32.totalorder %s33, 2
        %s709 = scalar_select %p708, %s33, 2
        %s710 = scalar_lea.vmem %s9, %s709
        %p711 = scmp.lt.s32.totalorder %s33, 2
        %s712 = scalar_select %p711, %s33, 2
        %s713 = smul.addr %s712, 16
        %s714 = smul.addr %s713, 4
        %s715 = scalar_lea.vmem %s10, %s714
        %p716 = scmp.lt.s32.totalorder %s33, 2
        %s717 = scalar_select %p716, %s33, 2
        %s718 = smul.addr %s717, 2
        %s719 = scalar_lea.vmem %s11, %s718
        %p720 = scmp.lt.s32.totalorder %s33, 2
        %s721 = scalar_select %p720, %s33, 2
        %s722 = smul.addr %s721, 32
        %s723 = smul.addr %s722, 4
        %s724 = scalar_lea.vmem %s12, %s723
        %p725 = scmp.lt.s32.totalorder %s33, 2
        %s726 = scalar_select %p725, %s33, 2
        %s727 = scalar_lea.vmem %s13, %s726
        %s728 = smul.u32 2, %s32
        %p730 = scmp.eq.s32.totalorder %s33, 0
        // Predicated region
        $region85: #{tpu_custom_call.1} parent=83 // pred_check
          %p731 = pneg %p730
        $region86: #{tpu_custom_call.1} parent=83 // pred_check_branch
          %733 = sbr.rel (%p731) target = $region88
        $region87: #{tpu_custom_call.1} parent=83 // pred_region
          %v734 = vld [vmem:[%s680] sm:$0xff]
          %v735 = vld [vmem:[%s680 + $0x8] sm:$0xff]
          %v736 = vld [vmem:[%s680 + $0x10] sm:$0xff]
          %v737 = vld [vmem:[%s680 + $0x18] sm:$0xff]
          %vm738 = vcmask 523264
          %739 = vst.msk [vmem:[#allocation4] sm:$0xff] %vm738, %v734
          %740 = vst.msk [vmem:[#allocation4 + $0x8] sm:$0xff] %vm738, %v735
          %741 = vst.msk [vmem:[#allocation4 + $0x10] sm:$0xff] %vm738, %v736
          %742 = vst.msk [vmem:[#allocation4 + $0x18] sm:$0xff] %vm738, %v737
        $region88: #{tpu_custom_call.1} parent=83 // pred_fallthru
          _
        %v743 = vld [vmem:[%s0] sm:$0xff]
        %v744 = vld [vmem:[%s0 + $0x8] sm:$0xff]
        %v745 = vld [vmem:[#allocation4] sm:$0xff]
        %v746 = vld [vmem:[#allocation4 + $0x8] sm:$0xff]
        %v747 = vld [vmem:[%s684] sm:$0x1]
        %v748 = vld [vmem:[%s687] sm:$0x1]
        %vm749 = vcmask 523264
        %v750 = vsel %vm749, %v745, 0.0
        %751 = vadd.xlane.f32.xlu0 %v750
        %v752 = vpop.xlane.xlu0 %751
        %v753 = vsel %vm749, %v746, 0.0
        %754 = vadd.xlane.f32.xlu0 %v753
        %v755 = vpop.xlane.xlu0 %754
        %v756 = vrcp.pop 64.0
        %v757 = vmul.f32 %v752, %v756
        %v758 = vmul.f32 %v755, %v756
        %v759 = vsub.f32 %v745, %v757
        %v760 = vsub.f32 %v746, %v758
        %v761 = vmul.f32 %v759, %v759
        %v762 = vmul.f32 %v760, %v760
        %v763 = vsel %vm749, %v761, 0.0
        %764 = vadd.xlane.f32.xlu0 %v763
        %v765 = vpop.xlane.xlu0 %764
        %v766 = vsel %vm749, %v762, 0.0
        %767 = vadd.xlane.f32.xlu0 %v766
        %v768 = vpop.xlane.xlu0 %767
        %v769 = vmul.f32 %v765, %v756
        %v770 = vmul.f32 %v768, %v756
        %v771 = vadd.f32 %v769, 1e-05
        %v772 = vadd.f32 %v770, 1e-05
        %v773 = vrsqrt.pop %v771
        %v774 = vrsqrt.pop %v772
        %v775 = vmul.f32 %v759, %v773
        %v776 = vmul.f32 %v760, %v774
        %v778 = vlaneseq
        %v779 = vshrl.u32 %v778, 7
        %v780 = vsub.s32 0, %v779
        %v781 = vrot.slane %v747, %v780
        %v783 = vmul.f32 %v775, %v781
        %v784 = vmul.f32 %v776, %v781
        %v786 = vlaneseq
        %v787 = vshrl.u32 %v786, 7
        %v788 = vsub.s32 0, %v787
        %v789 = vrot.slane %v748, %v788
        %v791 = vadd.f32 %v783, %v789
        %v792 = vadd.f32 %v784, %v789
        %v793 = vpack.c.bf16 %v792, %v791
        %v794 = vld [vmem:[%s692] sm:$0xff]
        %v795 = vld [vmem:[%s692 + $0x8] sm:$0xff]
        %v796 = vld [vmem:[%s692 + $0x10] sm:$0xff]
        %v797 = vld [vmem:[%s692 + $0x18] sm:$0xff]
        %v798 = vld [vmem:[%s692 + $0x20] sm:$0xff]
        %v799 = vld [vmem:[%s692 + $0x28] sm:$0xff]
        %v800 = vld [vmem:[%s692 + $0x30] sm:$0xff]
        %v801 = vld [vmem:[%s692 + $0x38] sm:$0xff]
        %v802 = vld [vmem:[%s696] sm:$0x3]
        %v804 = vlaneseq
        %v805 = vshrl.u32 %v804, 7
        %v806 = vsub.s32 0, %v805
        %v807 = vrot.slane %v802, %v806
        %v808 = vlaneseq
        %v809 = vshrl.u32 %v808, 7
        %v810 = vsub.s32 1, %v809
        %v811 = vrot.slane %v802, %v810
        %v822 = vunpack.c.l.b16 %v794
        %v823 = vunpack.c.h.b16 %v794
        %v824 = vunpack.c.l.b16 %v795
        %v825 = vunpack.c.h.b16 %v795
        %v826 = vunpack.c.l.b16 %v796
        %v827 = vunpack.c.h.b16 %v796
        %v828 = vunpack.c.l.b16 %v797
        %v829 = vunpack.c.h.b16 %v797
        %v830 = vunpack.c.l.b16 %v798
        %v831 = vunpack.c.h.b16 %v798
        %v832 = vunpack.c.l.b16 %v799
        %v833 = vunpack.c.h.b16 %v799
        %v834 = vunpack.c.l.b16 %v800
        %v835 = vunpack.c.h.b16 %v800
        %v836 = vunpack.c.l.b16 %v801
        %v837 = vunpack.c.h.b16 %v801
        %v838 = vpack.c.b16 %v824, %v822
        %v839 = vpack.c.b16 %v825, %v823
        %v840 = vpack.c.b16 %v828, %v826
        %v841 = vpack.c.b16 %v829, %v827
        %v842 = vpack.c.b16 %v832, %v830
        %v843 = vpack.c.b16 %v833, %v831
        %v844 = vpack.c.b16 %v836, %v834
        %v845 = vpack.c.b16 %v837, %v835
        %v855 = vsel %vm749, %v793, 0
        %857 = vmatprep.subr.bf16.mxu0 %v839
        %858 = vmatpush1.bf16.msra.mxu0 %v838
        %859 = vmatprep.subr.bf16.mxu0 %v841
        %860 = vmatpush1.bf16.msra.mxu0 %v840
        %861 = vmatprep.subr.bf16.mxu0 %v843
        %862 = vmatpush1.bf16.msra.mxu0 %v842
        %863 = vmatprep.subr.bf16.mxu0 %v845
        %864 = vmatpush1.bf16.msra.mxu0 %v844
        %865 = vmatprep.subr.bf16.mxu0 0
        %866 = vmatpush1.bf16.msra.mxu0 0
        %867 = vmatprep.subr.bf16.mxu0 0
        %868 = vmatpush1.bf16.msra.mxu0 0
        %869 = vmatprep.subr.bf16.mxu0 0
        %870 = vmatpush1.bf16.msra.mxu0 0
        %871 = vmatprep.subr.bf16.mxu0 0
        %872 = vmatpush1.bf16.msra.mxu0 0
        %873 = vmatprep.subr.bf16.mxu0 0
        %874 = vmatpush1.bf16.msra.mxu0 0
        %875 = vmatprep.subr.bf16.mxu0 0
        %876 = vmatpush1.bf16.msra.mxu0 0
        %877 = vmatprep.subr.bf16.mxu0 0
        %878 = vmatpush1.bf16.msra.mxu0 0
        %879 = vmatprep.subr.bf16.mxu0 0
        %880 = vmatpush1.bf16.msra.mxu0 0
        %881 = vmatprep.subr.bf16.mxu0 0
        %882 = vmatpush1.bf16.msra.mxu0 0
        %883 = vmatprep.subr.bf16.mxu0 0
        %884 = vmatpush1.bf16.msra.mxu0 0
        %885 = vmatprep.subr.bf16.mxu0 0
        %886 = vmatpush1.bf16.msra.mxu0 0
        %887 = vmatprep.subr.bf16.mxu0 0
        %888 = vmatpush1.bf16.msra.mxu0 0
        %889 = vmatprep.mubr.bf16.mxu0 0
        %890 = vmatmul.mubr.bf16.gmra.mrb[0].mxu0 %v855
        %v891 = vpop.f32.mrb[0].mxu0
        %v892 = vadd.f32 %v807, %v891
        %v893 = vpop.f32.mrb[0].mxu0
        %v894 = vadd.f32 %v811, %v893
        %v895 = vpop.f32.mrb[0].mxu0
        %v896 = vadd.f32 %v807, %v895
        %v897 = vpop.f32.mrb[0].mxu0
        %v898 = vadd.f32 %v811, %v897
        %899 = vdwg.mxu0
        %v900 = vpack.c.bf16 %v896, %v892
        %vm901 = vcmask 130048
        %902 = vst.msk [vmem:[#allocation2] sm:$0xff] %vm901, %v900
        %904 = vrot.lane.b32.xlu0 %v900, 112
        %v905 = vpop.permute.xlu0 %904
        %s907 = scalar_lea.vmem [#allocation2], 8
        %908 = vst.msk [vmem:[%s907] sm:$0xff] %vm901, %v905
        %909 = vrot.lane.b32.xlu0 %v900, 96
        %v910 = vpop.permute.xlu0 %909
        %s912 = scalar_lea.vmem [#allocation2], 16
        %913 = vst.msk [vmem:[%s912] sm:$0xff] %vm901, %v910
        %914 = vrot.lane.b32.xlu0 %v900, 80
        %v915 = vpop.permute.xlu0 %914
        %s917 = scalar_lea.vmem [#allocation2], 24
        %918 = vst.msk [vmem:[%s917] sm:$0xff] %vm901, %v915
        %919 = vrot.lane.b32.xlu0 %v900, 64
        %v920 = vpop.permute.xlu0 %919
        %s922 = scalar_lea.vmem [#allocation2], 32
        %923 = vst.msk [vmem:[%s922] sm:$0xff] %vm901, %v920
        %924 = vrot.lane.b32.xlu0 %v900, 48
        %v925 = vpop.permute.xlu0 %924
        %s927 = scalar_lea.vmem [#allocation2], 40
        %928 = vst.msk [vmem:[%s927] sm:$0xff] %vm901, %v925
        %929 = vrot.lane.b32.xlu0 %v900, 32
        %v930 = vpop.permute.xlu0 %929
        %s932 = scalar_lea.vmem [#allocation2], 48
        %933 = vst.msk [vmem:[%s932] sm:$0xff] %vm901, %v930
        %934 = vrot.lane.b32.xlu0 %v900, 16
        %v935 = vpop.permute.xlu0 %934
        %s937 = scalar_lea.vmem [#allocation2], 56
        %938 = vst.msk [vmem:[%s937] sm:$0xff] %vm901, %v935
        %v939 = vpack.c.bf16 %v898, %v894
        %s940 = scalar_lea.vmem [#allocation2], 64
        %941 = vst.msk [vmem:[%s940] sm:$0xff] %vm901, %v939
        %943 = vrot.lane.b32.xlu0 %v939, 112
        %v944 = vpop.permute.xlu0 %943
        %s946 = scalar_lea.vmem [#allocation2], 72
        %947 = vst.msk [vmem:[%s946] sm:$0xff] %vm901, %v944
        %948 = vrot.lane.b32.xlu0 %v939, 96
        %v949 = vpop.permute.xlu0 %948
        %s951 = scalar_lea.vmem [#allocation2], 80
        %952 = vst.msk [vmem:[%s951] sm:$0xff] %vm901, %v949
        %953 = vrot.lane.b32.xlu0 %v939, 80
        %v954 = vpop.permute.xlu0 %953
        %s956 = scalar_lea.vmem [#allocation2], 88
        %957 = vst.msk [vmem:[%s956] sm:$0xff] %vm901, %v954
        %v958 = vld [vmem:[#allocation2] sm:$0xff]
        %v959 = vld [vmem:[#allocation2 + $0x8] sm:$0xff]
        %v960 = vld [vmem:[#allocation2 + $0x10] sm:$0xff]
        %v961 = vld [vmem:[#allocation2 + $0x18] sm:$0xff]
        %v962 = vld [vmem:[%s922] sm:$0xff]
        %v963 = vld [vmem:[%s922 + $0x8] sm:$0xff]
        %v964 = vld [vmem:[%s922 + $0x10] sm:$0xff]
        %v965 = vld [vmem:[%s922 + $0x18] sm:$0xff]
        %v966 = vld [vmem:[%s940] sm:$0xff]
        %v967 = vld [vmem:[%s940 + $0x8] sm:$0xff]
        %v968 = vld [vmem:[%s940 + $0x10] sm:$0xff]
        %v969 = vld [vmem:[%s940 + $0x18] sm:$0xff]
        %v971 = vsel %vm901, %v958, 0
        %v974 = vsel %vm901, %v962, 0
        %976 = vmatprep.subr.bf16.mxu0 0
        %977 = vmatpush1.bf16.xpose.msra.mxu0 %v974
        %978 = vmatprep.subr.bf16.mxu0 0
        %979 = vmatpush1.bf16.xpose.msra.mxu0 0
        %980 = vmatprep.subr.bf16.mxu0 0
        %981 = vmatpush1.bf16.xpose.msra.mxu0 0
        %982 = vmatprep.subr.bf16.mxu0 0
        %983 = vmatpush1.bf16.xpose.msra.mxu0 0
        %984 = vmatprep.subr.bf16.mxu0 0
        %985 = vmatpush1.bf16.xpose.msra.mxu0 0
        %986 = vmatprep.subr.bf16.mxu0 0
        %987 = vmatpush1.bf16.xpose.msra.mxu0 0
        %988 = vmatprep.subr.bf16.mxu0 0
        %989 = vmatpush1.bf16.xpose.msra.mxu0 0
        %990 = vmatprep.subr.bf16.mxu0 0
        %991 = vmatpush1.bf16.xpose.msra.mxu0 0
        %992 = vmatprep.subr.bf16.mxu0 0
        %993 = vmatpush1.bf16.xpose.msra.mxu0 0
        %994 = vmatprep.subr.bf16.mxu0 0
        %995 = vmatpush1.bf16.xpose.msra.mxu0 0
        %996 = vmatprep.subr.bf16.mxu0 0
        %997 = vmatpush1.bf16.xpose.msra.mxu0 0
        %998 = vmatprep.subr.bf16.mxu0 0
        %999 = vmatpush1.bf16.xpose.msra.mxu0 0
        %1000 = vmatprep.subr.bf16.mxu0 0
        %1001 = vmatpush1.bf16.xpose.msra.mxu0 0
        %1002 = vmatprep.subr.bf16.mxu0 0
        %1003 = vmatpush1.bf16.xpose.msra.mxu0 0
        %1004 = vmatprep.subr.bf16.mxu0 0
        %1005 = vmatpush1.bf16.xpose.msra.mxu0 0
        %1006 = vmatprep.subr.bf16.mxu0 0
        %1007 = vmatpush1.bf16.xpose.msra.mxu0 0
        %1008 = vmatprep.mubr.bf16.mxu0 0
        %1009 = vmatmul.mubr.bf16.gmra.mrb[0].mxu0 %v971
        %v1010 = vpop.f32.mrb[0].mxu0
        %v1011 = vadd.f32 %v743, %v1010
        %v1012 = vpop.f32.mrb[0].mxu0
        %v1013 = vpop.f32.mrb[0].mxu0
        %v1014 = vadd.f32 %v744, %v1013
        %v1015 = vpop.f32.mrb[0].mxu0
        %1016 = vdwg.mxu0
        %v1018 = vsel %vm901, %v959, 0
        %v1021 = vsel %vm901, %v963, 0
        %1023 = vmatprep.subr.bf16.mxu0 0
        %1024 = vmatpush1.bf16.xpose.msra.mxu0 %v1021
        %1025 = vmatprep.subr.bf16.mxu0 0
        %1026 = vmatpush1.bf16.xpose.msra.mxu0 0
        %1027 = vmatprep.subr.bf16.mxu0 0
        %1028 = vmatpush1.bf16.xpose.msra.mxu0 0
        %1029 = vmatprep.subr.bf16.mxu0 0
        %1030 = vmatpush1.bf16.xpose.msra.mxu0 0
        %1031 = vmatprep.subr.bf16.mxu0 0
        %1032 = vmatpush1.bf16.xpose.msra.mxu0 0
        %1033 = vmatprep.subr.bf16.mxu0 0
        %1034 = vmatpush1.bf16.xpose.msra.mxu0 0
        %1035 = vmatprep.subr.bf16.mxu0 0
        %1036 = vmatpush1.bf16.xpose.msra.mxu0 0
        %1037 = vmatprep.subr.bf16.mxu0 0
        %1038 = vmatpush1.bf16.xpose.msra.mxu0 0
        %1039 = vmatprep.subr.bf16.mxu0 0
        %1040 = vmatpush1.bf16.xpose.msra.mxu0 0
        %1041 = vmatprep.subr.bf16.mxu0 0
        %1042 = vmatpush1.bf16.xpose.msra.mxu0 0
        %1043 = vmatprep.subr.bf16.mxu0 0
        %1044 = vmatpush1.bf16.xpose.msra.mxu0 0
        %1045 = vmatprep.subr.bf16.mxu0 0
        %1046 = vmatpush1.bf16.xpose.msra.mxu0 0
        %1047 = vmatprep.subr.bf16.mxu0 0
        %1048 = vmatpush1.bf16.xpose.msra.mxu0 0
        %1049 = vmatprep.subr.bf16.mxu0 0
        %1050 = vmatpush1.bf16.xpose.msra.mxu0 0
        %1051 = vmatprep.subr.bf16.mxu0 0
        %1052 = vmatpush1.bf16.xpose.msra.mxu0 0
        %1053 = vmatprep.subr.bf16.mxu0 0
        %1054 = vmatpush1.bf16.xpose.msra.mxu0 0
        %1055 = vmatprep.mubr.bf16.mxu0 0
        %1056 = vmatmul.mubr.bf16.gmra.mrb[0].mxu0 %v1018
        %v1057 = vpop.f32.mrb[0].mxu0
        %v1058 = vadd.f32 %v743, %v1057
        %v1059 = vpop.f32.mrb[0].mxu0
        %v1060 = vpop.f32.mrb[0].mxu0
        %v1061 = vadd.f32 %v744, %v1060
        %v1062 = vpop.f32.mrb[0].mxu0
        %1063 = vdwg.mxu0
        %v1065 = vsel %vm901, %v960, 0
        %v1068 = vsel %vm901, %v964, 0
        %1070 = vmatprep.subr.bf16.mxu0 0
        %1071 = vmatpush1.bf16.xpose.msra.mxu0 %v1068
        %1072 = vmatprep.subr.bf16.mxu0 0
        %1073 = vmatpush1.bf16.xpose.msra.mxu0 0
        %1074 = vmatprep.subr.bf16.mxu0 0
        %1075 = vmatpush1.bf16.xpose.msra.mxu0 0
        %1076 = vmatprep.subr.bf16.mxu0 0
        %1077 = vmatpush1.bf16.xpose.msra.mxu0 0
        %1078 = vmatprep.subr.bf16.mxu0 0
        %1079 = vmatpush1.bf16.xpose.msra.mxu0 0
        %1080 = vmatprep.subr.bf16.mxu0 0
        %1081 = vmatpush1.bf16.xpose.msra.mxu0 0
        %1082 = vmatprep.subr.bf16.mxu0 0
        %1083 = vmatpush1.bf16.xpose.msra.mxu0 0
        %1084 = vmatprep.subr.bf16.mxu0 0
        %1085 = vmatpush1.bf16.xpose.msra.mxu0 0
        %1086 = vmatprep.subr.bf16.mxu0 0
        %1087 = vmatpush1.bf16.xpose.msra.mxu0 0
        %1088 = vmatprep.subr.bf16.mxu0 0
        %1089 = vmatpush1.bf16.xpose.msra.mxu0 0
        %1090 = vmatprep.subr.bf16.mxu0 0
        %1091 = vmatpush1.bf16.xpose.msra.mxu0 0
        %1092 = vmatprep.subr.bf16.mxu0 0
        %1093 = vmatpush1.bf16.xpose.msra.mxu0 0
        %1094 = vmatprep.subr.bf16.mxu0 0
        %1095 = vmatpush1.bf16.xpose.msra.mxu0 0
        %1096 = vmatprep.subr.bf16.mxu0 0
        %1097 = vmatpush1.bf16.xpose.msra.mxu0 0
        %1098 = vmatprep.subr.bf16.mxu0 0
        %1099 = vmatpush1.bf16.xpose.msra.mxu0 0
        %1100 = vmatprep.subr.bf16.mxu0 0
        %1101 = vmatpush1.bf16.xpose.msra.mxu0 0
        %1102 = vmatprep.mubr.bf16.mxu0 0
        %1103 = vmatmul.mubr.bf16.gmra.mrb[0].mxu0 %v1065
        %v1104 = vpop.f32.mrb[0].mxu0
        %v1105 = vadd.f32 %v743, %v1104
        %v1106 = vpop.f32.mrb[0].mxu0
        %v1107 = vpop.f32.mrb[0].mxu0
        %v1108 = vadd.f32 %v744, %v1107
        %v1109 = vpop.f32.mrb[0].mxu0
        %1110 = vdwg.mxu0
        %v1112 = vsel %vm901, %v961, 0
        %v1115 = vsel %vm901, %v965, 0
        %1117 = vmatprep.subr.bf16.mxu0 0
        %1118 = vmatpush1.bf16.xpose.msra.mxu0 %v1115
        %1119 = vmatprep.subr.bf16.mxu0 0
        %1120 = vmatpush1.bf16.xpose.msra.mxu0 0
        %1121 = vmatprep.subr.bf16.mxu0 0
        %1122 = vmatpush1.bf16.xpose.msra.mxu0 0
        %1123 = vmatprep.subr.bf16.mxu0 0
        %1124 = vmatpush1.bf16.xpose.msra.mxu0 0
        %1125 = vmatprep.subr.bf16.mxu0 0
        %1126 = vmatpush1.bf16.xpose.msra.mxu0 0
        %1127 = vmatprep.subr.bf16.mxu0 0
        %1128 = vmatpush1.bf16.xpose.msra.mxu0 0
        %1129 = vmatprep.subr.bf16.mxu0 0
        %1130 = vmatpush1.bf16.xpose.msra.mxu0 0
        %1131 = vmatprep.subr.bf16.mxu0 0
        %1132 = vmatpush1.bf16.xpose.msra.mxu0 0
        %1133 = vmatprep.subr.bf16.mxu0 0
        %1134 = vmatpush1.bf16.xpose.msra.mxu0 0
        %1135 = vmatprep.subr.bf16.mxu0 0
        %1136 = vmatpush1.bf16.xpose.msra.mxu0 0
        %1137 = vmatprep.subr.bf16.mxu0 0
        %1138 = vmatpush1.bf16.xpose.msra.mxu0 0
        %1139 = vmatprep.subr.bf16.mxu0 0
        %1140 = vmatpush1.bf16.xpose.msra.mxu0 0
        %1141 = vmatprep.subr.bf16.mxu0 0
        %1142 = vmatpush1.bf16.xpose.msra.mxu0 0
        %1143 = vmatprep.subr.bf16.mxu0 0
        %1144 = vmatpush1.bf16.xpose.msra.mxu0 0
        %1145 = vmatprep.subr.bf16.mxu0 0
        %1146 = vmatpush1.bf16.xpose.msra.mxu0 0
        %1147 = vmatprep.subr.bf16.mxu0 0
        %1148 = vmatpush1.bf16.xpose.msra.mxu0 0
        %1149 = vmatprep.mubr.bf16.mxu0 0
        %1150 = vmatmul.mubr.bf16.gmra.mrb[0].mxu0 %v1112
        %v1151 = vpop.f32.mrb[0].mxu0
        %v1152 = vadd.f32 %v743, %v1151
        %v1153 = vpop.f32.mrb[0].mxu0
        %v1154 = vpop.f32.mrb[0].mxu0
        %v1155 = vadd.f32 %v744, %v1154
        %v1156 = vpop.f32.mrb[0].mxu0
        %1157 = vdwg.mxu0
        %v1158 = vsel %vm901, %v1011, -inf
        %1159 = vmax.xlane.f32.xlu0 %v1158
        %v1160 = vpop.xlane.xlu0 %1159
        %v1161 = vsel %vm901, %v1014, -inf
        %1162 = vmax.xlane.f32.xlu0 %v1161
        %v1163 = vpop.xlane.xlu0 %1162
        %v1164 = vsel %vm901, %v1058, -inf
        %1165 = vmax.xlane.f32.xlu0 %v1164
        %v1166 = vpop.xlane.xlu0 %1165
        %v1167 = vsel %vm901, %v1061, -inf
        %1168 = vmax.xlane.f32.xlu0 %v1167
        %v1169 = vpop.xlane.xlu0 %1168
        %v1170 = vsel %vm901, %v1105, -inf
        %1171 = vmax.xlane.f32.xlu0 %v1170
        %v1172 = vpop.xlane.xlu0 %1171
        %v1173 = vsel %vm901, %v1108, -inf
        %1174 = vmax.xlane.f32.xlu0 %v1173
        %v1175 = vpop.xlane.xlu0 %1174
        %v1176 = vsel %vm901, %v1152, -inf
        %1177 = vmax.xlane.f32.xlu0 %v1176
        %v1178 = vpop.xlane.xlu0 %1177
        %v1179 = vsel %vm901, %v1155, -inf
        %1180 = vmax.xlane.f32.xlu0 %v1179
        %v1181 = vpop.xlane.xlu0 %1180
        %v1182 = vsub.f32 %v1011, %v1160
        %v1183 = vsub.f32 %v1014, %v1163
        %v1184 = vsub.f32 %v1058, %v1166
        %v1185 = vsub.f32 %v1061, %v1169
        %v1186 = vsub.f32 %v1105, %v1172
        %v1187 = vsub.f32 %v1108, %v1175
        %v1188 = vsub.f32 %v1152, %v1178
        %v1189 = vsub.f32 %v1155, %v1181
        %v1190 = vmul.f32 %v1182, 1.442695
        %v1191 = vpow.pop %v1190
        %v1192 = vmul.f32 %v1183, 1.442695
        %v1193 = vpow.pop %v1192
        %v1194 = vmul.f32 %v1184, 1.442695
        %v1195 = vpow.pop %v1194
        %v1196 = vmul.f32 %v1185, 1.442695
        %v1197 = vpow.pop %v1196
        %v1198 = vmul.f32 %v1186, 1.442695
        %v1199 = vpow.pop %v1198
        %v1200 = vmul.f32 %v1187, 1.442695
        %v1201 = vpow.pop %v1200
        %v1202 = vmul.f32 %v1188, 1.442695
        %v1203 = vpow.pop %v1202
        %v1204 = vmul.f32 %v1189, 1.442695
        %v1205 = vpow.pop %v1204
        %v1206 = vsel %vm901, %v1191, 0.0
        %1207 = vadd.xlane.f32.xlu0 %v1206
        %v1208 = vpop.xlane.xlu0 %1207
        %v1209 = vsel %vm901, %v1193, 0.0
        %1210 = vadd.xlane.f32.xlu0 %v1209
        %v1211 = vpop.xlane.xlu0 %1210
        %v1212 = vsel %vm901, %v1195, 0.0
        %1213 = vadd.xlane.f32.xlu0 %v1212
        %v1214 = vpop.xlane.xlu0 %1213
        %v1215 = vsel %vm901, %v1197, 0.0
        %1216 = vadd.xlane.f32.xlu0 %v1215
        %v1217 = vpop.xlane.xlu0 %1216
        %v1218 = vsel %vm901, %v1199, 0.0
        %1219 = vadd.xlane.f32.xlu0 %v1218
        %v1220 = vpop.xlane.xlu0 %1219
        %v1221 = vsel %vm901, %v1201, 0.0
        %1222 = vadd.xlane.f32.xlu0 %v1221
        %v1223 = vpop.xlane.xlu0 %1222
        %v1224 = vsel %vm901, %v1203, 0.0
        %1225 = vadd.xlane.f32.xlu0 %v1224
        %v1226 = vpop.xlane.xlu0 %1225
        %v1227 = vsel %vm901, %v1205, 0.0
        %1228 = vadd.xlane.f32.xlu0 %v1227
        %v1229 = vpop.xlane.xlu0 %1228
        %v1230 = vrcp.pop %v1208
        %v1231 = vrcp.pop %v1211
        %v1232 = vrcp.pop %v1214
        %v1233 = vrcp.pop %v1217
        %v1234 = vrcp.pop %v1220
        %v1235 = vrcp.pop %v1223
        %v1236 = vrcp.pop %v1226
        %v1237 = vrcp.pop %v1229
        %v1238 = vmul.f32 %v1191, %v1230
        %v1239 = vmul.f32 %v1193, %v1231
        %v1240 = vmul.f32 %v1195, %v1232
        %v1241 = vmul.f32 %v1197, %v1233
        %v1242 = vmul.f32 %v1199, %v1234
        %v1243 = vmul.f32 %v1201, %v1235
        %v1244 = vmul.f32 %v1203, %v1236
        %v1245 = vmul.f32 %v1205, %v1237
        %v1246 = vpack.c.bf16 %v1239, %v1238
        %v1247 = vpack.c.bf16 %v1241, %v1240
        %v1248 = vpack.c.bf16 %v1243, %v1242
        %v1249 = vpack.c.bf16 %v1245, %v1244
        %v1251 = vsel %vm901, %v1246, 0
        %1253 = vmatprep.subr.bf16.mxu0 0
        %1254 = vmatpush1.bf16.msra.mxu0 %v966
        %1255 = vmatprep.subr.bf16.mxu0 0
        %1256 = vmatpush1.bf16.msra.mxu0 0
        %1257 = vmatprep.subr.bf16.mxu0 0
        %1258 = vmatpush1.bf16.msra.mxu0 0
        %1259 = vmatprep.subr.bf16.mxu0 0
        %1260 = vmatpush1.bf16.msra.mxu0 0
        %1261 = vmatprep.subr.bf16.mxu0 0
        %1262 = vmatpush1.bf16.msra.mxu0 0
        %1263 = vmatprep.subr.bf16.mxu0 0
        %1264 = vmatpush1.bf16.msra.mxu0 0
        %1265 = vmatprep.subr.bf16.mxu0 0
        %1266 = vmatpush1.bf16.msra.mxu0 0
        %1267 = vmatprep.subr.bf16.mxu0 0
        %1268 = vmatpush1.bf16.msra.mxu0 0
        %1269 = vmatprep.subr.bf16.mxu0 0
        %1270 = vmatpush1.bf16.msra.mxu0 0
        %1271 = vmatprep.subr.bf16.mxu0 0
        %1272 = vmatpush1.bf16.msra.mxu0 0
        %1273 = vmatprep.subr.bf16.mxu0 0
        %1274 = vmatpush1.bf16.msra.mxu0 0
        %1275 = vmatprep.subr.bf16.mxu0 0
        %1276 = vmatpush1.bf16.msra.mxu0 0
        %1277 = vmatprep.subr.bf16.mxu0 0
        %1278 = vmatpush1.bf16.msra.mxu0 0
        %1279 = vmatprep.subr.bf16.mxu0 0
        %1280 = vmatpush1.bf16.msra.mxu0 0
        %1281 = vmatprep.subr.bf16.mxu0 0
        %1282 = vmatpush1.bf16.msra.mxu0 0
        %1283 = vmatprep.subr.bf16.mxu0 0
        %1284 = vmatpush1.bf16.msra.mxu0 0
        %1285 = vmatprep.mubr.bf16.mxu0 0
        %1286 = vmatmul.mubr.bf16.gmra.mrb[0].mxu0 %v1251
        %v1287 = vpop.f32.mrb[0].mxu0
        %v1288 = vadd.f32 0.0, %v1287
        %v1289 = vpop.f32.mrb[0].mxu0
        %v1290 = vpop.f32.mrb[0].mxu0
        %v1291 = vadd.f32 0.0, %v1290
        %v1292 = vpop.f32.mrb[0].mxu0
        %1293 = vdwg.mxu0
        %v1295 = vsel %vm901, %v1247, 0
        %1297 = vmatprep.subr.bf16.mxu0 0
        %1298 = vmatpush1.bf16.msra.mxu0 %v967
        %1299 = vmatprep.subr.bf16.mxu0 0
        %1300 = vmatpush1.bf16.msra.mxu0 0
        %1301 = vmatprep.subr.bf16.mxu0 0
        %1302 = vmatpush1.bf16.msra.mxu0 0
        %1303 = vmatprep.subr.bf16.mxu0 0
        %1304 = vmatpush1.bf16.msra.mxu0 0
        %1305 = vmatprep.subr.bf16.mxu0 0
        %1306 = vmatpush1.bf16.msra.mxu0 0
        %1307 = vmatprep.subr.bf16.mxu0 0
        %1308 = vmatpush1.bf16.msra.mxu0 0
        %1309 = vmatprep.subr.bf16.mxu0 0
        %1310 = vmatpush1.bf16.msra.mxu0 0
        %1311 = vmatprep.subr.bf16.mxu0 0
        %1312 = vmatpush1.bf16.msra.mxu0 0
        %1313 = vmatprep.subr.bf16.mxu0 0
        %1314 = vmatpush1.bf16.msra.mxu0 0
        %1315 = vmatprep.subr.bf16.mxu0 0
        %1316 = vmatpush1.bf16.msra.mxu0 0
        %1317 = vmatprep.subr.bf16.mxu0 0
        %1318 = vmatpush1.bf16.msra.mxu0 0
        %1319 = vmatprep.subr.bf16.mxu0 0
        %1320 = vmatpush1.bf16.msra.mxu0 0
        %1321 = vmatprep.subr.bf16.mxu0 0
        %1322 = vmatpush1.bf16.msra.mxu0 0
        %1323 = vmatprep.subr.bf16.mxu0 0
        %1324 = vmatpush1.bf16.msra.mxu0 0
        %1325 = vmatprep.subr.bf16.mxu0 0
        %1326 = vmatpush1.bf16.msra.mxu0 0
        %1327 = vmatprep.subr.bf16.mxu0 0
        %1328 = vmatpush1.bf16.msra.mxu0 0
        %1329 = vmatprep.mubr.bf16.mxu0 0
        %1330 = vmatmul.mubr.bf16.gmra.mrb[0].mxu0 %v1295
        %v1331 = vpop.f32.mrb[0].mxu0
        %v1332 = vadd.f32 0.0, %v1331
        %v1333 = vpop.f32.mrb[0].mxu0
        %v1334 = vpop.f32.mrb[0].mxu0
        %v1335 = vadd.f32 0.0, %v1334
        %v1336 = vpop.f32.mrb[0].mxu0
        %1337 = vdwg.mxu0
        %v1339 = vsel %vm901, %v1248, 0
        %1341 = vmatprep.subr.bf16.mxu0 0
        %1342 = vmatpush1.bf16.msra.mxu0 %v968
        %1343 = vmatprep.subr.bf16.mxu0 0
        %1344 = vmatpush1.bf16.msra.mxu0 0
        %1345 = vmatprep.subr.bf16.mxu0 0
        %1346 = vmatpush1.bf16.msra.mxu0 0
        %1347 = vmatprep.subr.bf16.mxu0 0
        %1348 = vmatpush1.bf16.msra.mxu0 0
        %1349 = vmatprep.subr.bf16.mxu0 0
        %1350 = vmatpush1.bf16.msra.mxu0 0
        %1351 = vmatprep.subr.bf16.mxu0 0
        %1352 = vmatpush1.bf16.msra.mxu0 0
        %1353 = vmatprep.subr.bf16.mxu0 0
        %1354 = vmatpush1.bf16.msra.mxu0 0
        %1355 = vmatprep.subr.bf16.mxu0 0
        %1356 = vmatpush1.bf16.msra.mxu0 0
        %1357 = vmatprep.subr.bf16.mxu0 0
        %1358 = vmatpush1.bf16.msra.mxu0 0
        %1359 = vmatprep.subr.bf16.mxu0 0
        %1360 = vmatpush1.bf16.msra.mxu0 0
        %1361 = vmatprep.subr.bf16.mxu0 0
        %1362 = vmatpush1.bf16.msra.mxu0 0
        %1363 = vmatprep.subr.bf16.mxu0 0
        %1364 = vmatpush1.bf16.msra.mxu0 0
        %1365 = vmatprep.subr.bf16.mxu0 0
        %1366 = vmatpush1.bf16.msra.mxu0 0
        %1367 = vmatprep.subr.bf16.mxu0 0
        %1368 = vmatpush1.bf16.msra.mxu0 0
        %1369 = vmatprep.subr.bf16.mxu0 0
        %1370 = vmatpush1.bf16.msra.mxu0 0
        %1371 = vmatprep.subr.bf16.mxu0 0
        %1372 = vmatpush1.bf16.msra.mxu0 0
        %1373 = vmatprep.mubr.bf16.mxu0 0
        %1374 = vmatmul.mubr.bf16.gmra.mrb[0].mxu0 %v1339
        %v1375 = vpop.f32.mrb[0].mxu0
        %v1376 = vadd.f32 0.0, %v1375
        %v1377 = vpop.f32.mrb[0].mxu0
        %v1378 = vpop.f32.mrb[0].mxu0
        %v1379 = vadd.f32 0.0, %v1378
        %v1380 = vpop.f32.mrb[0].mxu0
        %1381 = vdwg.mxu0
        %v1383 = vsel %vm901, %v1249, 0
        %1385 = vmatprep.subr.bf16.mxu0 0
        %1386 = vmatpush1.bf16.msra.mxu0 %v969
        %1387 = vmatprep.subr.bf16.mxu0 0
        %1388 = vmatpush1.bf16.msra.mxu0 0
        %1389 = vmatprep.subr.bf16.mxu0 0
        %1390 = vmatpush1.bf16.msra.mxu0 0
        %1391 = vmatprep.subr.bf16.mxu0 0
        %1392 = vmatpush1.bf16.msra.mxu0 0
        %1393 = vmatprep.subr.bf16.mxu0 0
        %1394 = vmatpush1.bf16.msra.mxu0 0
        %1395 = vmatprep.subr.bf16.mxu0 0
        %1396 = vmatpush1.bf16.msra.mxu0 0
        %1397 = vmatprep.subr.bf16.mxu0 0
        %1398 = vmatpush1.bf16.msra.mxu0 0
        %1399 = vmatprep.subr.bf16.mxu0 0
        %1400 = vmatpush1.bf16.msra.mxu0 0
        %1401 = vmatprep.subr.bf16.mxu0 0
        %1402 = vmatpush1.bf16.msra.mxu0 0
        %1403 = vmatprep.subr.bf16.mxu0 0
        %1404 = vmatpush1.bf16.msra.mxu0 0
        %1405 = vmatprep.subr.bf16.mxu0 0
        %1406 = vmatpush1.bf16.msra.mxu0 0
        %1407 = vmatprep.subr.bf16.mxu0 0
        %1408 = vmatpush1.bf16.msra.mxu0 0
        %1409 = vmatprep.subr.bf16.mxu0 0
        %1410 = vmatpush1.bf16.msra.mxu0 0
        %1411 = vmatprep.subr.bf16.mxu0 0
        %1412 = vmatpush1.bf16.msra.mxu0 0
        %1413 = vmatprep.subr.bf16.mxu0 0
        %1414 = vmatpush1.bf16.msra.mxu0 0
        %1415 = vmatprep.subr.bf16.mxu0 0
        %1416 = vmatpush1.bf16.msra.mxu0 0
        %1417 = vmatprep.mubr.bf16.mxu0 0
        %1418 = vmatmul.mubr.bf16.gmra.mrb[0].mxu0 %v1383
        %v1419 = vpop.f32.mrb[0].mxu0
        %v1420 = vadd.f32 0.0, %v1419
        %v1421 = vpop.f32.mrb[0].mxu0
        %v1422 = vpop.f32.mrb[0].mxu0
        %v1423 = vadd.f32 0.0, %v1422
        %v1424 = vpop.f32.mrb[0].mxu0
        %1425 = vdwg.mxu0
        %v1426 = vpack.c.bf16 %v1291, %v1288
        %v1427 = vpack.c.bf16 %v1335, %v1332
        %v1428 = vpack.c.bf16 %v1379, %v1376
        %v1429 = vpack.c.bf16 %v1423, %v1420
        %1430 = vst.msk [vmem:[#allocation3] sm:$0xff] %vm901, %v1426
        %1432 = vrot.lane.b32.xlu0 %v1427, 16
        %v1433 = vpop.permute.xlu0 %1432
        %vm1435 = vcmask 261248
        %1436 = vst.msk [vmem:[#allocation3] sm:$0xff] %vm1435, %v1433
        %1438 = vrot.lane.b32.xlu0 %v1428, 32
        %v1439 = vpop.permute.xlu0 %1438
        %vm1441 = vcmask 392448
        %1442 = vst.msk [vmem:[#allocation3] sm:$0xff] %vm1441, %v1439
        %1444 = vrot.lane.b32.xlu0 %v1429, 48
        %v1445 = vpop.permute.xlu0 %1444
        %vm1447 = vcmask 523648
        %1448 = vst.msk [vmem:[#allocation3] sm:$0xff] %vm1447, %v1445
        %v1449 = vld [vmem:[#allocation3] sm:$0xff]
        %v1450 = vld [vmem:[%s701] sm:$0xf]
        %v1451 = vld [vmem:[%s701 + $0x4] sm:$0xf]
        %v1452 = vld [vmem:[%s701 + $0x8] sm:$0xf]
        %v1453 = vld [vmem:[%s701 + $0xc] sm:$0xf]
        %v1454 = vld [vmem:[%s701 + $0x10] sm:$0xf]
        %v1455 = vld [vmem:[%s701 + $0x14] sm:$0xf]
        %v1456 = vld [vmem:[%s701 + $0x18] sm:$0xf]
        %v1457 = vld [vmem:[%s701 + $0x1c] sm:$0xf]
        %v1458 = vld [vmem:[%s704] sm:$0x1]
        %v1460 = vlaneseq
        %v1461 = vshrl.u32 %v1460, 7
        %v1462 = vsub.s32 0, %v1461
        %v1463 = vrot.slane %v1458, %v1462
        %v1473 = vunpack.c.l.b16 %v1450
        %v1474 = vunpack.c.l.b16 %v1451
        %v1475 = vunpack.c.l.b16 %v1452
        %v1476 = vunpack.c.l.b16 %v1453
        %v1477 = vunpack.c.l.b16 %v1454
        %v1478 = vunpack.c.l.b16 %v1455
        %v1479 = vunpack.c.l.b16 %v1456
        %v1480 = vunpack.c.l.b16 %v1457
        %v1481 = vpack.c.b16 %v1474, %v1473
        %v1482 = vpack.c.b16 %v1476, %v1475
        %v1483 = vpack.c.b16 %v1478, %v1477
        %v1484 = vpack.c.b16 %v1480, %v1479
        %v1490 = vsel %vm749, %v1449, 0
        %1492 = vmatprep.subr.bf16.mxu0 0
        %1493 = vmatpush1.bf16.msra.mxu0 %v1481
        %1494 = vmatprep.subr.bf16.mxu0 0
        %1495 = vmatpush1.bf16.msra.mxu0 %v1482
        %1496 = vmatprep.subr.bf16.mxu0 0
        %1497 = vmatpush1.bf16.msra.mxu0 %v1483
        %1498 = vmatprep.subr.bf16.mxu0 0
        %1499 = vmatpush1.bf16.msra.mxu0 %v1484
        %1500 = vmatprep.subr.bf16.mxu0 0
        %1501 = vmatpush1.bf16.msra.mxu0 0
        %1502 = vmatprep.subr.bf16.mxu0 0
        %1503 = vmatpush1.bf16.msra.mxu0 0
        %1504 = vmatprep.subr.bf16.mxu0 0
        %1505 = vmatpush1.bf16.msra.mxu0 0
        %1506 = vmatprep.subr.bf16.mxu0 0
        %1507 = vmatpush1.bf16.msra.mxu0 0
        %1508 = vmatprep.subr.bf16.mxu0 0
        %1509 = vmatpush1.bf16.msra.mxu0 0
        %1510 = vmatprep.subr.bf16.mxu0 0
        %1511 = vmatpush1.bf16.msra.mxu0 0
        %1512 = vmatprep.subr.bf16.mxu0 0
        %1513 = vmatpush1.bf16.msra.mxu0 0
        %1514 = vmatprep.subr.bf16.mxu0 0
        %1515 = vmatpush1.bf16.msra.mxu0 0
        %1516 = vmatprep.subr.bf16.mxu0 0
        %1517 = vmatpush1.bf16.msra.mxu0 0
        %1518 = vmatprep.subr.bf16.mxu0 0
        %1519 = vmatpush1.bf16.msra.mxu0 0
        %1520 = vmatprep.subr.bf16.mxu0 0
        %1521 = vmatpush1.bf16.msra.mxu0 0
        %1522 = vmatprep.subr.bf16.mxu0 0
        %1523 = vmatpush1.bf16.msra.mxu0 0
        %1524 = vmatprep.mubr.bf16.mxu0 0
        %1525 = vmatmul.mubr.bf16.gmra.mrb[0].mxu0 %v1490
        %v1526 = vpop.f32.mrb[0].mxu0
        %v1527 = vadd.f32 %v1463, %v1526
        %v1528 = vpop.f32.mrb[0].mxu0
        %v1529 = vpop.f32.mrb[0].mxu0
        %v1530 = vadd.f32 %v1463, %v1529
        %v1531 = vpop.f32.mrb[0].mxu0
        %1532 = vdwg.mxu0
        %v1533 = vadd.f32 %v1527, %v745
        %v1534 = vadd.f32 %v1530, %v746
        %v1535 = vld [vmem:[%s707] sm:$0x1]
        %v1536 = vld [vmem:[%s710] sm:$0x1]
        %v1537 = vsel %vm749, %v1533, 0.0
        %1538 = vadd.xlane.f32.xlu0 %v1537
        %v1539 = vpop.xlane.xlu0 %1538
        %v1540 = vsel %vm749, %v1534, 0.0
        %1541 = vadd.xlane.f32.xlu0 %v1540
        %v1542 = vpop.xlane.xlu0 %1541
        %v1543 = vmul.f32 %v1539, %v756
        %v1544 = vmul.f32 %v1542, %v756
        %v1545 = vsub.f32 %v1533, %v1543
        %v1546 = vsub.f32 %v1534, %v1544
        %v1547 = vmul.f32 %v1545, %v1545
        %v1548 = vmul.f32 %v1546, %v1546
        %v1549 = vsel %vm749, %v1547, 0.0
        %1550 = vadd.xlane.f32.xlu0 %v1549
        %v1551 = vpop.xlane.xlu0 %1550
        %v1552 = vsel %vm749, %v1548, 0.0
        %1553 = vadd.xlane.f32.xlu0 %v1552
        %v1554 = vpop.xlane.xlu0 %1553
        %v1555 = vmul.f32 %v1551, %v756
        %v1556 = vmul.f32 %v1554, %v756
        %v1557 = vadd.f32 %v1555, 1e-05
        %v1558 = vadd.f32 %v1556, 1e-05
        %v1559 = vrsqrt.pop %v1557
        %v1560 = vrsqrt.pop %v1558
        %v1561 = vmul.f32 %v1545, %v1559
        %v1562 = vmul.f32 %v1546, %v1560
        %v1564 = vlaneseq
        %v1565 = vshrl.u32 %v1564, 7
        %v1566 = vsub.s32 0, %v1565
        %v1567 = vrot.slane %v1535, %v1566
        %v1569 = vmul.f32 %v1561, %v1567
        %v1570 = vmul.f32 %v1562, %v1567
        %v1572 = vlaneseq
        %v1573 = vshrl.u32 %v1572, 7
        %v1574 = vsub.s32 0, %v1573
        %v1575 = vrot.slane %v1536, %v1574
        %v1577 = vadd.f32 %v1569, %v1575
        %v1578 = vadd.f32 %v1570, %v1575
        %v1579 = vpack.c.bf16 %v1578, %v1577
        %v1580 = vld [vmem:[%s715] sm:$0xff]
        %v1581 = vld [vmem:[%s715 + $0x8] sm:$0xff]
        %v1582 = vld [vmem:[%s715 + $0x10] sm:$0xff]
        %v1583 = vld [vmem:[%s715 + $0x18] sm:$0xff]
        %v1584 = vld [vmem:[%s715 + $0x20] sm:$0xff]
        %v1585 = vld [vmem:[%s715 + $0x28] sm:$0xff]
        %v1586 = vld [vmem:[%s715 + $0x30] sm:$0xff]
        %v1587 = vld [vmem:[%s715 + $0x38] sm:$0xff]
        %v1588 = vld [vmem:[%s719] sm:$0x3]
        %v1590 = vlaneseq
        %v1591 = vshrl.u32 %v1590, 7
        %v1592 = vsub.s32 0, %v1591
        %v1593 = vrot.slane %v1588, %v1592
        %v1594 = vlaneseq
        %v1595 = vshrl.u32 %v1594, 7
        %v1596 = vsub.s32 1, %v1595
        %v1597 = vrot.slane %v1588, %v1596
        %v1608 = vunpack.c.l.b16 %v1580
        %v1609 = vunpack.c.h.b16 %v1580
        %v1610 = vunpack.c.l.b16 %v1581
        %v1611 = vunpack.c.h.b16 %v1581
        %v1612 = vunpack.c.l.b16 %v1582
        %v1613 = vunpack.c.h.b16 %v1582
        %v1614 = vunpack.c.l.b16 %v1583
        %v1615 = vunpack.c.h.b16 %v1583
        %v1616 = vunpack.c.l.b16 %v1584
        %v1617 = vunpack.c.h.b16 %v1584
        %v1618 = vunpack.c.l.b16 %v1585
        %v1619 = vunpack.c.h.b16 %v1585
        %v1620 = vunpack.c.l.b16 %v1586
        %v1621 = vunpack.c.h.b16 %v1586
        %v1622 = vunpack.c.l.b16 %v1587
        %v1623 = vunpack.c.h.b16 %v1587
        %v1624 = vpack.c.b16 %v1610, %v1608
        %v1625 = vpack.c.b16 %v1611, %v1609
        %v1626 = vpack.c.b16 %v1614, %v1612
        %v1627 = vpack.c.b16 %v1615, %v1613
        %v1628 = vpack.c.b16 %v1618, %v1616
        %v1629 = vpack.c.b16 %v1619, %v1617
        %v1630 = vpack.c.b16 %v1622, %v1620
        %v1631 = vpack.c.b16 %v1623, %v1621
        %v1641 = vsel %vm749, %v1579, 0
        %1643 = vmatprep.subr.bf16.mxu0 %v1625
        %1644 = vmatpush1.bf16.msra.mxu0 %v1624
        %1645 = vmatprep.subr.bf16.mxu0 %v1627
        %1646 = vmatpush1.bf16.msra.mxu0 %v1626
        %1647 = vmatprep.subr.bf16.mxu0 %v1629
        %1648 = vmatpush1.bf16.msra.mxu0 %v1628
        %1649 = vmatprep.subr.bf16.mxu0 %v1631
        %1650 = vmatpush1.bf16.msra.mxu0 %v1630
        %1651 = vmatprep.subr.bf16.mxu0 0
        %1652 = vmatpush1.bf16.msra.mxu0 0
        %1653 = vmatprep.subr.bf16.mxu0 0
        %1654 = vmatpush1.bf16.msra.mxu0 0
        %1655 = vmatprep.subr.bf16.mxu0 0
        %1656 = vmatpush1.bf16.msra.mxu0 0
        %1657 = vmatprep.subr.bf16.mxu0 0
        %1658 = vmatpush1.bf16.msra.mxu0 0
        %1659 = vmatprep.subr.bf16.mxu0 0
        %1660 = vmatpush1.bf16.msra.mxu0 0
        %1661 = vmatprep.subr.bf16.mxu0 0
        %1662 = vmatpush1.bf16.msra.mxu0 0
        %1663 = vmatprep.subr.bf16.mxu0 0
        %1664 = vmatpush1.bf16.msra.mxu0 0
        %1665 = vmatprep.subr.bf16.mxu0 0
        %1666 = vmatpush1.bf16.msra.mxu0 0
        %1667 = vmatprep.subr.bf16.mxu0 0
        %1668 = vmatpush1.bf16.msra.mxu0 0
        %1669 = vmatprep.subr.bf16.mxu0 0
        %1670 = vmatpush1.bf16.msra.mxu0 0
        %1671 = vmatprep.subr.bf16.mxu0 0
        %1672 = vmatpush1.bf16.msra.mxu0 0
        %1673 = vmatprep.subr.bf16.mxu0 0
        %1674 = vmatpush1.bf16.msra.mxu0 0
        %1675 = vmatprep.mubr.bf16.mxu0 0
        %1676 = vmatmul.mubr.bf16.gmra.mrb[0].mxu0 %v1641
        %v1677 = vpop.f32.mrb[0].mxu0
        %v1678 = vadd.f32 %v1593, %v1677
        %v1679 = vpop.f32.mrb[0].mxu0
        %v1680 = vadd.f32 %v1597, %v1679
        %v1681 = vpop.f32.mrb[0].mxu0
        %v1682 = vadd.f32 %v1593, %v1681
        %v1683 = vpop.f32.mrb[0].mxu0
        %v1684 = vadd.f32 %v1597, %v1683
        %1685 = vdwg.mxu0
        %v1686 = vmul.f32 %v1678, 1.702
        %v1687 = vmul.f32 %v1680, 1.702
        %v1688 = vmul.f32 %v1682, 1.702
        %v1689 = vmul.f32 %v1684, 1.702
        %v1690 = vxor.u32 %v1686, 2147483648
        %v1691 = vxor.u32 %v1687, 2147483648
        %v1692 = vxor.u32 %v1688, 2147483648
        %v1693 = vxor.u32 %v1689, 2147483648
        %v1694 = vmul.f32 %v1690, 1.442695
        %v1695 = vpow.pop %v1694
        %v1696 = vmul.f32 %v1691, 1.442695
        %v1697 = vpow.pop %v1696
        %v1698 = vmul.f32 %v1692, 1.442695
        %v1699 = vpow.pop %v1698
        %v1700 = vmul.f32 %v1693, 1.442695
        %v1701 = vpow.pop %v1700
        %v1702 = vadd.f32 %v1695, 1.0
        %v1703 = vadd.f32 %v1697, 1.0
        %v1704 = vadd.f32 %v1699, 1.0
        %v1705 = vadd.f32 %v1701, 1.0
        %v1706 = vrcp.pop %v1702
        %v1707 = vmul.f32 1.0, %v1706
        %v1708 = vrcp.pop %v1703
        %v1709 = vmul.f32 1.0, %v1708
        %v1710 = vrcp.pop %v1704
        %v1711 = vmul.f32 1.0, %v1710
        %v1712 = vrcp.pop %v1705
        %v1713 = vmul.f32 1.0, %v1712
        %v1714 = vmul.f32 %v1678, %v1707
        %v1715 = vmul.f32 %v1680, %v1709
        %v1716 = vmul.f32 %v1682, %v1711
        %v1717 = vmul.f32 %v1684, %v1713
        %v1718 = vpack.c.bf16 %v1716, %v1714
        %v1719 = vpack.c.bf16 %v1717, %v1715
        %v1720 = vld [vmem:[%s724] sm:$0xf]
        %v1721 = vld [vmem:[%s724 + $0x4] sm:$0xf]
        %v1722 = vld [vmem:[%s724 + $0x8] sm:$0xf]
        %v1723 = vld [vmem:[%s724 + $0xc] sm:$0xf]
        %v1724 = vld [vmem:[%s724 + $0x10] sm:$0xf]
        %v1725 = vld [vmem:[%s724 + $0x14] sm:$0xf]
        %v1726 = vld [vmem:[%s724 + $0x18] sm:$0xf]
        %v1727 = vld [vmem:[%s724 + $0x1c] sm:$0xf]
        %v1728 = vld [vmem:[%s724 + $0x20] sm:$0xf]
        %v1729 = vld [vmem:[%s724 + $0x24] sm:$0xf]
        %v1730 = vld [vmem:[%s724 + $0x28] sm:$0xf]
        %v1731 = vld [vmem:[%s724 + $0x2c] sm:$0xf]
        %v1732 = vld [vmem:[%s724 + $0x30] sm:$0xf]
        %v1733 = vld [vmem:[%s724 + $0x34] sm:$0xf]
        %v1734 = vld [vmem:[%s724 + $0x38] sm:$0xf]
        %v1735 = vld [vmem:[%s724 + $0x3c] sm:$0xf]
        %v1736 = vld [vmem:[%s724 + $0x40] sm:$0xf]
        %v1737 = vld [vmem:[%s724 + $0x44] sm:$0xf]
        %v1738 = vld [vmem:[%s724 + $0x48] sm:$0xf]
        %v1739 = vld [vmem:[%s724 + $0x4c] sm:$0xf]
        %v1740 = vld [vmem:[%s724 + $0x50] sm:$0xf]
        %v1741 = vld [vmem:[%s724 + $0x54] sm:$0xf]
        %v1742 = vld [vmem:[%s724 + $0x58] sm:$0xf]
        %v1743 = vld [vmem:[%s724 + $0x5c] sm:$0xf]
        %v1744 = vld [vmem:[%s724 + $0x60] sm:$0xf]
        %v1745 = vld [vmem:[%s724 + $0x64] sm:$0xf]
        %v1746 = vld [vmem:[%s724 + $0x68] sm:$0xf]
        %v1747 = vld [vmem:[%s724 + $0x6c] sm:$0xf]
        %v1748 = vld [vmem:[%s724 + $0x70] sm:$0xf]
        %v1749 = vld [vmem:[%s724 + $0x74] sm:$0xf]
        %v1750 = vld [vmem:[%s724 + $0x78] sm:$0xf]
        %v1751 = vld [vmem:[%s724 + $0x7c] sm:$0xf]
        %v1752 = vld [vmem:[%s727] sm:$0x1]
        %v1754 = vlaneseq
        %v1755 = vshrl.u32 %v1754, 7
        %v1756 = vsub.s32 0, %v1755
        %v1757 = vrot.slane %v1752, %v1756
        %v1791 = vunpack.c.l.b16 %v1720
        %v1792 = vunpack.c.l.b16 %v1721
        %v1793 = vunpack.c.l.b16 %v1722
        %v1794 = vunpack.c.l.b16 %v1723
        %v1795 = vunpack.c.l.b16 %v1724
        %v1796 = vunpack.c.l.b16 %v1725
        %v1797 = vunpack.c.l.b16 %v1726
        %v1798 = vunpack.c.l.b16 %v1727
        %v1799 = vunpack.c.l.b16 %v1728
        %v1800 = vunpack.c.l.b16 %v1729
        %v1801 = vunpack.c.l.b16 %v1730
        %v1802 = vunpack.c.l.b16 %v1731
        %v1803 = vunpack.c.l.b16 %v1732
        %v1804 = vunpack.c.l.b16 %v1733
        %v1805 = vunpack.c.l.b16 %v1734
        %v1806 = vunpack.c.l.b16 %v1735
        %v1807 = vunpack.c.l.b16 %v1736
        %v1808 = vunpack.c.l.b16 %v1737
        %v1809 = vunpack.c.l.b16 %v1738
        %v1810 = vunpack.c.l.b16 %v1739
        %v1811 = vunpack.c.l.b16 %v1740
        %v1812 = vunpack.c.l.b16 %v1741
        %v1813 = vunpack.c.l.b16 %v1742
        %v1814 = vunpack.c.l.b16 %v1743
        %v1815 = vunpack.c.l.b16 %v1744
        %v1816 = vunpack.c.l.b16 %v1745
        %v1817 = vunpack.c.l.b16 %v1746
        %v1818 = vunpack.c.l.b16 %v1747
        %v1819 = vunpack.c.l.b16 %v1748
        %v1820 = vunpack.c.l.b16 %v1749
        %v1821 = vunpack.c.l.b16 %v1750
        %v1822 = vunpack.c.l.b16 %v1751
        %v1823 = vpack.c.b16 %v1792, %v1791
        %v1824 = vpack.c.b16 %v1794, %v1793
        %v1825 = vpack.c.b16 %v1796, %v1795
        %v1826 = vpack.c.b16 %v1798, %v1797
        %v1827 = vpack.c.b16 %v1800, %v1799
        %v1828 = vpack.c.b16 %v1802, %v1801
        %v1829 = vpack.c.b16 %v1804, %v1803
        %v1830 = vpack.c.b16 %v1806, %v1805
        %v1831 = vpack.c.b16 %v1808, %v1807
        %v1832 = vpack.c.b16 %v1810, %v1809
        %v1833 = vpack.c.b16 %v1812, %v1811
        %v1834 = vpack.c.b16 %v1814, %v1813
        %v1835 = vpack.c.b16 %v1816, %v1815
        %v1836 = vpack.c.b16 %v1818, %v1817
        %v1837 = vpack.c.b16 %v1820, %v1819
        %v1838 = vpack.c.b16 %v1822, %v1821
        %1855 = vmatprep.subr.bf16.mxu0 0
        %1856 = vmatpush1.bf16.msra.mxu0 %v1823
        %1857 = vmatprep.subr.bf16.mxu0 0
        %1858 = vmatpush1.bf16.msra.mxu0 %v1824
        %1859 = vmatprep.subr.bf16.mxu0 0
        %1860 = vmatpush1.bf16.msra.mxu0 %v1825
        %1861 = vmatprep.subr.bf16.mxu0 0
        %1862 = vmatpush1.bf16.msra.mxu0 %v1826
        %1863 = vmatprep.subr.bf16.mxu0 0
        %1864 = vmatpush1.bf16.msra.mxu0 %v1827
        %1865 = vmatprep.subr.bf16.mxu0 0
        %1866 = vmatpush1.bf16.msra.mxu0 %v1828
        %1867 = vmatprep.subr.bf16.mxu0 0
        %1868 = vmatpush1.bf16.msra.mxu0 %v1829
        %1869 = vmatprep.subr.bf16.mxu0 0
        %1870 = vmatpush1.bf16.msra.mxu0 %v1830
        %1871 = vmatprep.subr.bf16.mxu0 0
        %1872 = vmatpush1.bf16.msra.mxu0 %v1831
        %1873 = vmatprep.subr.bf16.mxu0 0
        %1874 = vmatpush1.bf16.msra.mxu0 %v1832
        %1875 = vmatprep.subr.bf16.mxu0 0
        %1876 = vmatpush1.bf16.msra.mxu0 %v1833
        %1877 = vmatprep.subr.bf16.mxu0 0
        %1878 = vmatpush1.bf16.msra.mxu0 %v1834
        %1879 = vmatprep.subr.bf16.mxu0 0
        %1880 = vmatpush1.bf16.msra.mxu0 %v1835
        %1881 = vmatprep.subr.bf16.mxu0 0
        %1882 = vmatpush1.bf16.msra.mxu0 %v1836
        %1883 = vmatprep.subr.bf16.mxu0 0
        %1884 = vmatpush1.bf16.msra.mxu0 %v1837
        %1885 = vmatprep.subr.bf16.mxu0 0
        %1886 = vmatpush1.bf16.msra.mxu0 %v1838
        %1887 = vmatprep.mubr.bf16.mxu0 %v1719
        %1888 = vmatmul.mubr.bf16.gmra.mrb[0].mxu0 %v1718
        %v1889 = vpop.f32.mrb[0].mxu0
        %v1890 = vadd.f32 %v1757, %v1889
        %v1891 = vpop.f32.mrb[0].mxu0
        %v1892 = vpop.f32.mrb[0].mxu0
        %v1893 = vadd.f32 %v1757, %v1892
        %v1894 = vpop.f32.mrb[0].mxu0
        %1895 = vdwg.mxu0
        %v1896 = vadd.f32 %v1890, %v1533
        %v1897 = vadd.f32 %v1893, %v1534
        %1898 = vst.msk [vmem:[#allocation4] sm:$0xff] %vm749, %v1896
        %1899 = vst.msk [vmem:[#allocation4 + $0x8] sm:$0xff] %vm749, %v1897
        %p1900 = scmp.eq.s32.totalorder %s33, 2
        // Predicated region
        $region89: #{tpu_custom_call.1} parent=83 // pred_check
          %p1901 = pneg %p1900
        $region90: #{tpu_custom_call.1} parent=83 // pred_check_branch
          %1903 = sbr.rel (%p1901) target = $region92
        $region91: #{tpu_custom_call.1} parent=83 // pred_region
          %v1904 = vld [vmem:[%s14] sm:$0x1]
          %v1905 = vld [vmem:[%s15] sm:$0x1]
          %v1906 = vsel %vm749, %v1896, 0.0
          %1907 = vadd.xlane.f32.xlu0 %v1906
          %v1908 = vpop.xlane.xlu0 %1907
          %v1909 = vsel %vm749, %v1897, 0.0
          %1910 = vadd.xlane.f32.xlu0 %v1909
          %v1911 = vpop.xlane.xlu0 %1910
          %v1912 = vmul.f32 %v1908, %v756
          %v1913 = vmul.f32 %v1911, %v756
          %v1914 = vsub.f32 %v1896, %v1912
          %v1915 = vsub.f32 %v1897, %v1913
          %v1916 = vmul.f32 %v1914, %v1914
          %v1917 = vmul.f32 %v1915, %v1915
          %v1918 = vsel %vm749, %v1916, 0.0
          %1919 = vadd.xlane.f32.xlu0 %v1918
          %v1920 = vpop.xlane.xlu0 %1919
          %v1921 = vsel %vm749, %v1917, 0.0
          %1922 = vadd.xlane.f32.xlu0 %v1921
          %v1923 = vpop.xlane.xlu0 %1922
          %v1924 = vmul.f32 %v1920, %v756
          %v1925 = vmul.f32 %v1923, %v756
          %v1926 = vadd.f32 %v1924, 1e-05
          %v1927 = vadd.f32 %v1925, 1e-05
          %v1928 = vrsqrt.pop %v1926
          %v1929 = vrsqrt.pop %v1927
          %v1930 = vmul.f32 %v1914, %v1928
          %v1931 = vmul.f32 %v1915, %v1929
          %v1933 = vlaneseq
          %v1934 = vshrl.u32 %v1933, 7
          %v1935 = vsub.s32 0, %v1934
          %v1936 = vrot.slane %v1904, %v1935
          %v1938 = vmul.f32 %v1930, %v1936
          %v1939 = vmul.f32 %v1931, %v1936
          %v1941 = vlaneseq
          %v1942 = vshrl.u32 %v1941, 7
          %v1943 = vsub.s32 0, %v1942
          %v1944 = vrot.slane %v1905, %v1943
          %v1946 = vadd.f32 %v1938, %v1944
          %v1947 = vadd.f32 %v1939, %v1944
          %1948 = vst.msk [vmem:[#allocation4] sm:$0xff] %vm749, %v1946
          %1949 = vst.msk [vmem:[#allocation4 + $0x8] sm:$0xff] %vm749, %v1947
        $region92: #{tpu_custom_call.1} parent=83 // pred_fallthru
          _
        %s1950 = scalar_lea.vmem [#allocation4], 16
        %v1951 = vld [vmem:[%s1950] sm:$0xff]
        %v1952 = vld [vmem:[%s1950 + $0x8] sm:$0xff]
        %v1953 = vld [vmem:[%s684] sm:$0x1]
        %v1954 = vld [vmem:[%s687] sm:$0x1]
        %v1955 = vsel %vm749, %v1951, 0.0
        %1956 = vadd.xlane.f32.xlu0 %v1955
        %v1957 = vpop.xlane.xlu0 %1956
        %v1958 = vsel %vm749, %v1952, 0.0
        %1959 = vadd.xlane.f32.xlu0 %v1958
        %v1960 = vpop.xlane.xlu0 %1959
        %v1961 = vmul.f32 %v1957, %v756
        %v1962 = vmul.f32 %v1960, %v756
        %v1963 = vsub.f32 %v1951, %v1961
        %v1964 = vsub.f32 %v1952, %v1962
        %v1965 = vmul.f32 %v1963, %v1963
        %v1966 = vmul.f32 %v1964, %v1964
        %v1967 = vsel %vm749, %v1965, 0.0
        %1968 = vadd.xlane.f32.xlu0 %v1967
        %v1969 = vpop.xlane.xlu0 %1968
        %v1970 = vsel %vm749, %v1966, 0.0
        %1971 = vadd.xlane.f32.xlu0 %v1970
        %v1972 = vpop.xlane.xlu0 %1971
        %v1973 = vmul.f32 %v1969, %v756
        %v1974 = vmul.f32 %v1972, %v756
        %v1975 = vadd.f32 %v1973, 1e-05
        %v1976 = vadd.f32 %v1974, 1e-05
        %v1977 = vrsqrt.pop %v1975
        %v1978 = vrsqrt.pop %v1976
        %v1979 = vmul.f32 %v1963, %v1977
        %v1980 = vmul.f32 %v1964, %v1978
        %v1982 = vlaneseq
        %v1983 = vshrl.u32 %v1982, 7
        %v1984 = vsub.s32 0, %v1983
        %v1985 = vrot.slane %v1953, %v1984
        %v1987 = vmul.f32 %v1979, %v1985
        %v1988 = vmul.f32 %v1980, %v1985
        %v1990 = vlaneseq
        %v1991 = vshrl.u32 %v1990, 7
        %v1992 = vsub.s32 0, %v1991
        %v1993 = vrot.slane %v1954, %v1992
        %v1995 = vadd.f32 %v1987, %v1993
        %v1996 = vadd.f32 %v1988, %v1993
        %v1997 = vpack.c.bf16 %v1996, %v1995
        %v1998 = vld [vmem:[%s692] sm:$0xff]
        %v1999 = vld [vmem:[%s692 + $0x8] sm:$0xff]
        %v2000 = vld [vmem:[%s692 + $0x10] sm:$0xff]
        %v2001 = vld [vmem:[%s692 + $0x18] sm:$0xff]
        %v2002 = vld [vmem:[%s692 + $0x20] sm:$0xff]
        %v2003 = vld [vmem:[%s692 + $0x28] sm:$0xff]
        %v2004 = vld [vmem:[%s692 + $0x30] sm:$0xff]
        %v2005 = vld [vmem:[%s692 + $0x38] sm:$0xff]
        %v2006 = vld [vmem:[%s696] sm:$0x3]
        %v2008 = vlaneseq
        %v2009 = vshrl.u32 %v2008, 7
        %v2010 = vsub.s32 0, %v2009
        %v2011 = vrot.slane %v2006, %v2010
        %v2012 = vlaneseq
        %v2013 = vshrl.u32 %v2012, 7
        %v2014 = vsub.s32 1, %v2013
        %v2015 = vrot.slane %v2006, %v2014
        %v2026 = vunpack.c.l.b16 %v1998
        %v2027 = vunpack.c.h.b16 %v1998
        %v2028 = vunpack.c.l.b16 %v1999
        %v2029 = vunpack.c.h.b16 %v1999
        %v2030 = vunpack.c.l.b16 %v2000
        %v2031 = vunpack.c.h.b16 %v2000
        %v2032 = vunpack.c.l.b16 %v2001
        %v2033 = vunpack.c.h.b16 %v2001
        %v2034 = vunpack.c.l.b16 %v2002
        %v2035 = vunpack.c.h.b16 %v2002
        %v2036 = vunpack.c.l.b16 %v2003
        %v2037 = vunpack.c.h.b16 %v2003
        %v2038 = vunpack.c.l.b16 %v2004
        %v2039 = vunpack.c.h.b16 %v2004
        %v2040 = vunpack.c.l.b16 %v2005
        %v2041 = vunpack.c.h.b16 %v2005
        %v2042 = vpack.c.b16 %v2028, %v2026
        %v2043 = vpack.c.b16 %v2029, %v2027
        %v2044 = vpack.c.b16 %v2032, %v2030
        %v2045 = vpack.c.b16 %v2033, %v2031
        %v2046 = vpack.c.b16 %v2036, %v2034
        %v2047 = vpack.c.b16 %v2037, %v2035
        %v2048 = vpack.c.b16 %v2040, %v2038
        %v2049 = vpack.c.b16 %v2041, %v2039
        %v2059 = vsel %vm749, %v1997, 0
        %2061 = vmatprep.subr.bf16.mxu0 %v2043
        %2062 = vmatpush1.bf16.msra.mxu0 %v2042
        %2063 = vmatprep.subr.bf16.mxu0 %v2045
        %2064 = vmatpush1.bf16.msra.mxu0 %v2044
        %2065 = vmatprep.subr.bf16.mxu0 %v2047
        %2066 = vmatpush1.bf16.msra.mxu0 %v2046
        %2067 = vmatprep.subr.bf16.mxu0 %v2049
        %2068 = vmatpush1.bf16.msra.mxu0 %v2048
        %2069 = vmatprep.subr.bf16.mxu0 0
        %2070 = vmatpush1.bf16.msra.mxu0 0
        %2071 = vmatprep.subr.bf16.mxu0 0
        %2072 = vmatpush1.bf16.msra.mxu0 0
        %2073 = vmatprep.subr.bf16.mxu0 0
        %2074 = vmatpush1.bf16.msra.mxu0 0
        %2075 = vmatprep.subr.bf16.mxu0 0
        %2076 = vmatpush1.bf16.msra.mxu0 0
        %2077 = vmatprep.subr.bf16.mxu0 0
        %2078 = vmatpush1.bf16.msra.mxu0 0
        %2079 = vmatprep.subr.bf16.mxu0 0
        %2080 = vmatpush1.bf16.msra.mxu0 0
        %2081 = vmatprep.subr.bf16.mxu0 0
        %2082 = vmatpush1.bf16.msra.mxu0 0
        %2083 = vmatprep.subr.bf16.mxu0 0
        %2084 = vmatpush1.bf16.msra.mxu0 0
        %2085 = vmatprep.subr.bf16.mxu0 0
        %2086 = vmatpush1.bf16.msra.mxu0 0
        %2087 = vmatprep.subr.bf16.mxu0 0
        %2088 = vmatpush1.bf16.msra.mxu0 0
        %2089 = vmatprep.subr.bf16.mxu0 0
        %2090 = vmatpush1.bf16.msra.mxu0 0
        %2091 = vmatprep.subr.bf16.mxu0 0
        %2092 = vmatpush1.bf16.msra.mxu0 0
        %2093 = vmatprep.mubr.bf16.mxu0 0
        %2094 = vmatmul.mubr.bf16.gmra.mrb[0].mxu0 %v2059
        %v2095 = vpop.f32.mrb[0].mxu0
        %v2096 = vadd.f32 %v2011, %v2095
        %v2097 = vpop.f32.mrb[0].mxu0
        %v2098 = vadd.f32 %v2015, %v2097
        %v2099 = vpop.f32.mrb[0].mxu0
        %v2100 = vadd.f32 %v2011, %v2099
        %v2101 = vpop.f32.mrb[0].mxu0
        %v2102 = vadd.f32 %v2015, %v2101
        %2103 = vdwg.mxu0
        %v2104 = vpack.c.bf16 %v2100, %v2096
        %2105 = vst.msk [vmem:[#allocation2] sm:$0xff] %vm901, %v2104
        %2107 = vrot.lane.b32.xlu0 %v2104, 112
        %v2108 = vpop.permute.xlu0 %2107
        %2110 = vst.msk [vmem:[%s907] sm:$0xff] %vm901, %v2108
        %2111 = vrot.lane.b32.xlu0 %v2104, 96
        %v2112 = vpop.permute.xlu0 %2111
        %2114 = vst.msk [vmem:[%s912] sm:$0xff] %vm901, %v2112
        %2115 = vrot.lane.b32.xlu0 %v2104, 80
        %v2116 = vpop.permute.xlu0 %2115
        %2118 = vst.msk [vmem:[%s917] sm:$0xff] %vm901, %v2116
        %2119 = vrot.lane.b32.xlu0 %v2104, 64
        %v2120 = vpop.permute.xlu0 %2119
        %2122 = vst.msk [vmem:[%s922] sm:$0xff] %vm901, %v2120
        %2123 = vrot.lane.b32.xlu0 %v2104, 48
        %v2124 = vpop.permute.xlu0 %2123
        %2126 = vst.msk [vmem:[%s927] sm:$0xff] %vm901, %v2124
        %2127 = vrot.lane.b32.xlu0 %v2104, 32
        %v2128 = vpop.permute.xlu0 %2127
        %2130 = vst.msk [vmem:[%s932] sm:$0xff] %vm901, %v2128
        %2131 = vrot.lane.b32.xlu0 %v2104, 16
        %v2132 = vpop.permute.xlu0 %2131
        %2134 = vst.msk [vmem:[%s937] sm:$0xff] %vm901, %v2132
        %v2135 = vpack.c.bf16 %v2102, %v2098
        %2136 = vst.msk [vmem:[%s940] sm:$0xff] %vm901, %v2135
        %2138 = vrot.lane.b32.xlu0 %v2135, 112
        %v2139 = vpop.permute.xlu0 %2138
        %2141 = vst.msk [vmem:[%s946] sm:$0xff] %vm901, %v2139
        %2142 = vrot.lane.b32.xlu0 %v2135, 96
        %v2143 = vpop.permute.xlu0 %2142
        %2145 = vst.msk [vmem:[%s951] sm:$0xff] %vm901, %v2143
        %2146 = vrot.lane.b32.xlu0 %v2135, 80
        %v2147 = vpop.permute.xlu0 %2146
        %2149 = vst.msk [vmem:[%s956] sm:$0xff] %vm901, %v2147
        %v2150 = vld [vmem:[#allocation2] sm:$0xff]
        %v2151 = vld [vmem:[#allocation2 + $0x8] sm:$0xff]
        %v2152 = vld [vmem:[#allocation2 + $0x10] sm:$0xff]
        %v2153 = vld [vmem:[#allocation2 + $0x18] sm:$0xff]
        %v2154 = vld [vmem:[%s922] sm:$0xff]
        %v2155 = vld [vmem:[%s922 + $0x8] sm:$0xff]
        %v2156 = vld [vmem:[%s922 + $0x10] sm:$0xff]
        %v2157 = vld [vmem:[%s922 + $0x18] sm:$0xff]
        %v2158 = vld [vmem:[%s940] sm:$0xff]
        %v2159 = vld [vmem:[%s940 + $0x8] sm:$0xff]
        %v2160 = vld [vmem:[%s940 + $0x10] sm:$0xff]
        %v2161 = vld [vmem:[%s940 + $0x18] sm:$0xff]
        %v2163 = vsel %vm901, %v2150, 0
        %v2166 = vsel %vm901, %v2154, 0
        %2168 = vmatprep.subr.bf16.mxu0 0
        %2169 = vmatpush1.bf16.xpose.msra.mxu0 %v2166
        %2170 = vmatprep.subr.bf16.mxu0 0
        %2171 = vmatpush1.bf16.xpose.msra.mxu0 0
        %2172 = vmatprep.subr.bf16.mxu0 0
        %2173 = vmatpush1.bf16.xpose.msra.mxu0 0
        %2174 = vmatprep.subr.bf16.mxu0 0
        %2175 = vmatpush1.bf16.xpose.msra.mxu0 0
        %2176 = vmatprep.subr.bf16.mxu0 0
        %2177 = vmatpush1.bf16.xpose.msra.mxu0 0
        %2178 = vmatprep.subr.bf16.mxu0 0
        %2179 = vmatpush1.bf16.xpose.msra.mxu0 0
        %2180 = vmatprep.subr.bf16.mxu0 0
        %2181 = vmatpush1.bf16.xpose.msra.mxu0 0
        %2182 = vmatprep.subr.bf16.mxu0 0
        %2183 = vmatpush1.bf16.xpose.msra.mxu0 0
        %2184 = vmatprep.subr.bf16.mxu0 0
        %2185 = vmatpush1.bf16.xpose.msra.mxu0 0
        %2186 = vmatprep.subr.bf16.mxu0 0
        %2187 = vmatpush1.bf16.xpose.msra.mxu0 0
        %2188 = vmatprep.subr.bf16.mxu0 0
        %2189 = vmatpush1.bf16.xpose.msra.mxu0 0
        %2190 = vmatprep.subr.bf16.mxu0 0
        %2191 = vmatpush1.bf16.xpose.msra.mxu0 0
        %2192 = vmatprep.subr.bf16.mxu0 0
        %2193 = vmatpush1.bf16.xpose.msra.mxu0 0
        %2194 = vmatprep.subr.bf16.mxu0 0
        %2195 = vmatpush1.bf16.xpose.msra.mxu0 0
        %2196 = vmatprep.subr.bf16.mxu0 0
        %2197 = vmatpush1.bf16.xpose.msra.mxu0 0
        %2198 = vmatprep.subr.bf16.mxu0 0
        %2199 = vmatpush1.bf16.xpose.msra.mxu0 0
        %2200 = vmatprep.mubr.bf16.mxu0 0
        %2201 = vmatmul.mubr.bf16.gmra.mrb[0].mxu0 %v2163
        %v2202 = vpop.f32.mrb[0].mxu0
        %v2203 = vadd.f32 %v743, %v2202
        %v2204 = vpop.f32.mrb[0].mxu0
        %v2205 = vpop.f32.mrb[0].mxu0
        %v2206 = vadd.f32 %v744, %v2205
        %v2207 = vpop.f32.mrb[0].mxu0
        %2208 = vdwg.mxu0
        %v2210 = vsel %vm901, %v2151, 0
        %v2213 = vsel %vm901, %v2155, 0
        %2215 = vmatprep.subr.bf16.mxu0 0
        %2216 = vmatpush1.bf16.xpose.msra.mxu0 %v2213
        %2217 = vmatprep.subr.bf16.mxu0 0
        %2218 = vmatpush1.bf16.xpose.msra.mxu0 0
        %2219 = vmatprep.subr.bf16.mxu0 0
        %2220 = vmatpush1.bf16.xpose.msra.mxu0 0
        %2221 = vmatprep.subr.bf16.mxu0 0
        %2222 = vmatpush1.bf16.xpose.msra.mxu0 0
        %2223 = vmatprep.subr.bf16.mxu0 0
        %2224 = vmatpush1.bf16.xpose.msra.mxu0 0
        %2225 = vmatprep.subr.bf16.mxu0 0
        %2226 = vmatpush1.bf16.xpose.msra.mxu0 0
        %2227 = vmatprep.subr.bf16.mxu0 0
        %2228 = vmatpush1.bf16.xpose.msra.mxu0 0
        %2229 = vmatprep.subr.bf16.mxu0 0
        %2230 = vmatpush1.bf16.xpose.msra.mxu0 0
        %2231 = vmatprep.subr.bf16.mxu0 0
        %2232 = vmatpush1.bf16.xpose.msra.mxu0 0
        %2233 = vmatprep.subr.bf16.mxu0 0
        %2234 = vmatpush1.bf16.xpose.msra.mxu0 0
        %2235 = vmatprep.subr.bf16.mxu0 0
        %2236 = vmatpush1.bf16.xpose.msra.mxu0 0
        %2237 = vmatprep.subr.bf16.mxu0 0
        %2238 = vmatpush1.bf16.xpose.msra.mxu0 0
        %2239 = vmatprep.subr.bf16.mxu0 0
        %2240 = vmatpush1.bf16.xpose.msra.mxu0 0
        %2241 = vmatprep.subr.bf16.mxu0 0
        %2242 = vmatpush1.bf16.xpose.msra.mxu0 0
        %2243 = vmatprep.subr.bf16.mxu0 0
        %2244 = vmatpush1.bf16.xpose.msra.mxu0 0
        %2245 = vmatprep.subr.bf16.mxu0 0
        %2246 = vmatpush1.bf16.xpose.msra.mxu0 0
        %2247 = vmatprep.mubr.bf16.mxu0 0
        %2248 = vmatmul.mubr.bf16.gmra.mrb[0].mxu0 %v2210
        %v2249 = vpop.f32.mrb[0].mxu0
        %v2250 = vadd.f32 %v743, %v2249
        %v2251 = vpop.f32.mrb[0].mxu0
        %v2252 = vpop.f32.mrb[0].mxu0
        %v2253 = vadd.f32 %v744, %v2252
        %v2254 = vpop.f32.mrb[0].mxu0
        %2255 = vdwg.mxu0
        %v2257 = vsel %vm901, %v2152, 0
        %v2260 = vsel %vm901, %v2156, 0
        %2262 = vmatprep.subr.bf16.mxu0 0
        %2263 = vmatpush1.bf16.xpose.msra.mxu0 %v2260
        %2264 = vmatprep.subr.bf16.mxu0 0
        %2265 = vmatpush1.bf16.xpose.msra.mxu0 0
        %2266 = vmatprep.subr.bf16.mxu0 0
        %2267 = vmatpush1.bf16.xpose.msra.mxu0 0
        %2268 = vmatprep.subr.bf16.mxu0 0
        %2269 = vmatpush1.bf16.xpose.msra.mxu0 0
        %2270 = vmatprep.subr.bf16.mxu0 0
        %2271 = vmatpush1.bf16.xpose.msra.mxu0 0
        %2272 = vmatprep.subr.bf16.mxu0 0
        %2273 = vmatpush1.bf16.xpose.msra.mxu0 0
        %2274 = vmatprep.subr.bf16.mxu0 0
        %2275 = vmatpush1.bf16.xpose.msra.mxu0 0
        %2276 = vmatprep.subr.bf16.mxu0 0
        %2277 = vmatpush1.bf16.xpose.msra.mxu0 0
        %2278 = vmatprep.subr.bf16.mxu0 0
        %2279 = vmatpush1.bf16.xpose.msra.mxu0 0
        %2280 = vmatprep.subr.bf16.mxu0 0
        %2281 = vmatpush1.bf16.xpose.msra.mxu0 0
        %2282 = vmatprep.subr.bf16.mxu0 0
        %2283 = vmatpush1.bf16.xpose.msra.mxu0 0
        %2284 = vmatprep.subr.bf16.mxu0 0
        %2285 = vmatpush1.bf16.xpose.msra.mxu0 0
        %2286 = vmatprep.subr.bf16.mxu0 0
        %2287 = vmatpush1.bf16.xpose.msra.mxu0 0
        %2288 = vmatprep.subr.bf16.mxu0 0
        %2289 = vmatpush1.bf16.xpose.msra.mxu0 0
        %2290 = vmatprep.subr.bf16.mxu0 0
        %2291 = vmatpush1.bf16.xpose.msra.mxu0 0
        %2292 = vmatprep.subr.bf16.mxu0 0
        %2293 = vmatpush1.bf16.xpose.msra.mxu0 0
        %2294 = vmatprep.mubr.bf16.mxu0 0
        %2295 = vmatmul.mubr.bf16.gmra.mrb[0].mxu0 %v2257
        %v2296 = vpop.f32.mrb[0].mxu0
        %v2297 = vadd.f32 %v743, %v2296
        %v2298 = vpop.f32.mrb[0].mxu0
        %v2299 = vpop.f32.mrb[0].mxu0
        %v2300 = vadd.f32 %v744, %v2299
        %v2301 = vpop.f32.mrb[0].mxu0
        %2302 = vdwg.mxu0
        %v2304 = vsel %vm901, %v2153, 0
        %v2307 = vsel %vm901, %v2157, 0
        %2309 = vmatprep.subr.bf16.mxu0 0
        %2310 = vmatpush1.bf16.xpose.msra.mxu0 %v2307
        %2311 = vmatprep.subr.bf16.mxu0 0
        %2312 = vmatpush1.bf16.xpose.msra.mxu0 0
        %2313 = vmatprep.subr.bf16.mxu0 0
        %2314 = vmatpush1.bf16.xpose.msra.mxu0 0
        %2315 = vmatprep.subr.bf16.mxu0 0
        %2316 = vmatpush1.bf16.xpose.msra.mxu0 0
        %2317 = vmatprep.subr.bf16.mxu0 0
        %2318 = vmatpush1.bf16.xpose.msra.mxu0 0
        %2319 = vmatprep.subr.bf16.mxu0 0
        %2320 = vmatpush1.bf16.xpose.msra.mxu0 0
        %2321 = vmatprep.subr.bf16.mxu0 0
        %2322 = vmatpush1.bf16.xpose.msra.mxu0 0
        %2323 = vmatprep.subr.bf16.mxu0 0
        %2324 = vmatpush1.bf16.xpose.msra.mxu0 0
        %2325 = vmatprep.subr.bf16.mxu0 0
        %2326 = vmatpush1.bf16.xpose.msra.mxu0 0
        %2327 = vmatprep.subr.bf16.mxu0 0
        %2328 = vmatpush1.bf16.xpose.msra.mxu0 0
        %2329 = vmatprep.subr.bf16.mxu0 0
        %2330 = vmatpush1.bf16.xpose.msra.mxu0 0
        %2331 = vmatprep.subr.bf16.mxu0 0
        %2332 = vmatpush1.bf16.xpose.msra.mxu0 0
        %2333 = vmatprep.subr.bf16.mxu0 0
        %2334 = vmatpush1.bf16.xpose.msra.mxu0 0
        %2335 = vmatprep.subr.bf16.mxu0 0
        %2336 = vmatpush1.bf16.xpose.msra.mxu0 0
        %2337 = vmatprep.subr.bf16.mxu0 0
        %2338 = vmatpush1.bf16.xpose.msra.mxu0 0
        %2339 = vmatprep.subr.bf16.mxu0 0
        %2340 = vmatpush1.bf16.xpose.msra.mxu0 0
        %2341 = vmatprep.mubr.bf16.mxu0 0
        %2342 = vmatmul.mubr.bf16.gmra.mrb[0].mxu0 %v2304
        %v2343 = vpop.f32.mrb[0].mxu0
        %v2344 = vadd.f32 %v743, %v2343
        %v2345 = vpop.f32.mrb[0].mxu0
        %v2346 = vpop.f32.mrb[0].mxu0
        %v2347 = vadd.f32 %v744, %v2346
        %v2348 = vpop.f32.mrb[0].mxu0
        %2349 = vdwg.mxu0
        %v2350 = vsel %vm901, %v2203, -inf
        %2351 = vmax.xlane.f32.xlu0 %v2350
        %v2352 = vpop.xlane.xlu0 %2351
        %v2353 = vsel %vm901, %v2206, -inf
        %2354 = vmax.xlane.f32.xlu0 %v2353
        %v2355 = vpop.xlane.xlu0 %2354
        %v2356 = vsel %vm901, %v2250, -inf
        %2357 = vmax.xlane.f32.xlu0 %v2356
        %v2358 = vpop.xlane.xlu0 %2357
        %v2359 = vsel %vm901, %v2253, -inf
        %2360 = vmax.xlane.f32.xlu0 %v2359
        %v2361 = vpop.xlane.xlu0 %2360
        %v2362 = vsel %vm901, %v2297, -inf
        %2363 = vmax.xlane.f32.xlu0 %v2362
        %v2364 = vpop.xlane.xlu0 %2363
        %v2365 = vsel %vm901, %v2300, -inf
        %2366 = vmax.xlane.f32.xlu0 %v2365
        %v2367 = vpop.xlane.xlu0 %2366
        %v2368 = vsel %vm901, %v2344, -inf
        %2369 = vmax.xlane.f32.xlu0 %v2368
        %v2370 = vpop.xlane.xlu0 %2369
        %v2371 = vsel %vm901, %v2347, -inf
        %2372 = vmax.xlane.f32.xlu0 %v2371
        %v2373 = vpop.xlane.xlu0 %2372
        %v2374 = vsub.f32 %v2203, %v2352
        %v2375 = vsub.f32 %v2206, %v2355
        %v2376 = vsub.f32 %v2250, %v2358
        %v2377 = vsub.f32 %v2253, %v2361
        %v2378 = vsub.f32 %v2297, %v2364
        %v2379 = vsub.f32 %v2300, %v2367
        %v2380 = vsub.f32 %v2344, %v2370
        %v2381 = vsub.f32 %v2347, %v2373
        %v2382 = vmul.f32 %v2374, 1.442695
        %v2383 = vpow.pop %v2382
        %v2384 = vmul.f32 %v2375, 1.442695
        %v2385 = vpow.pop %v2384
        %v2386 = vmul.f32 %v2376, 1.442695
        %v2387 = vpow.pop %v2386
        %v2388 = vmul.f32 %v2377, 1.442695
        %v2389 = vpow.pop %v2388
        %v2390 = vmul.f32 %v2378, 1.442695
        %v2391 = vpow.pop %v2390
        %v2392 = vmul.f32 %v2379, 1.442695
        %v2393 = vpow.pop %v2392
        %v2394 = vmul.f32 %v2380, 1.442695
        %v2395 = vpow.pop %v2394
        %v2396 = vmul.f32 %v2381, 1.442695
        %v2397 = vpow.pop %v2396
        %v2398 = vsel %vm901, %v2383, 0.0
        %2399 = vadd.xlane.f32.xlu0 %v2398
        %v2400 = vpop.xlane.xlu0 %2399
        %v2401 = vsel %vm901, %v2385, 0.0
        %2402 = vadd.xlane.f32.xlu0 %v2401
        %v2403 = vpop.xlane.xlu0 %2402
        %v2404 = vsel %vm901, %v2387, 0.0
        %2405 = vadd.xlane.f32.xlu0 %v2404
        %v2406 = vpop.xlane.xlu0 %2405
        %v2407 = vsel %vm901, %v2389, 0.0
        %2408 = vadd.xlane.f32.xlu0 %v2407
        %v2409 = vpop.xlane.xlu0 %2408
        %v2410 = vsel %vm901, %v2391, 0.0
        %2411 = vadd.xlane.f32.xlu0 %v2410
        %v2412 = vpop.xlane.xlu0 %2411
        %v2413 = vsel %vm901, %v2393, 0.0
        %2414 = vadd.xlane.f32.xlu0 %v2413
        %v2415 = vpop.xlane.xlu0 %2414
        %v2416 = vsel %vm901, %v2395, 0.0
        %2417 = vadd.xlane.f32.xlu0 %v2416
        %v2418 = vpop.xlane.xlu0 %2417
        %v2419 = vsel %vm901, %v2397, 0.0
        %2420 = vadd.xlane.f32.xlu0 %v2419
        %v2421 = vpop.xlane.xlu0 %2420
        %v2422 = vrcp.pop %v2400
        %v2423 = vrcp.pop %v2403
        %v2424 = vrcp.pop %v2406
        %v2425 = vrcp.pop %v2409
        %v2426 = vrcp.pop %v2412
        %v2427 = vrcp.pop %v2415
        %v2428 = vrcp.pop %v2418
        %v2429 = vrcp.pop %v2421
        %v2430 = vmul.f32 %v2383, %v2422
        %v2431 = vmul.f32 %v2385, %v2423
        %v2432 = vmul.f32 %v2387, %v2424
        %v2433 = vmul.f32 %v2389, %v2425
        %v2434 = vmul.f32 %v2391, %v2426
        %v2435 = vmul.f32 %v2393, %v2427
        %v2436 = vmul.f32 %v2395, %v2428
        %v2437 = vmul.f32 %v2397, %v2429
        %v2438 = vpack.c.bf16 %v2431, %v2430
        %v2439 = vpack.c.bf16 %v2433, %v2432
        %v2440 = vpack.c.bf16 %v2435, %v2434
        %v2441 = vpack.c.bf16 %v2437, %v2436
        %v2443 = vsel %vm901, %v2438, 0
        %2445 = vmatprep.subr.bf16.mxu0 0
        %2446 = vmatpush1.bf16.msra.mxu0 %v2158
        %2447 = vmatprep.subr.bf16.mxu0 0
        %2448 = vmatpush1.bf16.msra.mxu0 0
        %2449 = vmatprep.subr.bf16.mxu0 0
        %2450 = vmatpush1.bf16.msra.mxu0 0
        %2451 = vmatprep.subr.bf16.mxu0 0
        %2452 = vmatpush1.bf16.msra.mxu0 0
        %2453 = vmatprep.subr.bf16.mxu0 0
        %2454 = vmatpush1.bf16.msra.mxu0 0
        %2455 = vmatprep.subr.bf16.mxu0 0
        %2456 = vmatpush1.bf16.msra.mxu0 0
        %2457 = vmatprep.subr.bf16.mxu0 0
        %2458 = vmatpush1.bf16.msra.mxu0 0
        %2459 = vmatprep.subr.bf16.mxu0 0
        %2460 = vmatpush1.bf16.msra.mxu0 0
        %2461 = vmatprep.subr.bf16.mxu0 0
        %2462 = vmatpush1.bf16.msra.mxu0 0
        %2463 = vmatprep.subr.bf16.mxu0 0
        %2464 = vmatpush1.bf16.msra.mxu0 0
        %2465 = vmatprep.subr.bf16.mxu0 0
        %2466 = vmatpush1.bf16.msra.mxu0 0
        %2467 = vmatprep.subr.bf16.mxu0 0
        %2468 = vmatpush1.bf16.msra.mxu0 0
        %2469 = vmatprep.subr.bf16.mxu0 0
        %2470 = vmatpush1.bf16.msra.mxu0 0
        %2471 = vmatprep.subr.bf16.mxu0 0
        %2472 = vmatpush1.bf16.msra.mxu0 0
        %2473 = vmatprep.subr.bf16.mxu0 0
        %2474 = vmatpush1.bf16.msra.mxu0 0
        %2475 = vmatprep.subr.bf16.mxu0 0
        %2476 = vmatpush1.bf16.msra.mxu0 0
        %2477 = vmatprep.mubr.bf16.mxu0 0
        %2478 = vmatmul.mubr.bf16.gmra.mrb[0].mxu0 %v2443
        %v2479 = vpop.f32.mrb[0].mxu0
        %v2480 = vadd.f32 0.0, %v2479
        %v2481 = vpop.f32.mrb[0].mxu0
        %v2482 = vpop.f32.mrb[0].mxu0
        %v2483 = vadd.f32 0.0, %v2482
        %v2484 = vpop.f32.mrb[0].mxu0
        %2485 = vdwg.mxu0
        %v2487 = vsel %vm901, %v2439, 0
        %2489 = vmatprep.subr.bf16.mxu0 0
        %2490 = vmatpush1.bf16.msra.mxu0 %v2159
        %2491 = vmatprep.subr.bf16.mxu0 0
        %2492 = vmatpush1.bf16.msra.mxu0 0
        %2493 = vmatprep.subr.bf16.mxu0 0
        %2494 = vmatpush1.bf16.msra.mxu0 0
        %2495 = vmatprep.subr.bf16.mxu0 0
        %2496 = vmatpush1.bf16.msra.mxu0 0
        %2497 = vmatprep.subr.bf16.mxu0 0
        %2498 = vmatpush1.bf16.msra.mxu0 0
        %2499 = vmatprep.subr.bf16.mxu0 0
        %2500 = vmatpush1.bf16.msra.mxu0 0
        %2501 = vmatprep.subr.bf16.mxu0 0
        %2502 = vmatpush1.bf16.msra.mxu0 0
        %2503 = vmatprep.subr.bf16.mxu0 0
        %2504 = vmatpush1.bf16.msra.mxu0 0
        %2505 = vmatprep.subr.bf16.mxu0 0
        %2506 = vmatpush1.bf16.msra.mxu0 0
        %2507 = vmatprep.subr.bf16.mxu0 0
        %2508 = vmatpush1.bf16.msra.mxu0 0
        %2509 = vmatprep.subr.bf16.mxu0 0
        %2510 = vmatpush1.bf16.msra.mxu0 0
        %2511 = vmatprep.subr.bf16.mxu0 0
        %2512 = vmatpush1.bf16.msra.mxu0 0
        %2513 = vmatprep.subr.bf16.mxu0 0
        %2514 = vmatpush1.bf16.msra.mxu0 0
        %2515 = vmatprep.subr.bf16.mxu0 0
        %2516 = vmatpush1.bf16.msra.mxu0 0
        %2517 = vmatprep.subr.bf16.mxu0 0
        %2518 = vmatpush1.bf16.msra.mxu0 0
        %2519 = vmatprep.subr.bf16.mxu0 0
        %2520 = vmatpush1.bf16.msra.mxu0 0
        %2521 = vmatprep.mubr.bf16.mxu0 0
        %2522 = vmatmul.mubr.bf16.gmra.mrb[0].mxu0 %v2487
        %v2523 = vpop.f32.mrb[0].mxu0
        %v2524 = vadd.f32 0.0, %v2523
        %v2525 = vpop.f32.mrb[0].mxu0
        %v2526 = vpop.f32.mrb[0].mxu0
        %v2527 = vadd.f32 0.0, %v2526
        %v2528 = vpop.f32.mrb[0].mxu0
        %2529 = vdwg.mxu0
        %v2531 = vsel %vm901, %v2440, 0
        %2533 = vmatprep.subr.bf16.mxu0 0
        %2534 = vmatpush1.bf16.msra.mxu0 %v2160
        %2535 = vmatprep.subr.bf16.mxu0 0
        %2536 = vmatpush1.bf16.msra.mxu0 0
        %2537 = vmatprep.subr.bf16.mxu0 0
        %2538 = vmatpush1.bf16.msra.mxu0 0
        %2539 = vmatprep.subr.bf16.mxu0 0
        %2540 = vmatpush1.bf16.msra.mxu0 0
        %2541 = vmatprep.subr.bf16.mxu0 0
        %2542 = vmatpush1.bf16.msra.mxu0 0
        %2543 = vmatprep.subr.bf16.mxu0 0
        %2544 = vmatpush1.bf16.msra.mxu0 0
        %2545 = vmatprep.subr.bf16.mxu0 0
        %2546 = vmatpush1.bf16.msra.mxu0 0
        %2547 = vmatprep.subr.bf16.mxu0 0
        %2548 = vmatpush1.bf16.msra.mxu0 0
        %2549 = vmatprep.subr.bf16.mxu0 0
        %2550 = vmatpush1.bf16.msra.mxu0 0
        %2551 = vmatprep.subr.bf16.mxu0 0
        %2552 = vmatpush1.bf16.msra.mxu0 0
        %2553 = vmatprep.subr.bf16.mxu0 0
        %2554 = vmatpush1.bf16.msra.mxu0 0
        %2555 = vmatprep.subr.bf16.mxu0 0
        %2556 = vmatpush1.bf16.msra.mxu0 0
        %2557 = vmatprep.subr.bf16.mxu0 0
        %2558 = vmatpush1.bf16.msra.mxu0 0
        %2559 = vmatprep.subr.bf16.mxu0 0
        %2560 = vmatpush1.bf16.msra.mxu0 0
        %2561 = vmatprep.subr.bf16.mxu0 0
        %2562 = vmatpush1.bf16.msra.mxu0 0
        %2563 = vmatprep.subr.bf16.mxu0 0
        %2564 = vmatpush1.bf16.msra.mxu0 0
        %2565 = vmatprep.mubr.bf16.mxu0 0
        %2566 = vmatmul.mubr.bf16.gmra.mrb[0].mxu0 %v2531
        %v2567 = vpop.f32.mrb[0].mxu0
        %v2568 = vadd.f32 0.0, %v2567
        %v2569 = vpop.f32.mrb[0].mxu0
        %v2570 = vpop.f32.mrb[0].mxu0
        %v2571 = vadd.f32 0.0, %v2570
        %v2572 = vpop.f32.mrb[0].mxu0
        %2573 = vdwg.mxu0
        %v2575 = vsel %vm901, %v2441, 0
        %2577 = vmatprep.subr.bf16.mxu0 0
        %2578 = vmatpush1.bf16.msra.mxu0 %v2161
        %2579 = vmatprep.subr.bf16.mxu0 0
        %2580 = vmatpush1.bf16.msra.mxu0 0
        %2581 = vmatprep.subr.bf16.mxu0 0
        %2582 = vmatpush1.bf16.msra.mxu0 0
        %2583 = vmatprep.subr.bf16.mxu0 0
        %2584 = vmatpush1.bf16.msra.mxu0 0
        %2585 = vmatprep.subr.bf16.mxu0 0
        %2586 = vmatpush1.bf16.msra.mxu0 0
        %2587 = vmatprep.subr.bf16.mxu0 0
        %2588 = vmatpush1.bf16.msra.mxu0 0
        %2589 = vmatprep.subr.bf16.mxu0 0
        %2590 = vmatpush1.bf16.msra.mxu0 0
        %2591 = vmatprep.subr.bf16.mxu0 0
        %2592 = vmatpush1.bf16.msra.mxu0 0
        %2593 = vmatprep.subr.bf16.mxu0 0
        %2594 = vmatpush1.bf16.msra.mxu0 0
        %2595 = vmatprep.subr.bf16.mxu0 0
        %2596 = vmatpush1.bf16.msra.mxu0 0
        %2597 = vmatprep.subr.bf16.mxu0 0
        %2598 = vmatpush1.bf16.msra.mxu0 0
        %2599 = vmatprep.subr.bf16.mxu0 0
        %2600 = vmatpush1.bf16.msra.mxu0 0
        %2601 = vmatprep.subr.bf16.mxu0 0
        %2602 = vmatpush1.bf16.msra.mxu0 0
        %2603 = vmatprep.subr.bf16.mxu0 0
        %2604 = vmatpush1.bf16.msra.mxu0 0
        %2605 = vmatprep.subr.bf16.mxu0 0
        %2606 = vmatpush1.bf16.msra.mxu0 0
        %2607 = vmatprep.subr.bf16.mxu0 0
        %2608 = vmatpush1.bf16.msra.mxu0 0
        %2609 = vmatprep.mubr.bf16.mxu0 0
        %2610 = vmatmul.mubr.bf16.gmra.mrb[0].mxu0 %v2575
        %v2611 = vpop.f32.mrb[0].mxu0
        %v2612 = vadd.f32 0.0, %v2611
        %v2613 = vpop.f32.mrb[0].mxu0
        %v2614 = vpop.f32.mrb[0].mxu0
        %v2615 = vadd.f32 0.0, %v2614
        %v2616 = vpop.f32.mrb[0].mxu0
        %2617 = vdwg.mxu0
        %v2618 = vpack.c.bf16 %v2483, %v2480
        %v2619 = vpack.c.bf16 %v2527, %v2524
        %v2620 = vpack.c.bf16 %v2571, %v2568
        %v2621 = vpack.c.bf16 %v2615, %v2612
        %2622 = vst.msk [vmem:[#allocation3] sm:$0xff] %vm901, %v2618
        %2624 = vrot.lane.b32.xlu0 %v2619, 16
        %v2625 = vpop.permute.xlu0 %2624
        %2627 = vst.msk [vmem:[#allocation3] sm:$0xff] %vm1435, %v2625
        %2629 = vrot.lane.b32.xlu0 %v2620, 32
        %v2630 = vpop.permute.xlu0 %2629
        %2632 = vst.msk [vmem:[#allocation3] sm:$0xff] %vm1441, %v2630
        %2634 = vrot.lane.b32.xlu0 %v2621, 48
        %v2635 = vpop.permute.xlu0 %2634
        %2637 = vst.msk [vmem:[#allocation3] sm:$0xff] %vm1447, %v2635
        %v2638 = vld [vmem:[#allocation3] sm:$0xff]
        %v2639 = vld [vmem:[%s701] sm:$0xf]
        %v2640 = vld [vmem:[%s701 + $0x4] sm:$0xf]
        %v2641 = vld [vmem:[%s701 + $0x8] sm:$0xf]
        %v2642 = vld [vmem:[%s701 + $0xc] sm:$0xf]
        %v2643 = vld [vmem:[%s701 + $0x10] sm:$0xf]
        %v2644 = vld [vmem:[%s701 + $0x14] sm:$0xf]
        %v2645 = vld [vmem:[%s701 + $0x18] sm:$0xf]
        %v2646 = vld [vmem:[%s701 + $0x1c] sm:$0xf]
        %v2647 = vld [vmem:[%s704] sm:$0x1]
        %v2649 = vlaneseq
        %v2650 = vshrl.u32 %v2649, 7
        %v2651 = vsub.s32 0, %v2650
        %v2652 = vrot.slane %v2647, %v2651
        %v2662 = vunpack.c.l.b16 %v2639
        %v2663 = vunpack.c.l.b16 %v2640
        %v2664 = vunpack.c.l.b16 %v2641
        %v2665 = vunpack.c.l.b16 %v2642
        %v2666 = vunpack.c.l.b16 %v2643
        %v2667 = vunpack.c.l.b16 %v2644
        %v2668 = vunpack.c.l.b16 %v2645
        %v2669 = vunpack.c.l.b16 %v2646
        %v2670 = vpack.c.b16 %v2663, %v2662
        %v2671 = vpack.c.b16 %v2665, %v2664
        %v2672 = vpack.c.b16 %v2667, %v2666
        %v2673 = vpack.c.b16 %v2669, %v2668
        %v2679 = vsel %vm749, %v2638, 0
        %2681 = vmatprep.subr.bf16.mxu0 0
        %2682 = vmatpush1.bf16.msra.mxu0 %v2670
        %2683 = vmatprep.subr.bf16.mxu0 0
        %2684 = vmatpush1.bf16.msra.mxu0 %v2671
        %2685 = vmatprep.subr.bf16.mxu0 0
        %2686 = vmatpush1.bf16.msra.mxu0 %v2672
        %2687 = vmatprep.subr.bf16.mxu0 0
        %2688 = vmatpush1.bf16.msra.mxu0 %v2673
        %2689 = vmatprep.subr.bf16.mxu0 0
        %2690 = vmatpush1.bf16.msra.mxu0 0
        %2691 = vmatprep.subr.bf16.mxu0 0
        %2692 = vmatpush1.bf16.msra.mxu0 0
        %2693 = vmatprep.subr.bf16.mxu0 0
        %2694 = vmatpush1.bf16.msra.mxu0 0
        %2695 = vmatprep.subr.bf16.mxu0 0
        %2696 = vmatpush1.bf16.msra.mxu0 0
        %2697 = vmatprep.subr.bf16.mxu0 0
        %2698 = vmatpush1.bf16.msra.mxu0 0
        %2699 = vmatprep.subr.bf16.mxu0 0
        %2700 = vmatpush1.bf16.msra.mxu0 0
        %2701 = vmatprep.subr.bf16.mxu0 0
        %2702 = vmatpush1.bf16.msra.mxu0 0
        %2703 = vmatprep.subr.bf16.mxu0 0
        %2704 = vmatpush1.bf16.msra.mxu0 0
        %2705 = vmatprep.subr.bf16.mxu0 0
        %2706 = vmatpush1.bf16.msra.mxu0 0
        %2707 = vmatprep.subr.bf16.mxu0 0
        %2708 = vmatpush1.bf16.msra.mxu0 0
        %2709 = vmatprep.subr.bf16.mxu0 0
        %2710 = vmatpush1.bf16.msra.mxu0 0
        %2711 = vmatprep.subr.bf16.mxu0 0
        %2712 = vmatpush1.bf16.msra.mxu0 0
        %2713 = vmatprep.mubr.bf16.mxu0 0
        %2714 = vmatmul.mubr.bf16.gmra.mrb[0].mxu0 %v2679
        %v2715 = vpop.f32.mrb[0].mxu0
        %v2716 = vadd.f32 %v2652, %v2715
        %v2717 = vpop.f32.mrb[0].mxu0
        %v2718 = vpop.f32.mrb[0].mxu0
        %v2719 = vadd.f32 %v2652, %v2718
        %v2720 = vpop.f32.mrb[0].mxu0
        %2721 = vdwg.mxu0
        %v2722 = vadd.f32 %v2716, %v1951
        %v2723 = vadd.f32 %v2719, %v1952
        %v2724 = vld [vmem:[%s707] sm:$0x1]
        %v2725 = vld [vmem:[%s710] sm:$0x1]
        %v2726 = vsel %vm749, %v2722, 0.0
        %2727 = vadd.xlane.f32.xlu0 %v2726
        %v2728 = vpop.xlane.xlu0 %2727
        %v2729 = vsel %vm749, %v2723, 0.0
        %2730 = vadd.xlane.f32.xlu0 %v2729
        %v2731 = vpop.xlane.xlu0 %2730
        %v2732 = vmul.f32 %v2728, %v756
        %v2733 = vmul.f32 %v2731, %v756
        %v2734 = vsub.f32 %v2722, %v2732
        %v2735 = vsub.f32 %v2723, %v2733
        %v2736 = vmul.f32 %v2734, %v2734
        %v2737 = vmul.f32 %v2735, %v2735
        %v2738 = vsel %vm749, %v2736, 0.0
        %2739 = vadd.xlane.f32.xlu0 %v2738
        %v2740 = vpop.xlane.xlu0 %2739
        %v2741 = vsel %vm749, %v2737, 0.0
        %2742 = vadd.xlane.f32.xlu0 %v2741
        %v2743 = vpop.xlane.xlu0 %2742
        %v2744 = vmul.f32 %v2740, %v756
        %v2745 = vmul.f32 %v2743, %v756
        %v2746 = vadd.f32 %v2744, 1e-05
        %v2747 = vadd.f32 %v2745, 1e-05
        %v2748 = vrsqrt.pop %v2746
        %v2749 = vrsqrt.pop %v2747
        %v2750 = vmul.f32 %v2734, %v2748
        %v2751 = vmul.f32 %v2735, %v2749
        %v2753 = vlaneseq
        %v2754 = vshrl.u32 %v2753, 7
        %v2755 = vsub.s32 0, %v2754
        %v2756 = vrot.slane %v2724, %v2755
        %v2758 = vmul.f32 %v2750, %v2756
        %v2759 = vmul.f32 %v2751, %v2756
        %v2761 = vlaneseq
        %v2762 = vshrl.u32 %v2761, 7
        %v2763 = vsub.s32 0, %v2762
        %v2764 = vrot.slane %v2725, %v2763
        %v2766 = vadd.f32 %v2758, %v2764
        %v2767 = vadd.f32 %v2759, %v2764
        %v2768 = vpack.c.bf16 %v2767, %v2766
        %v2769 = vld [vmem:[%s715] sm:$0xff]
        %v2770 = vld [vmem:[%s715 + $0x8] sm:$0xff]
        %v2771 = vld [vmem:[%s715 + $0x10] sm:$0xff]
        %v2772 = vld [vmem:[%s715 + $0x18] sm:$0xff]
        %v2773 = vld [vmem:[%s715 + $0x20] sm:$0xff]
        %v2774 = vld [vmem:[%s715 + $0x28] sm:$0xff]
        %v2775 = vld [vmem:[%s715 + $0x30] sm:$0xff]
        %v2776 = vld [vmem:[%s715 + $0x38] sm:$0xff]
        %v2777 = vld [vmem:[%s719] sm:$0x3]
        %v2779 = vlaneseq
        %v2780 = vshrl.u32 %v2779, 7
        %v2781 = vsub.s32 0, %v2780
        %v2782 = vrot.slane %v2777, %v2781
        %v2783 = vlaneseq
        %v2784 = vshrl.u32 %v2783, 7
        %v2785 = vsub.s32 1, %v2784
        %v2786 = vrot.slane %v2777, %v2785
        %v2797 = vunpack.c.l.b16 %v2769
        %v2798 = vunpack.c.h.b16 %v2769
        %v2799 = vunpack.c.l.b16 %v2770
        %v2800 = vunpack.c.h.b16 %v2770
        %v2801 = vunpack.c.l.b16 %v2771
        %v2802 = vunpack.c.h.b16 %v2771
        %v2803 = vunpack.c.l.b16 %v2772
        %v2804 = vunpack.c.h.b16 %v2772
        %v2805 = vunpack.c.l.b16 %v2773
        %v2806 = vunpack.c.h.b16 %v2773
        %v2807 = vunpack.c.l.b16 %v2774
        %v2808 = vunpack.c.h.b16 %v2774
        %v2809 = vunpack.c.l.b16 %v2775
        %v2810 = vunpack.c.h.b16 %v2775
        %v2811 = vunpack.c.l.b16 %v2776
        %v2812 = vunpack.c.h.b16 %v2776
        %v2813 = vpack.c.b16 %v2799, %v2797
        %v2814 = vpack.c.b16 %v2800, %v2798
        %v2815 = vpack.c.b16 %v2803, %v2801
        %v2816 = vpack.c.b16 %v2804, %v2802
        %v2817 = vpack.c.b16 %v2807, %v2805
        %v2818 = vpack.c.b16 %v2808, %v2806
        %v2819 = vpack.c.b16 %v2811, %v2809
        %v2820 = vpack.c.b16 %v2812, %v2810
        %v2830 = vsel %vm749, %v2768, 0
        %2832 = vmatprep.subr.bf16.mxu0 %v2814
        %2833 = vmatpush1.bf16.msra.mxu0 %v2813
        %2834 = vmatprep.subr.bf16.mxu0 %v2816
        %2835 = vmatpush1.bf16.msra.mxu0 %v2815
        %2836 = vmatprep.subr.bf16.mxu0 %v2818
        %2837 = vmatpush1.bf16.msra.mxu0 %v2817
        %2838 = vmatprep.subr.bf16.mxu0 %v2820
        %2839 = vmatpush1.bf16.msra.mxu0 %v2819
        %2840 = vmatprep.subr.bf16.mxu0 0
        %2841 = vmatpush1.bf16.msra.mxu0 0
        %2842 = vmatprep.subr.bf16.mxu0 0
        %2843 = vmatpush1.bf16.msra.mxu0 0
        %2844 = vmatprep.subr.bf16.mxu0 0
        %2845 = vmatpush1.bf16.msra.mxu0 0
        %2846 = vmatprep.subr.bf16.mxu0 0
        %2847 = vmatpush1.bf16.msra.mxu0 0
        %2848 = vmatprep.subr.bf16.mxu0 0
        %2849 = vmatpush1.bf16.msra.mxu0 0
        %2850 = vmatprep.subr.bf16.mxu0 0
        %2851 = vmatpush1.bf16.msra.mxu0 0
        %2852 = vmatprep.subr.bf16.mxu0 0
        %2853 = vmatpush1.bf16.msra.mxu0 0
        %2854 = vmatprep.subr.bf16.mxu0 0
        %2855 = vmatpush1.bf16.msra.mxu0 0
        %2856 = vmatprep.subr.bf16.mxu0 0
        %2857 = vmatpush1.bf16.msra.mxu0 0
        %2858 = vmatprep.subr.bf16.mxu0 0
        %2859 = vmatpush1.bf16.msra.mxu0 0
        %2860 = vmatprep.subr.bf16.mxu0 0
        %2861 = vmatpush1.bf16.msra.mxu0 0
        %2862 = vmatprep.subr.bf16.mxu0 0
        %2863 = vmatpush1.bf16.msra.mxu0 0
        %2864 = vmatprep.mubr.bf16.mxu0 0
        %2865 = vmatmul.mubr.bf16.gmra.mrb[0].mxu0 %v2830
        %v2866 = vpop.f32.mrb[0].mxu0
        %v2867 = vadd.f32 %v2782, %v2866
        %v2868 = vpop.f32.mrb[0].mxu0
        %v2869 = vadd.f32 %v2786, %v2868
        %v2870 = vpop.f32.mrb[0].mxu0
        %v2871 = vadd.f32 %v2782, %v2870
        %v2872 = vpop.f32.mrb[0].mxu0
        %v2873 = vadd.f32 %v2786, %v2872
        %2874 = vdwg.mxu0
        %v2875 = vmul.f32 %v2867, 1.702
        %v2876 = vmul.f32 %v2869, 1.702
        %v2877 = vmul.f32 %v2871, 1.702
        %v2878 = vmul.f32 %v2873, 1.702
        %v2879 = vxor.u32 %v2875, 2147483648
        %v2880 = vxor.u32 %v2876, 2147483648
        %v2881 = vxor.u32 %v2877, 2147483648
        %v2882 = vxor.u32 %v2878, 2147483648
        %v2883 = vmul.f32 %v2879, 1.442695
        %v2884 = vpow.pop %v2883
        %v2885 = vmul.f32 %v2880, 1.442695
        %v2886 = vpow.pop %v2885
        %v2887 = vmul.f32 %v2881, 1.442695
        %v2888 = vpow.pop %v2887
        %v2889 = vmul.f32 %v2882, 1.442695
        %v2890 = vpow.pop %v2889
        %v2891 = vadd.f32 %v2884, 1.0
        %v2892 = vadd.f32 %v2886, 1.0
        %v2893 = vadd.f32 %v2888, 1.0
        %v2894 = vadd.f32 %v2890, 1.0
        %v2895 = vrcp.pop %v2891
        %v2896 = vmul.f32 1.0, %v2895
        %v2897 = vrcp.pop %v2892
        %v2898 = vmul.f32 1.0, %v2897
        %v2899 = vrcp.pop %v2893
        %v2900 = vmul.f32 1.0, %v2899
        %v2901 = vrcp.pop %v2894
        %v2902 = vmul.f32 1.0, %v2901
        %v2903 = vmul.f32 %v2867, %v2896
        %v2904 = vmul.f32 %v2869, %v2898
        %v2905 = vmul.f32 %v2871, %v2900
        %v2906 = vmul.f32 %v2873, %v2902
        %v2907 = vpack.c.bf16 %v2905, %v2903
        %v2908 = vpack.c.bf16 %v2906, %v2904
        %v2909 = vld [vmem:[%s724] sm:$0xf]
        %v2910 = vld [vmem:[%s724 + $0x4] sm:$0xf]
        %v2911 = vld [vmem:[%s724 + $0x8] sm:$0xf]
        %v2912 = vld [vmem:[%s724 + $0xc] sm:$0xf]
        %v2913 = vld [vmem:[%s724 + $0x10] sm:$0xf]
        %v2914 = vld [vmem:[%s724 + $0x14] sm:$0xf]
        %v2915 = vld [vmem:[%s724 + $0x18] sm:$0xf]
        %v2916 = vld [vmem:[%s724 + $0x1c] sm:$0xf]
        %v2917 = vld [vmem:[%s724 + $0x20] sm:$0xf]
        %v2918 = vld [vmem:[%s724 + $0x24] sm:$0xf]
        %v2919 = vld [vmem:[%s724 + $0x28] sm:$0xf]
        %v2920 = vld [vmem:[%s724 + $0x2c] sm:$0xf]
        %v2921 = vld [vmem:[%s724 + $0x30] sm:$0xf]
        %v2922 = vld [vmem:[%s724 + $0x34] sm:$0xf]
        %v2923 = vld [vmem:[%s724 + $0x38] sm:$0xf]
        %v2924 = vld [vmem:[%s724 + $0x3c] sm:$0xf]
        %v2925 = vld [vmem:[%s724 + $0x40] sm:$0xf]
        %v2926 = vld [vmem:[%s724 + $0x44] sm:$0xf]
        %v2927 = vld [vmem:[%s724 + $0x48] sm:$0xf]
        %v2928 = vld [vmem:[%s724 + $0x4c] sm:$0xf]
        %v2929 = vld [vmem:[%s724 + $0x50] sm:$0xf]
        %v2930 = vld [vmem:[%s724 + $0x54] sm:$0xf]
        %v2931 = vld [vmem:[%s724 + $0x58] sm:$0xf]
        %v2932 = vld [vmem:[%s724 + $0x5c] sm:$0xf]
        %v2933 = vld [vmem:[%s724 + $0x60] sm:$0xf]
        %v2934 = vld [vmem:[%s724 + $0x64] sm:$0xf]
        %v2935 = vld [vmem:[%s724 + $0x68] sm:$0xf]
        %v2936 = vld [vmem:[%s724 + $0x6c] sm:$0xf]
        %v2937 = vld [vmem:[%s724 + $0x70] sm:$0xf]
        %v2938 = vld [vmem:[%s724 + $0x74] sm:$0xf]
        %v2939 = vld [vmem:[%s724 + $0x78] sm:$0xf]
        %v2940 = vld [vmem:[%s724 + $0x7c] sm:$0xf]
        %v2941 = vld [vmem:[%s727] sm:$0x1]
        %v2943 = vlaneseq
        %v2944 = vshrl.u32 %v2943, 7
        %v2945 = vsub.s32 0, %v2944
        %v2946 = vrot.slane %v2941, %v2945
        %v2980 = vunpack.c.l.b16 %v2909
        %v2981 = vunpack.c.l.b16 %v2910
        %v2982 = vunpack.c.l.b16 %v2911
        %v2983 = vunpack.c.l.b16 %v2912
        %v2984 = vunpack.c.l.b16 %v2913
        %v2985 = vunpack.c.l.b16 %v2914
        %v2986 = vunpack.c.l.b16 %v2915
        %v2987 = vunpack.c.l.b16 %v2916
        %v2988 = vunpack.c.l.b16 %v2917
        %v2989 = vunpack.c.l.b16 %v2918
        %v2990 = vunpack.c.l.b16 %v2919
        %v2991 = vunpack.c.l.b16 %v2920
        %v2992 = vunpack.c.l.b16 %v2921
        %v2993 = vunpack.c.l.b16 %v2922
        %v2994 = vunpack.c.l.b16 %v2923
        %v2995 = vunpack.c.l.b16 %v2924
        %v2996 = vunpack.c.l.b16 %v2925
        %v2997 = vunpack.c.l.b16 %v2926
        %v2998 = vunpack.c.l.b16 %v2927
        %v2999 = vunpack.c.l.b16 %v2928
        %v3000 = vunpack.c.l.b16 %v2929
        %v3001 = vunpack.c.l.b16 %v2930
        %v3002 = vunpack.c.l.b16 %v2931
        %v3003 = vunpack.c.l.b16 %v2932
        %v3004 = vunpack.c.l.b16 %v2933
        %v3005 = vunpack.c.l.b16 %v2934
        %v3006 = vunpack.c.l.b16 %v2935
        %v3007 = vunpack.c.l.b16 %v2936
        %v3008 = vunpack.c.l.b16 %v2937
        %v3009 = vunpack.c.l.b16 %v2938
        %v3010 = vunpack.c.l.b16 %v2939
        %v3011 = vunpack.c.l.b16 %v2940
        %v3012 = vpack.c.b16 %v2981, %v2980
        %v3013 = vpack.c.b16 %v2983, %v2982
        %v3014 = vpack.c.b16 %v2985, %v2984
        %v3015 = vpack.c.b16 %v2987, %v2986
        %v3016 = vpack.c.b16 %v2989, %v2988
        %v3017 = vpack.c.b16 %v2991, %v2990
        %v3018 = vpack.c.b16 %v2993, %v2992
        %v3019 = vpack.c.b16 %v2995, %v2994
        %v3020 = vpack.c.b16 %v2997, %v2996
        %v3021 = vpack.c.b16 %v2999, %v2998
        %v3022 = vpack.c.b16 %v3001, %v3000
        %v3023 = vpack.c.b16 %v3003, %v3002
        %v3024 = vpack.c.b16 %v3005, %v3004
        %v3025 = vpack.c.b16 %v3007, %v3006
        %v3026 = vpack.c.b16 %v3009, %v3008
        %v3027 = vpack.c.b16 %v3011, %v3010
        %3044 = vmatprep.subr.bf16.mxu0 0
        %3045 = vmatpush1.bf16.msra.mxu0 %v3012
        %3046 = vmatprep.subr.bf16.mxu0 0
        %3047 = vmatpush1.bf16.msra.mxu0 %v3013
        %3048 = vmatprep.subr.bf16.mxu0 0
        %3049 = vmatpush1.bf16.msra.mxu0 %v3014
        %3050 = vmatprep.subr.bf16.mxu0 0
        %3051 = vmatpush1.bf16.msra.mxu0 %v3015
        %3052 = vmatprep.subr.bf16.mxu0 0
        %3053 = vmatpush1.bf16.msra.mxu0 %v3016
        %3054 = vmatprep.subr.bf16.mxu0 0
        %3055 = vmatpush1.bf16.msra.mxu0 %v3017
        %3056 = vmatprep.subr.bf16.mxu0 0
        %3057 = vmatpush1.bf16.msra.mxu0 %v3018
        %3058 = vmatprep.subr.bf16.mxu0 0
        %3059 = vmatpush1.bf16.msra.mxu0 %v3019
        %3060 = vmatprep.subr.bf16.mxu0 0
        %3061 = vmatpush1.bf16.msra.mxu0 %v3020
        %3062 = vmatprep.subr.bf16.mxu0 0
        %3063 = vmatpush1.bf16.msra.mxu0 %v3021
        %3064 = vmatprep.subr.bf16.mxu0 0
        %3065 = vmatpush1.bf16.msra.mxu0 %v3022
        %3066 = vmatprep.subr.bf16.mxu0 0
        %3067 = vmatpush1.bf16.msra.mxu0 %v3023
        %3068 = vmatprep.subr.bf16.mxu0 0
        %3069 = vmatpush1.bf16.msra.mxu0 %v3024
        %3070 = vmatprep.subr.bf16.mxu0 0
        %3071 = vmatpush1.bf16.msra.mxu0 %v3025
        %3072 = vmatprep.subr.bf16.mxu0 0
        %3073 = vmatpush1.bf16.msra.mxu0 %v3026
        %3074 = vmatprep.subr.bf16.mxu0 0
        %3075 = vmatpush1.bf16.msra.mxu0 %v3027
        %3076 = vmatprep.mubr.bf16.mxu0 %v2908
        %3077 = vmatmul.mubr.bf16.gmra.mrb[0].mxu0 %v2907
        %v3078 = vpop.f32.mrb[0].mxu0
        %v3079 = vadd.f32 %v2946, %v3078
        %v3080 = vpop.f32.mrb[0].mxu0
        %v3081 = vpop.f32.mrb[0].mxu0
        %v3082 = vadd.f32 %v2946, %v3081
        %v3083 = vpop.f32.mrb[0].mxu0
        %3084 = vdwg.mxu0
        %v3085 = vadd.f32 %v3079, %v2722
        %v3086 = vadd.f32 %v3082, %v2723
        %3087 = vst.msk [vmem:[%s1950] sm:$0xff] %vm749, %v3085
        %3088 = vst.msk [vmem:[%s1950 + $0x8] sm:$0xff] %vm749, %v3086
        // Predicated region
        $region93: #{tpu_custom_call.1} parent=83 // pred_check
          %p3089 = pneg %p1900
        $region94: #{tpu_custom_call.1} parent=83 // pred_check_branch
          %3091 = sbr.rel (%p3089) target = $region96
        $region95: #{tpu_custom_call.1} parent=83 // pred_region
          %v3092 = vld [vmem:[%s14] sm:$0x1]
          %v3093 = vld [vmem:[%s15] sm:$0x1]
          %v3094 = vsel %vm749, %v3085, 0.0
          %3095 = vadd.xlane.f32.xlu0 %v3094
          %v3096 = vpop.xlane.xlu0 %3095
          %v3097 = vsel %vm749, %v3086, 0.0
          %3098 = vadd.xlane.f32.xlu0 %v3097
          %v3099 = vpop.xlane.xlu0 %3098
          %v3100 = vmul.f32 %v3096, %v756
          %v3101 = vmul.f32 %v3099, %v756
          %v3102 = vsub.f32 %v3085, %v3100
          %v3103 = vsub.f32 %v3086, %v3101
          %v3104 = vmul.f32 %v3102, %v3102
          %v3105 = vmul.f32 %v3103, %v3103
          %v3106 = vsel %vm749, %v3104, 0.0
          %3107 = vadd.xlane.f32.xlu0 %v3106
          %v3108 = vpop.xlane.xlu0 %3107
          %v3109 = vsel %vm749, %v3105, 0.0
          %3110 = vadd.xlane.f32.xlu0 %v3109
          %v3111 = vpop.xlane.xlu0 %3110
          %v3112 = vmul.f32 %v3108, %v756
          %v3113 = vmul.f32 %v3111, %v756
          %v3114 = vadd.f32 %v3112, 1e-05
          %v3115 = vadd.f32 %v3113, 1e-05
          %v3116 = vrsqrt.pop %v3114
          %v3117 = vrsqrt.pop %v3115
          %v3118 = vmul.f32 %v3102, %v3116
          %v3119 = vmul.f32 %v3103, %v3117
          %v3121 = vlaneseq
          %v3122 = vshrl.u32 %v3121, 7
          %v3123 = vsub.s32 0, %v3122
          %v3124 = vrot.slane %v3092, %v3123
          %v3126 = vmul.f32 %v3118, %v3124
          %v3127 = vmul.f32 %v3119, %v3124
          %v3129 = vlaneseq
          %v3130 = vshrl.u32 %v3129, 7
          %v3131 = vsub.s32 0, %v3130
          %v3132 = vrot.slane %v3093, %v3131
          %v3134 = vadd.f32 %v3126, %v3132
          %v3135 = vadd.f32 %v3127, %v3132
          %3136 = vst.msk [vmem:[%s1950] sm:$0xff] %vm749, %v3134
          %3137 = vst.msk [vmem:[%s1950 + $0x8] sm:$0xff] %vm749, %v3135
        $region96: #{tpu_custom_call.1} parent=83 // pred_fallthru
          _
        // Predicated region
        $region97: #{tpu_custom_call.1} parent=83 // pred_check
          %p3138 = pneg %p459
        $region98: #{tpu_custom_call.1} parent=83 // pred_check_branch
          %3140 = sbr.rel (%p3138) target = $region100
        $region99: #{tpu_custom_call.1} parent=83 // pred_region
          %s3141 = smul.u32 2, %s32
          %s3143 = ssub.s32 512, 512
          %3144 = vsyncadd [#allocation5], %s3143
          %s3145 = smul.addr %s3141, 2
          %s3146 = smul.addr %s3145, 128
          %s3147 = scalar_lea.hbm %s16, %s3146
          %s3148 = sshll.u32 [#allocation4], 4
          %s3149 = int_to_ptr.vmem [resolvable:$true] %s3148
          %3154 = dma.vmem_to_hbm [thread:$0]  %s3149, 512, %s3147, [#allocation5], 128, 128, 8
        $region100: #{tpu_custom_call.1} parent=83 // pred_fallthru
          _
        // Predicated region
        $region101: #{tpu_custom_call.1} parent=83 // pred_check
          %p3155 = pneg %p459
        $region102: #{tpu_custom_call.1} parent=83 // pred_check_branch
          %3157 = sbr.rel (%p3155) target = $region104
        $region103: #{tpu_custom_call.1} parent=83 // pred_region
          %3158 = dma.done [#allocation5], 512
        $region104: #{tpu_custom_call.1} parent=83 // pred_fallthru
          _
      $region84: #{tpu_custom_call.1} parent=5 // pred_fallthru
        _
      %p3159 = scmp.le.s32.totalorder 2, %s23
      // Predicated region
      $region105: #{tpu_custom_call.1} parent=5 // pred_check
        %p3160 = pneg %p3159
      $region106: #{tpu_custom_call.1} parent=5 // pred_check_branch
        %3162 = sbr.rel (%p3160) target = $region108
      $region107: #{tpu_custom_call.1} parent=5 // pred_region
        %s3163 = ssub.s32 %s23, 2
      $region108: #{tpu_custom_call.1} parent=5 // pred_fallthru
        _
    $region6: #{tpu_custom_call.1} parent=1 // loop_footer
      %s27 = sadd.s32 1, %s23
    $region7: #{tpu_custom_call.1} parent=1 // loop_footer_branch
      %22 = sbr.rel target = $region3
    $region8: #{tpu_custom_call.1} parent=1 // loop_exit
      _
    %3164 = vsyncpa [#allocation5], 1
    %s3165 = scalar_lea.sflag [#allocation5], 1
    %3166 = vsyncpa %s3165, 1

</llo_original>
